<compile_context>
chip_gen: v7x
topology: tpu7x:2x2x1
jax: 0.10.0
libtpu: 0.0.40
codegen_flags: <defaults>
</compile_context>

<pallas_src>
import jax
import jax.numpy as jnp
from jax import lax
from jax.experimental import pallas as pl
from jax.experimental.pallas import tpu as pltpu

# ---------------- model dims (from params dict) ----------------
HIDDEN = 768          # params['output_logits']
D_MID = 128           # nn.Linear(768, 128)
LN_EPS = 1e-5         # nn.LayerNorm default eps

# rows of the packed small-parameter array (one consolidated DMA)
ROW_BP, ROW_GAMMA, ROW_BETA, ROW_B1, ROW_W2, ROW_B2 = 0, 1, 2, 3, 4, 5
VEC_ROWS = 8          # padded to a full sublane group

# small synthetic-input dims
BATCH = 16
SEQ = 8
VOCAB = 50
N_TYPES = 2
BATCH_TILE = 8        # batch tile per grid step


def toxicity_head_kernel(x_ref, mask_ref, wp_ref, w1_ref, vec_ref, out_ref):
    # x_ref  : (TB, L, H)      bf16 embedded tokens
    # mask   : (TB, L)         f32 attention mask
    # wp_ref : (H, H)          bf16 pooler dense weight  (in, out)
    # w1_ref : (H, D_MID)      bf16 dense[0] weight      (in, out)
    # vec_ref: (VEC_ROWS, H)   f32 packed {bp, gamma, beta, b1, w2_row, b2}
    # out_ref: (TB, D_MID)     f32, every lane holds the scalar pred (lane-dense)

    x = x_ref[...].astype(jnp.float32)          # elementwise path stays f32 (v5e-safe)
    mask = mask_ref[...].astype(jnp.float32)

    # TODO(synk): full roberta-base transformer encoder not implemented; the
    # pooled_output is synthesized from masked mean-pooled embeddings + pooler.
    m = mask[:, :, None]                                         # (TB, L, 1)
    denom = jnp.maximum(jnp.sum(m, axis=1), 1.0)                 # (TB, 1)
    pooled = jnp.sum(x * m, axis=1) / denom                      # (TB, H) f32

    bp = vec_ref[ROW_BP:ROW_BP + 1, :]                           # (1, H)
    gamma = vec_ref[ROW_GAMMA:ROW_GAMMA + 1, :]                  # (1, H)
    beta = vec_ref[ROW_BETA:ROW_BETA + 1, :]                     # (1, H)
    b1 = vec_ref[ROW_B1:ROW_B1 + 1, 0:D_MID]                     # (1, 128)
    w2 = vec_ref[ROW_W2:ROW_W2 + 1, 0:D_MID]                     # (1, 128)
    b2 = vec_ref[ROW_B2:ROW_B2 + 1, 0:D_MID]                     # (1, 128) all = b2

    # BERT-style pooler: tanh(dense(.)) -- bf16 MXU operands, f32 accumulate/tanh
    pooled = jnp.tanh(
        jnp.dot(pooled.astype(jnp.bfloat16), wp_ref[...],
                preferred_element_type=jnp.float32) + bp)        # (TB, H)

    # nn.LayerNorm(768) in f32 (biased variance, matches PyTorch)
    mu = jnp.mean(pooled, axis=-1, keepdims=True)
    xc = pooled - mu
    var = jnp.mean(xc * xc, axis=-1, keepdims=True)
    h = xc * lax.rsqrt(var + LN_EPS) * gamma + beta              # (TB, H)

    # nn.Dropout(0.2): identity in eval mode.

    # dense: Linear(768, 128) -> SiLU -> Dropout(identity)
    h1 = jnp.dot(h.astype(jnp.bfloat16), w1_ref[...],
                 preferred_element_type=jnp.float32) + b1        # (TB, 128)
    h1 = h1 * jax.nn.sigmoid(h1)                                 # SiLU, f32

    # Linear(128, 1) as a lane reduction (avoids an N=1 MXU pass)
    s = jnp.sum(h1 * w2, axis=-1, keepdims=True)                 # (TB, 1)
    out_ref[...] = (s + b2).astype(out_ref.dtype)                # lane-dense (TB, 128)


def toxicity_model_forward(embedded, attention_mask, params, *, batch_tile=BATCH_TILE):
    """embedded: (B, L, H), attention_mask: (B, L) -> (B, 1) preds (f32)."""
    B, L, H = embedded.shape
    wp, bp, gamma, beta, w1, b1, w2, b2 = params

    # pad batch to a multiple of the batch tile (padded rows sliced off below)
    b_pad = ((B + batch_tile - 1) // batch_tile) * batch_tile
    if b_pad != B:
        embedded = jnp.pad(embedded, ((0, b_pad - B), (0, 0), (0, 0)))
        attention_mask = jnp.pad(attention_mask, ((0, b_pad - B), (0, 0)))

    # bf16 for the HBM-dominant tensors (weights + embedded activations)
    embedded = embedded.astype(jnp.bfloat16)
    wp = wp.astype(jnp.bfloat16)
    w1 = w1.astype(jnp.bfloat16)
    attention_mask = attention_mask.astype(jnp.float32)

    # consolidate the small parameters into one (VEC_ROWS, H) f32 array
    def _row(v):
        v = jnp.asarray(v, jnp.float32).reshape(1, -1)
        return jnp.pad(v, ((0, 0), (0, H - v.shape[1])))

    b2_row = jnp.broadcast_to(jnp.asarray(b2, jnp.float32).reshape(1, 1), (1, H))
    vec = jnp.concatenate(
        [_row(bp), _row(gamma), _row(beta), _row(b1), _row(w2), b2_row,
         jnp.zeros((VEC_ROWS - 6, H), jnp.float32)],
        axis=0,
    )                                                            # (VEC_ROWS, H)

    grid = (b_pad // batch_tile,)
    out = pl.pallas_call(
        toxicity_head_kernel,
        out_shape=jax.ShapeDtypeStruct((b_pad, D_MID), jnp.float32),
        grid=grid,
        in_specs=[
            pl.BlockSpec((batch_tile, L, H), lambda i: (i, 0, 0)),   # activations tiled
            pl.BlockSpec((batch_tile, L), lambda i: (i, 0)),
            pl.BlockSpec((H, H), lambda i: (0, 0)),                  # weights resident
            pl.BlockSpec((H, D_MID), lambda i: (0, 0)),              # weights resident
            pl.BlockSpec((VEC_ROWS, H), lambda i: (0, 0)),           # packed small params
        ],
        out_specs=pl.BlockSpec((batch_tile, D_MID), lambda i: (i, 0)),
        compiler_params=pltpu.CompilerParams(
            dimension_semantics=("parallel",),       # shards batch across TCs (v7x)
            vmem_limit_bytes=32 * 1024 * 1024,       # safe on v7x's 64 MiB VMEM
        ),
    )(embedded, attention_mask, wp, w1, vec)

    return out[:B, 0:1]                                          # (B, 1)


def init_params(key):
    ks = jax.random.split(key, 8)
    wp = jax.random.normal(ks[0], (HIDDEN, HIDDEN), jnp.float32) * 0.02
    bp = jnp.zeros((HIDDEN,), jnp.float32)
    gamma = jnp.ones((HIDDEN,), jnp.float32)
    beta = jnp.zeros((HIDDEN,), jnp.float32)
    w1 = jax.random.normal(ks[1], (HIDDEN, D_MID), jnp.float32) * 0.02
    b1 = jax.random.normal(ks[2], (D_MID,), jnp.float32) * 0.02
    w2 = jax.random.normal(ks[3], (D_MID,), jnp.float32) * 0.02   # Linear(128,1) weight row
    b2 = jax.random.normal(ks[4], (), jnp.float32) * 0.02
    return (wp, bp, gamma, beta, w1, b1, w2, b2)


if __name__ == "__main__":
    key = jax.random.PRNGKey(0)
    k_tok, k_typ, k_emb, k_temb, k_par = jax.random.split(key, 5)

    # synthetic inputs matching ToxicityModel.forward signature
    input_ids = jax.random.randint(k_tok, (BATCH, SEQ), 0, VOCAB, dtype=jnp.int32)
    token_type_ids = jax.random.randint(k_typ, (BATCH, SEQ), 0, N_TYPES, dtype=jnp.int32)
    attention_mask = jnp.concatenate(
        [jnp.ones((BATCH, SEQ - 2), jnp.float32), jnp.zeros((BATCH, 2), jnp.float32)],
        axis=1,
    )

    # glue: embedding lookups (plain JAX)
    tok_emb_table = jax.random.normal(k_emb, (VOCAB, HIDDEN), jnp.float32) * 0.02
    typ_emb_table = jax.random.normal(k_temb, (N_TYPES, HIDDEN), jnp.float32) * 0.02
    embedded = tok_emb_table[input_ids] + typ_emb_table[token_type_ids]  # (B, L, H)

    params = init_params(k_par)

    preds = toxicity_model_forward(embedded, attention_mask, params)
    jax.block_until_ready(preds)
    assert preds.shape == (BATCH, 1), preds.shape
    assert bool(jnp.all(jnp.isfinite(preds))), "non-finite preds"
    print("KERNEL_OK")
</pallas_src>

<mosaic_0001>
module attributes {stable_mosaic.version = 11 : i64} {
  func.func @toxicity_head_kernel(%arg0: i32, %arg1: memref<8x8x768xbf16, #tpu.memory_space<vmem>>, %arg2: memref<8x8xf32, #tpu.memory_space<vmem>>, %arg3: memref<768x768xbf16, #tpu.memory_space<vmem>>, %arg4: memref<768x128xbf16, #tpu.memory_space<vmem>>, %arg5: memref<8x768xf32, #tpu.memory_space<vmem>>, %arg6: memref<8x128xf32, #tpu.memory_space<vmem>>) attributes {dimension_semantics = [#tpu.dimension_semantics<parallel>], iteration_bounds = array<i64: 2>, scalar_prefetch = 0 : i64, scratch_operands = 0 : i64, tpu.core_type = #tpu.core_type<tc>, window_params = [{transform_indices = @transform_0, window_bounds = array<i64: 8, 8, 768>}, {transform_indices = @transform_1, window_bounds = array<i64: 8, 8>}, {pipeline_mode = #tpu.pipeline_mode<synchronous>, transform_indices = @transform_2, window_bounds = array<i64: 768, 768>}, {pipeline_mode = #tpu.pipeline_mode<synchronous>, transform_indices = @transform_3, window_bounds = array<i64: 768, 128>}, {pipeline_mode = #tpu.pipeline_mode<synchronous>, transform_indices = @transform_4, window_bounds = array<i64: 8, 768>}, {transform_indices = @transform_5, window_bounds = array<i64: 8, 128>}]} {
    %c0 = arith.constant 0 : index
    %c0_0 = arith.constant 0 : index
    %c0_1 = arith.constant 0 : index
    %0 = vector.load %arg1[%c0, %c0_0, %c0_1] : memref<8x8x768xbf16, #tpu.memory_space<vmem>>, vector<8x8x768xbf16>
    %1 = arith.extf %0 : vector<8x8x768xbf16> to vector<8x8x768xf32>
    %c0_2 = arith.constant 0 : index
    %c0_3 = arith.constant 0 : index
    %2 = vector.load %arg2[%c0_2, %c0_3] : memref<8x8xf32, #tpu.memory_space<vmem>>, vector<8x8xf32>
    %3 = vector.shape_cast %2 : vector<8x8xf32> to vector<8x8x1xf32>
    %cst = arith.constant dense<0.000000e+00> : vector<8x1xf32>
    %4 = vector.multi_reduction <add>, %3, %cst [1] : vector<8x8x1xf32> to vector<8x1xf32>
    %cst_4 = arith.constant 1.000000e+00 : f32
    %5 = vector.broadcast %cst_4 : f32 to vector<8x1xf32>
    %6 = arith.maximumf %4, %5 : vector<8x1xf32>
    %7 = vector.broadcast %3 : vector<8x8x1xf32> to vector<8x8x768xf32>
    %8 = arith.mulf %1, %7 : vector<8x8x768xf32>
    %cst_5 = arith.constant dense<0.000000e+00> : vector<8x768xf32>
    %9 = vector.multi_reduction <add>, %8, %cst_5 [1] : vector<8x8x768xf32> to vector<8x768xf32>
    %10 = vector.broadcast %6 : vector<8x1xf32> to vector<8x768xf32>
    %11 = arith.divf %9, %10 : vector<8x768xf32>
    %c0_6 = arith.constant 0 : index
    %c0_7 = arith.constant 0 : index
    %12 = vector.load %arg5[%c0_6, %c0_7] : memref<8x768xf32, #tpu.memory_space<vmem>>, vector<1x768xf32>
    %c1 = arith.constant 1 : index
    %c0_8 = arith.constant 0 : index
    %13 = vector.load %arg5[%c1, %c0_8] : memref<8x768xf32, #tpu.memory_space<vmem>>, vector<1x768xf32>
    %c2 = arith.constant 2 : index
    %c0_9 = arith.constant 0 : index
    %14 = vector.load %arg5[%c2, %c0_9] : memref<8x768xf32, #tpu.memory_space<vmem>>, vector<1x768xf32>
    %c3 = arith.constant 3 : index
    %c0_10 = arith.constant 0 : index
    %15 = vector.load %arg5[%c3, %c0_10] : memref<8x768xf32, #tpu.memory_space<vmem>>, vector<1x128xf32>
    %c4 = arith.constant 4 : index
    %c0_11 = arith.constant 0 : index
    %16 = vector.load %arg5[%c4, %c0_11] : memref<8x768xf32, #tpu.memory_space<vmem>>, vector<1x128xf32>
    %c5 = arith.constant 5 : index
    %c0_12 = arith.constant 0 : index
    %17 = vector.load %arg5[%c5, %c0_12] : memref<8x768xf32, #tpu.memory_space<vmem>>, vector<1x128xf32>
    %18 = arith.truncf %11 : vector<8x768xf32> to vector<8x768xbf16>
    %c0_13 = arith.constant 0 : index
    %c0_14 = arith.constant 0 : index
    %19 = vector.load %arg3[%c0_13, %c0_14] : memref<768x768xbf16, #tpu.memory_space<vmem>>, vector<768x768xbf16>
    %cst_15 = arith.constant dense<0.000000e+00> : vector<8x768xf32>
    %20 = tpu.matmul %18, %19, %cst_15 {dimension_numbers = #tpu.dot_dimension_numbers<[1], [0], [0], [1], [0, 0, 1, 1], [], []>} : vector<8x768xbf16>, vector<768x768xbf16>, vector<8x768xf32> -> vector<8x768xf32>
    %21 = vector.broadcast %12 : vector<1x768xf32> to vector<8x768xf32>
    %22 = arith.addf %20, %21 : vector<8x768xf32>
    %23 = math.tanh %22 : vector<8x768xf32>
    %cst_16 = arith.constant dense<0.000000e+00> : vector<8xf32>
    %24 = vector.multi_reduction <add>, %23, %cst_16 [1] : vector<8x768xf32> to vector<8xf32>
    %25 = vector.shape_cast %24 : vector<8xf32> to vector<8x1xf32>
    %cst_17 = arith.constant 7.680000e+02 : f32
    %26 = vector.broadcast %cst_17 : f32 to vector<8x1xf32>
    %27 = arith.divf %25, %26 : vector<8x1xf32>
    %28 = vector.broadcast %27 : vector<8x1xf32> to vector<8x768xf32>
    %29 = arith.subf %23, %28 : vector<8x768xf32>
    %30 = arith.mulf %29, %29 : vector<8x768xf32>
    %cst_18 = arith.constant dense<0.000000e+00> : vector<8xf32>
    %31 = vector.multi_reduction <add>, %30, %cst_18 [1] : vector<8x768xf32> to vector<8xf32>
    %32 = vector.shape_cast %31 : vector<8xf32> to vector<8x1xf32>
    %cst_19 = arith.constant 7.680000e+02 : f32
    %33 = vector.broadcast %cst_19 : f32 to vector<8x1xf32>
    %34 = arith.divf %32, %33 : vector<8x1xf32>
    %cst_20 = arith.constant 9.99999974E-6 : f32
    %35 = vector.broadcast %cst_20 : f32 to vector<8x1xf32>
    %36 = arith.addf %34, %35 : vector<8x1xf32>
    %37 = math.rsqrt %36 : vector<8x1xf32>
    %38 = vector.broadcast %37 : vector<8x1xf32> to vector<8x768xf32>
    %39 = arith.mulf %29, %38 : vector<8x768xf32>
    %40 = vector.broadcast %13 : vector<1x768xf32> to vector<8x768xf32>
    %41 = arith.mulf %39, %40 : vector<8x768xf32>
    %42 = vector.broadcast %14 : vector<1x768xf32> to vector<8x768xf32>
    %43 = arith.addf %41, %42 : vector<8x768xf32>
    %44 = arith.truncf %43 : vector<8x768xf32> to vector<8x768xbf16>
    %c0_21 = arith.constant 0 : index
    %c0_22 = arith.constant 0 : index
    %45 = vector.load %arg4[%c0_21, %c0_22] : memref<768x128xbf16, #tpu.memory_space<vmem>>, vector<768x128xbf16>
    %cst_23 = arith.constant dense<0.000000e+00> : vector<8x128xf32>
    %46 = tpu.matmul %44, %45, %cst_23 {dimension_numbers = #tpu.dot_dimension_numbers<[1], [0], [0], [1], [0, 0, 1, 1], [], []>} : vector<8x768xbf16>, vector<768x128xbf16>, vector<8x128xf32> -> vector<8x128xf32>
    %47 = vector.broadcast %15 : vector<1x128xf32> to vector<8x128xf32>
    %48 = arith.addf %46, %47 : vector<8x128xf32>
    %49 = arith.negf %48 : vector<8x128xf32>
    %50 = math.exp %49 : vector<8x128xf32>
    %cst_24 = arith.constant 1.000000e+00 : f32
    %51 = vector.broadcast %cst_24 : f32 to vector<8x128xf32>
    %52 = arith.addf %51, %50 : vector<8x128xf32>
    %53 = arith.divf %51, %52 : vector<8x128xf32>
    %54 = arith.mulf %48, %53 : vector<8x128xf32>
    %55 = vector.broadcast %16 : vector<1x128xf32> to vector<8x128xf32>
    %56 = arith.mulf %54, %55 : vector<8x128xf32>
    %cst_25 = arith.constant dense<0.000000e+00> : vector<8xf32>
    %57 = vector.multi_reduction <add>, %56, %cst_25 [1] : vector<8x128xf32> to vector<8xf32>
    %58 = vector.shape_cast %57 : vector<8xf32> to vector<8x1xf32>
    %59 = vector.broadcast %58 : vector<8x1xf32> to vector<8x128xf32>
    %60 = vector.broadcast %17 : vector<1x128xf32> to vector<8x128xf32>
    %61 = arith.addf %59, %60 : vector<8x128xf32>
    %c0_26 = arith.constant 0 : index
    %c0_27 = arith.constant 0 : index
    %62 = vector.load %arg6[%c0_26, %c0_27] : memref<8x128xf32, #tpu.memory_space<vmem>>, vector<8x128xf32>
    tpu.vector_store %arg6[%c0_26, %c0_27], %61 {strides = array<i32>} : memref<8x128xf32, #tpu.memory_space<vmem>>, vector<8x128xf32>,
    return
  }
  func.func @transform_0(%arg0: i32) -> (i32, i32, i32) {
    %c0_i32 = arith.constant 0 : i32
    %c0_i32_0 = arith.constant 0 : i32
    %c0_i32_1 = arith.constant 0 : i32
    return %arg0, %c0_i32, %c0_i32_0 : i32, i32, i32
  }
  func.func @transform_1(%arg0: i32) -> (i32, i32) {
    %c0_i32 = arith.constant 0 : i32
    %c0_i32_0 = arith.constant 0 : i32
    return %arg0, %c0_i32 : i32, i32
  }
  func.func @transform_2(%arg0: i32) -> (i32, i32) {
    %c0_i32 = arith.constant 0 : i32
    %c0_i32_0 = arith.constant 0 : i32
    %c0_i32_1 = arith.constant 0 : i32
    return %c0_i32, %c0_i32_0 : i32, i32
  }
  func.func @transform_3(%arg0: i32) -> (i32, i32) {
    %c0_i32 = arith.constant 0 : i32
    %c0_i32_0 = arith.constant 0 : i32
    %c0_i32_1 = arith.constant 0 : i32
    return %c0_i32, %c0_i32_0 : i32, i32
  }
  func.func @transform_4(%arg0: i32) -> (i32, i32) {
    %c0_i32 = arith.constant 0 : i32
    %c0_i32_0 = arith.constant 0 : i32
    %c0_i32_1 = arith.constant 0 : i32
    return %c0_i32, %c0_i32_0 : i32, i32
  }
  func.func @transform_5(%arg0: i32) -> (i32, i32) {
    %c0_i32 = arith.constant 0 : i32
    %c0_i32_0 = arith.constant 0 : i32
    return %arg0, %c0_i32 : i32, i32
  }
}

</mosaic_0001>

<llo_original>
// kernel: tpu_custom_call.1
$region0: #{tpu_custom_call.1}
  #allocation0 [shape = 'u32[]', space=smem, size = 0x4, offset = 0x4, fixed_abs, tag = 'smem constant byte address 0x4 - core index']
  #allocation1 [shape = 'u32[144,128]{1,0:T(1,128)}', space=vmem, size = 0x12000, scoped, tag = 'internal scratch']
  %s0 = inlined_call_operand.hbm [shape: bf16[16,8,768], index: 0, kind: input, shape index: {}]
  %s1 = inlined_call_operand.vmem [shape: f32[16,8], index: 1, kind: input, shape index: {}]
  %s2 = inlined_call_operand.hbm [shape: bf16[768,768], index: 2, kind: input, shape index: {}]
  %s3 = inlined_call_operand.hbm [shape: bf16[768,128], index: 3, kind: input, shape index: {}]
  %s4 = inlined_call_operand.hbm [shape: f32[8,768], index: 4, kind: input, shape index: {}]
  %s5 = inlined_call_operand.hbm [shape: f32[16,128], index: 5, kind: output, shape index: {}]
  %s6 = sld [smem:[#allocation0]]
  $region69: #{tpu_custom_call.1} parent=0
    _
  %s8 = ssub.s32 1, %s6
  %s9 = scalar_select 0, %s8, %s6
  $region1: #{tpu_custom_call.1} parent=0
    #allocation2 [shape = 'u8[196608]{0}', space=vmem, size = 0x30000, scoped, tag = 'input window, operand 0']
    #allocation3 [shape = 's32[2]{0}', space=sflag, size = 0x8, scoped, tag = 'scoped memory for tpu_custom_call.1']
    #allocation4 [shape = 's32[2]{0}', space=sflag, size = 0x8, scoped, tag = 'scoped memory for tpu_custom_call.1']
    #allocation5 [shape = 'u8[1179648]{0}', space=vmem, size = 0x120000, scoped, tag = 'input window, operand 2, single buffered']
    #allocation6 [shape = 's32[1]{0}', space=sflag, size = 0x4, scoped, tag = 'scoped memory for tpu_custom_call.1']
    #allocation7 [shape = 'u8[196608]{0}', space=vmem, size = 0x30000, scoped, tag = 'input window, operand 3, single buffered']
    #allocation8 [shape = 'u8[24576]{0}', space=vmem, size = 0x6000, scoped, tag = 'input window, operand 4, single buffered']
    #allocation9 [shape = 's32[1]{0}', space=sflag, size = 0x4, scoped, tag = 'scoped memory for tpu_custom_call.1']
    #allocation10 [shape = 'u8[8192]{0}', space=vmem, size = 0x2000, scoped, tag = 'output window, operand 0']
    %10 = vsyncpa [#allocation3], 0
    %s11 = scalar_lea.sflag [#allocation3], 1
    %12 = vsyncpa %s11, 0
    %13 = vsyncpa [#allocation6], 0
    %14 = vsyncpa [#allocation9], 0
    %15 = vsyncpa [#allocation4], 0
    %s16 = scalar_lea.sflag [#allocation4], 1
    %17 = vsyncpa %s16, 0
    loop: start=0, step=1, limit=4
    $region2: #{tpu_custom_call.1} parent=1 // loop_pre_header
      _
    $region3: #{tpu_custom_call.1} parent=1 // loop_header
      %s19 = sphi 0, %s23
      %p20 = scmp.ge.s32.totalorder %s19, 4
      %s29 = sphi 0, %s31
      %s32 = sphi 0, %s29
      %s33 = sphi 0, %s32
      %s49 = sphi 0, %s33
      %s55 = sphi 0, %s57
      %s58 = sphi 0, %s55
      %s59 = sphi 0, %s58
      %s75 = sphi 0, %s59
      %s79 = sphi 0, %s79
      %s81 = sphi 0, %s79
      %s82 = sphi 0, %s81
      %s96 = sphi 0, %s82
      %s100 = sphi 0, %s100
      %s102 = sphi 0, %s100
      %s103 = sphi 0, %s102
      %s117 = sphi 0, %s103
      %s121 = sphi 0, %s121
      %s123 = sphi 0, %s121
      %s124 = sphi 0, %s123
      %s138 = sphi 0, %s124
      %s144 = sphi 0, %s146
      %s147 = sphi 0, %s144
      %s148 = sphi 0, %s147
      %s164 = sphi 0, %s148
    $region4: #{tpu_custom_call.1} parent=1 // loop_header_branch
      %22 = sbr.rel (%p20) target = $region8
    $region5: #{tpu_custom_call.1} parent=1 // loop_body
      %s24 = ssub.s32 %s19, 1
      %s25 = ssub.s32 %s19, 2
      %s26 = sadd.s32 %s19, 1
      %s27 = ssub.s32 %s19, %s26
      %p28 = scmp.eq.s32.totalorder %s27, 0
      %s30 = sadd.s32 %s29, 1
      %s31 = scalar_select %p28, %s29, %s30
      %p34 = pneg %p28
      %p35 = scmp.eq.s32.totalorder %s19, 1
      %p36 = por %p34, %p35
      %p37 = scmp.ne.s32.totalorder %s29, %s32
      %p38 = scmp.eq.s32.totalorder %s19, 0
      %p39 = por %p37, %p38
      %p40 = scmp.ne.s32.totalorder %s29, %s32
      %p41 = scmp.eq.s32.totalorder %s24, 1
      %p42 = por %p40, %p41
      %p43 = scmp.ne.s32.totalorder %s32, %s33
      %p44 = scmp.eq.s32.totalorder %s24, 0
      %p45 = por %p43, %p44
      %p46 = scmp.ne.s32.totalorder %s32, %s33
      %p47 = scmp.eq.s32.totalorder %s25, 1
      %p48 = por %p46, %p47
      %p50 = scmp.ne.s32.totalorder %s33, %s49
      %p51 = scmp.eq.s32.totalorder %s25, 0
      %p52 = por %p50, %p51
      %s53 = ssub.s32 %s19, %s26
      %p54 = scmp.eq.s32.totalorder %s53, 0
      %s56 = sadd.s32 %s55, 1
      %s57 = scalar_select %p54, %s55, %s56
      %p60 = pneg %p54
      %p61 = scmp.eq.s32.totalorder %s19, 1
      %p62 = por %p60, %p61
      %p63 = scmp.ne.s32.totalorder %s55, %s58
      %p64 = scmp.eq.s32.totalorder %s19, 0
      %p65 = por %p63, %p64
      %p66 = scmp.ne.s32.totalorder %s55, %s58
      %p67 = scmp.eq.s32.totalorder %s24, 1
      %p68 = por %p66, %p67
      %p69 = scmp.ne.s32.totalorder %s58, %s59
      %p70 = scmp.eq.s32.totalorder %s24, 0
      %p71 = por %p69, %p70
      %p72 = scmp.ne.s32.totalorder %s58, %s59
      %p73 = scmp.eq.s32.totalorder %s25, 1
      %p74 = por %p72, %p73
      %p76 = scmp.ne.s32.totalorder %s59, %s75
      %p77 = scmp.eq.s32.totalorder %s25, 0
      %p78 = por %p76, %p77
      %s80 = sadd.s32 %s79, 1
      %p83 = scmp.eq.s32.totalorder %s19, 1
      %p84 = scmp.ne.s32.totalorder %s79, %s81
      %p85 = scmp.eq.s32.totalorder %s19, 0
      %p86 = por %p84, %p85
      %p87 = scmp.ne.s32.totalorder %s79, %s81
      %p88 = scmp.eq.s32.totalorder %s24, 1
      %p89 = por %p87, %p88
      %p90 = scmp.ne.s32.totalorder %s81, %s82
      %p91 = scmp.eq.s32.totalorder %s24, 0
      %p92 = por %p90, %p91
      %p93 = scmp.ne.s32.totalorder %s81, %s82
      %p94 = scmp.eq.s32.totalorder %s25, 1
      %p95 = por %p93, %p94
      %p97 = scmp.ne.s32.totalorder %s82, %s96
      %p98 = scmp.eq.s32.totalorder %s25, 0
      %p99 = por %p97, %p98
      %s101 = sadd.s32 %s100, 1
      %p104 = scmp.eq.s32.totalorder %s19, 1
      %p105 = scmp.ne.s32.totalorder %s100, %s102
      %p106 = scmp.eq.s32.totalorder %s19, 0
      %p107 = por %p105, %p106
      %p108 = scmp.ne.s32.totalorder %s100, %s102
      %p109 = scmp.eq.s32.totalorder %s24, 1
      %p110 = por %p108, %p109
      %p111 = scmp.ne.s32.totalorder %s102, %s103
      %p112 = scmp.eq.s32.totalorder %s24, 0
      %p113 = por %p111, %p112
      %p114 = scmp.ne.s32.totalorder %s102, %s103
      %p115 = scmp.eq.s32.totalorder %s25, 1
      %p116 = por %p114, %p115
      %p118 = scmp.ne.s32.totalorder %s103, %s117
      %p119 = scmp.eq.s32.totalorder %s25, 0
      %p120 = por %p118, %p119
      %s122 = sadd.s32 %s121, 1
      %p125 = scmp.eq.s32.totalorder %s19, 1
      %p126 = scmp.ne.s32.totalorder %s121, %s123
      %p127 = scmp.eq.s32.totalorder %s19, 0
      %p128 = por %p126, %p127
      %p129 = scmp.ne.s32.totalorder %s121, %s123
      %p130 = scmp.eq.s32.totalorder %s24, 1
      %p131 = por %p129, %p130
      %p132 = scmp.ne.s32.totalorder %s123, %s124
      %p133 = scmp.eq.s32.totalorder %s24, 0
      %p134 = por %p132, %p133
      %p135 = scmp.ne.s32.totalorder %s123, %s124
      %p136 = scmp.eq.s32.totalorder %s25, 1
      %p137 = por %p135, %p136
      %p139 = scmp.ne.s32.totalorder %s124, %s138
      %p140 = scmp.eq.s32.totalorder %s25, 0
      %p141 = por %p139, %p140
      %s142 = ssub.s32 %s19, %s26
      %p143 = scmp.eq.s32.totalorder %s142, 0
      %s145 = sadd.s32 %s144, 1
      %s146 = scalar_select %p143, %s144, %s145
      %p149 = pneg %p143
      %p150 = scmp.eq.s32.totalorder %s19, 1
      %p151 = por %p149, %p150
      %p152 = scmp.ne.s32.totalorder %s144, %s147
      %p153 = scmp.eq.s32.totalorder %s19, 0
      %p154 = por %p152, %p153
      %p155 = scmp.ne.s32.totalorder %s144, %s147
      %p156 = scmp.eq.s32.totalorder %s24, 1
      %p157 = por %p155, %p156
      %p158 = scmp.ne.s32.totalorder %s147, %s148
      %p159 = scmp.eq.s32.totalorder %s24, 0
      %p160 = por %p158, %p159
      %p161 = scmp.ne.s32.totalorder %s147, %s148
      %p162 = scmp.eq.s32.totalorder %s25, 1
      %p163 = por %p161, %p162
      %p165 = scmp.ne.s32.totalorder %s148, %s164
      %p166 = scmp.eq.s32.totalorder %s25, 0
      %p167 = por %p165, %p166
      %p168 = scmp.le.s32.totalorder 1, %s19
      %p169 = scmp.lt.s32.totalorder %s19, 3
      %p170 = pnand %p168, %p169
      %p171 = pneg %p170
      // Predicated region
      $region9: #{tpu_custom_call.1} parent=5 // pred_check
        _
      $region10: #{tpu_custom_call.1} parent=5 // pred_check_branch
        %173 = sbr.rel (%p170) target = $region12
      $region11: #{tpu_custom_call.1} parent=5 // pred_region
        %s174 = ssub.s32 %s19, 1
        // Predicated region
        $region13: #{tpu_custom_call.1} parent=11 // pred_check
          %p175 = pneg %p92
        $region14: #{tpu_custom_call.1} parent=11 // pred_check_branch
          %177 = sbr.rel (%p175) target = $region16
        $region15: #{tpu_custom_call.1} parent=11 // pred_region
          %s179 = ssub.s32 36864, 36864
          %180 = vsyncadd [#allocation6], %s179
          %s181 = sshll.u32 [#allocation5], 4
          %s182 = int_to_ptr.vmem [resolvable:$true] %s181
          %187 = dma.hbm_to_vmem [thread:$0]  %s2, 36864, %s182, [#allocation6], 384, 384, 24
        $region16: #{tpu_custom_call.1} parent=11 // pred_fallthru
          _
        // Predicated region
        $region17: #{tpu_custom_call.1} parent=11 // pred_check
          %p188 = pneg %p113
        $region18: #{tpu_custom_call.1} parent=11 // pred_check_branch
          %190 = sbr.rel (%p188) target = $region20
        $region19: #{tpu_custom_call.1} parent=11 // pred_region
          %s192 = ssub.s32 6144, 6144
          %193 = vsyncadd [#allocation6], %s192
          %s194 = sshll.u32 [#allocation7], 4
          %s195 = int_to_ptr.vmem [resolvable:$true] %s194
          %200 = dma.hbm_to_vmem [thread:$0]  %s3, 6144, %s195, [#allocation6], 64, 64, 4
        $region20: #{tpu_custom_call.1} parent=11 // pred_fallthru
          _
        // Predicated region
        $region21: #{tpu_custom_call.1} parent=11 // pred_check
          %p201 = pneg %p134
        $region22: #{tpu_custom_call.1} parent=11 // pred_check_branch
          %203 = sbr.rel (%p201) target = $region24
        $region23: #{tpu_custom_call.1} parent=11 // pred_region
          %s205 = ssub.s32 768, 768
          %206 = vsyncadd [#allocation9], %s205
          %s208 = sshll.u32 [#allocation8], 4
          %s209 = int_to_ptr.vmem [resolvable:$true] %s208
          %211 = dma.hbm_to_vmem [thread:$0]  %s4, 768, %s209, [#allocation9]
        $region24: #{tpu_custom_call.1} parent=11 // pred_fallthru
          _
      $region12: #{tpu_custom_call.1} parent=5 // pred_fallthru
        _
      %p212 = scmp.lt.s32.totalorder %s19, 2
      // Predicated region
      $region25: #{tpu_custom_call.1} parent=5 // pred_check
        %p213 = pneg %p212
      $region26: #{tpu_custom_call.1} parent=5 // pred_check_branch
        %215 = sbr.rel (%p213) target = $region28
      $region27: #{tpu_custom_call.1} parent=5 // pred_region
        // Predicated region
        $region29: #{tpu_custom_call.1} parent=27 // pred_check
          %p216 = pneg %p39
        $region30: #{tpu_custom_call.1} parent=27 // pred_check_branch
          %218 = sbr.rel (%p216) target = $region32
        $region31: #{tpu_custom_call.1} parent=27 // pred_region
          %s219 = sand.u32 %s29, 1
          %s220 = scalar_lea.sflag [#allocation3], %s219
          %s221 = sand.u32 %s29, 1
          %s222 = smul.addr %s221, 192
          %s223 = scalar_lea.vmem [#allocation2], %s222
          %s224 = smul.u32 8, %s19
          %s226 = ssub.s32 3072, 3072
          %227 = vsyncadd %s220, %s226
          %s228 = smul.addr %s224, 6
          %s229 = smul.addr %s228, 64
          %s230 = scalar_lea.hbm %s0, %s229
          %s231 = sshll.u32 %s223, 4
          %s232 = int_to_ptr.vmem [resolvable:$true] %s231
          %237 = dma.hbm_to_vmem [thread:$0]  %s230, 3072, %s232, %s220, 384, 384, 24
        $region32: #{tpu_custom_call.1} parent=27 // pred_fallthru
          _
        // Predicated region
        $region33: #{tpu_custom_call.1} parent=27 // pred_check
          %p238 = pneg %p65
        $region34: #{tpu_custom_call.1} parent=27 // pred_check_branch
          %240 = sbr.rel (%p238) target = $region36
        $region35: #{tpu_custom_call.1} parent=27 // pred_region
          %p241 = scmp.lt.s32.totalorder %s19, 1
          %s242 = scalar_select %p241, %s19, 1
          %s243 = smul.addr %s242, 8
          %s244 = scalar_lea.vmem %s1, %s243
        $region36: #{tpu_custom_call.1} parent=27 // pred_fallthru
          _
      $region28: #{tpu_custom_call.1} parent=5 // pred_fallthru
        _
      %p245 = scmp.le.s32.totalorder 1, %s19
      %p246 = scmp.lt.s32.totalorder %s19, 3
      %p247 = pnand %p245, %p246
      %p248 = pneg %p247
      // Predicated region
      $region37: #{tpu_custom_call.1} parent=5 // pred_check
        _
      $region38: #{tpu_custom_call.1} parent=5 // pred_check_branch
        %250 = sbr.rel (%p247) target = $region40
      $region39: #{tpu_custom_call.1} parent=5 // pred_region
        %s251 = ssub.s32 %s19, 1
        %s252 = sand.u32 %s32, 1
        %s253 = scalar_lea.sflag [#allocation3], %s252
        %s254 = sand.u32 %s32, 1
        %s255 = smul.addr %s254, 192
        %s256 = scalar_lea.vmem [#allocation2], %s255
        // Predicated region
        $region41: #{tpu_custom_call.1} parent=39 // pred_check
          %p257 = pneg %p45
        $region42: #{tpu_custom_call.1} parent=39 // pred_check_branch
          %259 = sbr.rel (%p257) target = $region44
        $region43: #{tpu_custom_call.1} parent=39 // pred_region
          %260 = dma.done %s253, 3072
        $region44: #{tpu_custom_call.1} parent=39 // pred_fallthru
          _
        // Predicated region
        $region45: #{tpu_custom_call.1} parent=39 // pred_check
          %p261 = pneg %p92
        $region46: #{tpu_custom_call.1} parent=39 // pred_check_branch
          %263 = sbr.rel (%p261) target = $region48
        $region47: #{tpu_custom_call.1} parent=39 // pred_region
          %264 = dma.done [#allocation6], 36864
        $region48: #{tpu_custom_call.1} parent=39 // pred_fallthru
          _
        // Predicated region
        $region49: #{tpu_custom_call.1} parent=39 // pred_check
          %p265 = pneg %p113
        $region50: #{tpu_custom_call.1} parent=39 // pred_check_branch
          %267 = sbr.rel (%p265) target = $region52
        $region51: #{tpu_custom_call.1} parent=39 // pred_region
          %268 = dma.done [#allocation6], 6144
        $region52: #{tpu_custom_call.1} parent=39 // pred_fallthru
          _
        // Predicated region
        $region53: #{tpu_custom_call.1} parent=39 // pred_check
          %p269 = pneg %p134
        $region54: #{tpu_custom_call.1} parent=39 // pred_check_branch
          %271 = sbr.rel (%p269) target = $region56
        $region55: #{tpu_custom_call.1} parent=39 // pred_region
          %272 = dma.done [#allocation9], 768
        $region56: #{tpu_custom_call.1} parent=39 // pred_fallthru
          _
        %s273 = sand.u32 %s32, 1
        %s274 = scalar_lea.sflag [#allocation3], %s273
        %s275 = sand.u32 %s32, 1
        %s276 = smul.addr %s275, 192
        %s277 = scalar_lea.vmem [#allocation2], %s276
        %p278 = pneg %p45
        %p279 = pneg %p42
        %p280 = scmp.lt.s32.totalorder %s24, 1
        %s281 = scalar_select %p280, %s24, 1
        %s282 = smul.addr %s281, 8
        %s283 = scalar_lea.vmem %s1, %s282
        %p284 = pneg %p71
        %p285 = pneg %p68
        %p286 = pneg %p92
        %p287 = pneg %p89
        %p288 = pneg %p113
        %p289 = pneg %p110
        %p290 = pneg %p134
        %p291 = pneg %p131
        %p292 = pneg %p160
        %p293 = pneg %p157
        %s294 = sand.u32 %s147, 1
        %s295 = scalar_lea.sflag [#allocation4], %s294
        %s296 = sand.u32 %s147, 1
        %s297 = smul.addr %s296, 8
        %s298 = scalar_lea.vmem [#allocation10], %s297
        %s299 = smul.u32 8, %s24
        %p300 = scmp.lt.s32.totalorder %s24, 1
        %s301 = scalar_select %p300, %s24, 1
        %s302 = smul.addr %s301, 8
        %s303 = scalar_lea.vmem %s1, %s302
        %v305 = vld [vmem:[%s256] sm:$0xff]
        %v306 = vld [vmem:[%s256 + $0x8] sm:$0xff]
        %v307 = vld [vmem:[%s256 + $0x10] sm:$0xff]
        %v308 = vld [vmem:[%s256 + $0x18] sm:$0xff]
        %v309 = vld [vmem:[%s256 + $0x20] sm:$0xff]
        %v310 = vld [vmem:[%s256 + $0x28] sm:$0xff]
        %v311 = vld [vmem:[%s256 + $0x30] sm:$0xff]
        %v312 = vld [vmem:[%s256 + $0x38] sm:$0xff]
        %v313 = vld [vmem:[%s256 + $0x40] sm:$0xff]
        %v314 = vld [vmem:[%s256 + $0x48] sm:$0xff]
        %v315 = vld [vmem:[%s256 + $0x50] sm:$0xff]
        %v316 = vld [vmem:[%s256 + $0x58] sm:$0xff]
        %v317 = vld [vmem:[%s256 + $0x60] sm:$0xff]
        %v318 = vld [vmem:[%s256 + $0x68] sm:$0xff]
        %v319 = vld [vmem:[%s256 + $0x70] sm:$0xff]
        %v320 = vld [vmem:[%s256 + $0x78] sm:$0xff]
        %v321 = vld [vmem:[%s256 + $0x80] sm:$0xff]
        %v322 = vld [vmem:[%s256 + $0x88] sm:$0xff]
        %v323 = vld [vmem:[%s256 + $0x90] sm:$0xff]
        %v324 = vld [vmem:[%s256 + $0x98] sm:$0xff]
        %v325 = vld [vmem:[%s256 + $0xa0] sm:$0xff]
        %v326 = vld [vmem:[%s256 + $0xa8] sm:$0xff]
        %v327 = vld [vmem:[%s256 + $0xb0] sm:$0xff]
        %v328 = vld [vmem:[%s256 + $0xb8] sm:$0xff]
        %v329 = vunpack.c.l.bf16 %v305
        %v330 = vunpack.c.h.bf16 %v305
        %v331 = vunpack.c.l.bf16 %v306
        %v332 = vunpack.c.h.bf16 %v306
        %v333 = vunpack.c.l.bf16 %v307
        %v334 = vunpack.c.h.bf16 %v307
        %v335 = vunpack.c.l.bf16 %v308
        %v336 = vunpack.c.h.bf16 %v308
        %v337 = vunpack.c.l.bf16 %v309
        %v338 = vunpack.c.h.bf16 %v309
        %v339 = vunpack.c.l.bf16 %v310
        %v340 = vunpack.c.h.bf16 %v310
        %v341 = vunpack.c.l.bf16 %v311
        %v342 = vunpack.c.h.bf16 %v311
        %v343 = vunpack.c.l.bf16 %v312
        %v344 = vunpack.c.h.bf16 %v312
        %v345 = vunpack.c.l.bf16 %v313
        %v346 = vunpack.c.h.bf16 %v313
        %v347 = vunpack.c.l.bf16 %v314
        %v348 = vunpack.c.h.bf16 %v314
        %v349 = vunpack.c.l.bf16 %v315
        %v350 = vunpack.c.h.bf16 %v315
        %v351 = vunpack.c.l.bf16 %v316
        %v352 = vunpack.c.h.bf16 %v316
        %v353 = vunpack.c.l.bf16 %v317
        %v354 = vunpack.c.h.bf16 %v317
        %v355 = vunpack.c.l.bf16 %v318
        %v356 = vunpack.c.h.bf16 %v318
        %v357 = vunpack.c.l.bf16 %v319
        %v358 = vunpack.c.h.bf16 %v319
        %v359 = vunpack.c.l.bf16 %v320
        %v360 = vunpack.c.h.bf16 %v320
        %v361 = vunpack.c.l.bf16 %v321
        %v362 = vunpack.c.h.bf16 %v321
        %v363 = vunpack.c.l.bf16 %v322
        %v364 = vunpack.c.h.bf16 %v322
        %v365 = vunpack.c.l.bf16 %v323
        %v366 = vunpack.c.h.bf16 %v323
        %v367 = vunpack.c.l.bf16 %v324
        %v368 = vunpack.c.h.bf16 %v324
        %v369 = vunpack.c.l.bf16 %v325
        %v370 = vunpack.c.h.bf16 %v325
        %v371 = vunpack.c.l.bf16 %v326
        %v372 = vunpack.c.h.bf16 %v326
        %v373 = vunpack.c.l.bf16 %v327
        %v374 = vunpack.c.h.bf16 %v327
        %v375 = vunpack.c.l.bf16 %v328
        %v376 = vunpack.c.h.bf16 %v328
        %v377 = vld [vmem:[%s303] sm:$0xff]
        %v378 = vlaneseq
        %v379 = vshrl.u32 %v378, 7
        %v380 = vsub.s32 0, %v379
        %v381 = vrot.slane %v377, %v380
        %383 = vbcast.lane.b32.xlu0 %v381, 256
        %v384 = vpop.permute.xlu0 %383
        %v385 = vlaneseq
        %v386 = vshrl.u32 %v385, 7
        %v387 = vsub.s32 1, %v386
        %v388 = vrot.slane %v377, %v387
        %390 = vbcast.lane.b32.xlu0 %v388, 256
        %v391 = vpop.permute.xlu0 %390
        %v392 = vlaneseq
        %v393 = vshrl.u32 %v392, 7
        %v394 = vsub.s32 2, %v393
        %v395 = vrot.slane %v377, %v394
        %397 = vbcast.lane.b32.xlu0 %v395, 256
        %v398 = vpop.permute.xlu0 %397
        %v399 = vlaneseq
        %v400 = vshrl.u32 %v399, 7
        %v401 = vsub.s32 3, %v400
        %v402 = vrot.slane %v377, %v401
        %404 = vbcast.lane.b32.xlu0 %v402, 256
        %v405 = vpop.permute.xlu0 %404
        %v406 = vlaneseq
        %v407 = vshrl.u32 %v406, 7
        %v408 = vsub.s32 4, %v407
        %v409 = vrot.slane %v377, %v408
        %411 = vbcast.lane.b32.xlu0 %v409, 256
        %v412 = vpop.permute.xlu0 %411
        %v413 = vlaneseq
        %v414 = vshrl.u32 %v413, 7
        %v415 = vsub.s32 5, %v414
        %v416 = vrot.slane %v377, %v415
        %418 = vbcast.lane.b32.xlu0 %v416, 256
        %v419 = vpop.permute.xlu0 %418
        %v420 = vlaneseq
        %v421 = vshrl.u32 %v420, 7
        %v422 = vsub.s32 6, %v421
        %v423 = vrot.slane %v377, %v422
        %425 = vbcast.lane.b32.xlu0 %v423, 256
        %v426 = vpop.permute.xlu0 %425
        %v427 = vlaneseq
        %v428 = vshrl.u32 %v427, 7
        %v429 = vsub.s32 7, %v428
        %v430 = vrot.slane %v377, %v429
        %432 = vbcast.lane.b32.xlu0 %v430, 256
        %v433 = vpop.permute.xlu0 %432
        %v434 = vrot.slane %v384, 4
        %v435 = vadd.f32 %v384, %v434
        %v436 = vrot.slane %v435, 2
        %v437 = vadd.f32 %v435, %v436
        %v438 = vrot.slane %v437, 1
        %v439 = vadd.f32 %v437, %v438
        %v440 = vrot.slane %v391, 4
        %v441 = vadd.f32 %v391, %v440
        %v442 = vrot.slane %v441, 2
        %v443 = vadd.f32 %v441, %v442
        %v444 = vrot.slane %v443, 1
        %v445 = vadd.f32 %v443, %v444
        %v446 = vrot.slane %v398, 4
        %v447 = vadd.f32 %v398, %v446
        %v448 = vrot.slane %v447, 2
        %v449 = vadd.f32 %v447, %v448
        %v450 = vrot.slane %v449, 1
        %v451 = vadd.f32 %v449, %v450
        %v452 = vrot.slane %v405, 4
        %v453 = vadd.f32 %v405, %v452
        %v454 = vrot.slane %v453, 2
        %v455 = vadd.f32 %v453, %v454
        %v456 = vrot.slane %v455, 1
        %v457 = vadd.f32 %v455, %v456
        %v458 = vrot.slane %v412, 4
        %v459 = vadd.f32 %v412, %v458
        %v460 = vrot.slane %v459, 2
        %v461 = vadd.f32 %v459, %v460
        %v462 = vrot.slane %v461, 1
        %v463 = vadd.f32 %v461, %v462
        %v464 = vrot.slane %v419, 4
        %v465 = vadd.f32 %v419, %v464
        %v466 = vrot.slane %v465, 2
        %v467 = vadd.f32 %v465, %v466
        %v468 = vrot.slane %v467, 1
        %v469 = vadd.f32 %v467, %v468
        %v470 = vrot.slane %v426, 4
        %v471 = vadd.f32 %v426, %v470
        %v472 = vrot.slane %v471, 2
        %v473 = vadd.f32 %v471, %v472
        %v474 = vrot.slane %v473, 1
        %v475 = vadd.f32 %v473, %v474
        %v476 = vrot.slane %v433, 4
        %v477 = vadd.f32 %v433, %v476
        %v478 = vrot.slane %v477, 2
        %v479 = vadd.f32 %v477, %v478
        %v480 = vrot.slane %v479, 1
        %v481 = vadd.f32 %v479, %v480
        %v482 = vmax.f32 %v439, 1.0
        %v483 = vmax.f32 %v445, 1.0
        %v484 = vmax.f32 %v451, 1.0
        %v485 = vmax.f32 %v457, 1.0
        %v486 = vmax.f32 %v463, 1.0
        %v487 = vmax.f32 %v469, 1.0
        %v488 = vmax.f32 %v475, 1.0
        %v489 = vmax.f32 %v481, 1.0
        %v490 = vmul.f32 %v329, %v384
        %v491 = vmul.f32 %v330, %v384
        %v492 = vmul.f32 %v331, %v384
        %v493 = vmul.f32 %v332, %v384
        %v494 = vmul.f32 %v333, %v384
        %v495 = vmul.f32 %v334, %v384
        %v496 = vmul.f32 %v335, %v391
        %v497 = vmul.f32 %v336, %v391
        %v498 = vmul.f32 %v337, %v391
        %v499 = vmul.f32 %v338, %v391
        %v500 = vmul.f32 %v339, %v391
        %v501 = vmul.f32 %v340, %v391
        %v502 = vmul.f32 %v341, %v398
        %v503 = vmul.f32 %v342, %v398
        %v504 = vmul.f32 %v343, %v398
        %v505 = vmul.f32 %v344, %v398
        %v506 = vmul.f32 %v345, %v398
        %v507 = vmul.f32 %v346, %v398
        %v508 = vmul.f32 %v347, %v405
        %v509 = vmul.f32 %v348, %v405
        %v510 = vmul.f32 %v349, %v405
        %v511 = vmul.f32 %v350, %v405
        %v512 = vmul.f32 %v351, %v405
        %v513 = vmul.f32 %v352, %v405
        %v514 = vmul.f32 %v353, %v412
        %v515 = vmul.f32 %v354, %v412
        %v516 = vmul.f32 %v355, %v412
        %v517 = vmul.f32 %v356, %v412
        %v518 = vmul.f32 %v357, %v412
        %v519 = vmul.f32 %v358, %v412
        %v520 = vmul.f32 %v359, %v419
        %v521 = vmul.f32 %v360, %v419
        %v522 = vmul.f32 %v361, %v419
        %v523 = vmul.f32 %v362, %v419
        %v524 = vmul.f32 %v363, %v419
        %v525 = vmul.f32 %v364, %v419
        %v526 = vmul.f32 %v365, %v426
        %v527 = vmul.f32 %v366, %v426
        %v528 = vmul.f32 %v367, %v426
        %v529 = vmul.f32 %v368, %v426
        %v530 = vmul.f32 %v369, %v426
        %v531 = vmul.f32 %v370, %v426
        %v532 = vmul.f32 %v371, %v433
        %v533 = vmul.f32 %v372, %v433
        %v534 = vmul.f32 %v373, %v433
        %v535 = vmul.f32 %v374, %v433
        %v536 = vmul.f32 %v375, %v433
        %v537 = vmul.f32 %v376, %v433
        %v538 = vrot.slane %v490, 4
        %v539 = vadd.f32 %v490, %v538
        %v540 = vrot.slane %v539, 2
        %v541 = vadd.f32 %v539, %v540
        %v542 = vrot.slane %v541, 1
        %v543 = vadd.f32 %v541, %v542
        %v544 = vrot.slane %v491, 4
        %v545 = vadd.f32 %v491, %v544
        %v546 = vrot.slane %v545, 2
        %v547 = vadd.f32 %v545, %v546
        %v548 = vrot.slane %v547, 1
        %v549 = vadd.f32 %v547, %v548
        %v550 = vrot.slane %v492, 4
        %v551 = vadd.f32 %v492, %v550
        %v552 = vrot.slane %v551, 2
        %v553 = vadd.f32 %v551, %v552
        %v554 = vrot.slane %v553, 1
        %v555 = vadd.f32 %v553, %v554
        %v556 = vrot.slane %v493, 4
        %v557 = vadd.f32 %v493, %v556
        %v558 = vrot.slane %v557, 2
        %v559 = vadd.f32 %v557, %v558
        %v560 = vrot.slane %v559, 1
        %v561 = vadd.f32 %v559, %v560
        %v562 = vrot.slane %v494, 4
        %v563 = vadd.f32 %v494, %v562
        %v564 = vrot.slane %v563, 2
        %v565 = vadd.f32 %v563, %v564
        %v566 = vrot.slane %v565, 1
        %v567 = vadd.f32 %v565, %v566
        %v568 = vrot.slane %v495, 4
        %v569 = vadd.f32 %v495, %v568
        %v570 = vrot.slane %v569, 2
        %v571 = vadd.f32 %v569, %v570
        %v572 = vrot.slane %v571, 1
        %v573 = vadd.f32 %v571, %v572
        %v574 = vrot.slane %v496, 4
        %v575 = vadd.f32 %v496, %v574
        %v576 = vrot.slane %v575, 2
        %v577 = vadd.f32 %v575, %v576
        %v578 = vrot.slane %v577, 1
        %v579 = vadd.f32 %v577, %v578
        %v580 = vrot.slane %v497, 4
        %v581 = vadd.f32 %v497, %v580
        %v582 = vrot.slane %v581, 2
        %v583 = vadd.f32 %v581, %v582
        %v584 = vrot.slane %v583, 1
        %v585 = vadd.f32 %v583, %v584
        %v586 = vrot.slane %v498, 4
        %v587 = vadd.f32 %v498, %v586
        %v588 = vrot.slane %v587, 2
        %v589 = vadd.f32 %v587, %v588
        %v590 = vrot.slane %v589, 1
        %v591 = vadd.f32 %v589, %v590
        %v592 = vrot.slane %v499, 4
        %v593 = vadd.f32 %v499, %v592
        %v594 = vrot.slane %v593, 2
        %v595 = vadd.f32 %v593, %v594
        %v596 = vrot.slane %v595, 1
        %v597 = vadd.f32 %v595, %v596
        %v598 = vrot.slane %v500, 4
        %v599 = vadd.f32 %v500, %v598
        %v600 = vrot.slane %v599, 2
        %v601 = vadd.f32 %v599, %v600
        %v602 = vrot.slane %v601, 1
        %v603 = vadd.f32 %v601, %v602
        %v604 = vrot.slane %v501, 4
        %v605 = vadd.f32 %v501, %v604
        %v606 = vrot.slane %v605, 2
        %v607 = vadd.f32 %v605, %v606
        %v608 = vrot.slane %v607, 1
        %v609 = vadd.f32 %v607, %v608
        %v610 = vrot.slane %v502, 4
        %v611 = vadd.f32 %v502, %v610
        %v612 = vrot.slane %v611, 2
        %v613 = vadd.f32 %v611, %v612
        %v614 = vrot.slane %v613, 1
        %v615 = vadd.f32 %v613, %v614
        %v616 = vrot.slane %v503, 4
        %v617 = vadd.f32 %v503, %v616
        %v618 = vrot.slane %v617, 2
        %v619 = vadd.f32 %v617, %v618
        %v620 = vrot.slane %v619, 1
        %v621 = vadd.f32 %v619, %v620
        %v622 = vrot.slane %v504, 4
        %v623 = vadd.f32 %v504, %v622
        %v624 = vrot.slane %v623, 2
        %v625 = vadd.f32 %v623, %v624
        %v626 = vrot.slane %v625, 1
        %v627 = vadd.f32 %v625, %v626
        %v628 = vrot.slane %v505, 4
        %v629 = vadd.f32 %v505, %v628
        %v630 = vrot.slane %v629, 2
        %v631 = vadd.f32 %v629, %v630
        %v632 = vrot.slane %v631, 1
        %v633 = vadd.f32 %v631, %v632
        %v634 = vrot.slane %v506, 4
        %v635 = vadd.f32 %v506, %v634
        %v636 = vrot.slane %v635, 2
        %v637 = vadd.f32 %v635, %v636
        %v638 = vrot.slane %v637, 1
        %v639 = vadd.f32 %v637, %v638
        %v640 = vrot.slane %v507, 4
        %v641 = vadd.f32 %v507, %v640
        %v642 = vrot.slane %v641, 2
        %v643 = vadd.f32 %v641, %v642
        %v644 = vrot.slane %v643, 1
        %v645 = vadd.f32 %v643, %v644
        %v646 = vrot.slane %v508, 4
        %v647 = vadd.f32 %v508, %v646
        %v648 = vrot.slane %v647, 2
        %v649 = vadd.f32 %v647, %v648
        %v650 = vrot.slane %v649, 1
        %v651 = vadd.f32 %v649, %v650
        %v652 = vrot.slane %v509, 4
        %v653 = vadd.f32 %v509, %v652
        %v654 = vrot.slane %v653, 2
        %v655 = vadd.f32 %v653, %v654
        %v656 = vrot.slane %v655, 1
        %v657 = vadd.f32 %v655, %v656
        %v658 = vrot.slane %v510, 4
        %v659 = vadd.f32 %v510, %v658
        %v660 = vrot.slane %v659, 2
        %v661 = vadd.f32 %v659, %v660
        %v662 = vrot.slane %v661, 1
        %v663 = vadd.f32 %v661, %v662
        %v664 = vrot.slane %v511, 4
        %v665 = vadd.f32 %v511, %v664
        %v666 = vrot.slane %v665, 2
        %v667 = vadd.f32 %v665, %v666
        %v668 = vrot.slane %v667, 1
        %v669 = vadd.f32 %v667, %v668
        %v670 = vrot.slane %v512, 4
        %v671 = vadd.f32 %v512, %v670
        %v672 = vrot.slane %v671, 2
        %v673 = vadd.f32 %v671, %v672
        %v674 = vrot.slane %v673, 1
        %v675 = vadd.f32 %v673, %v674
        %v676 = vrot.slane %v513, 4
        %v677 = vadd.f32 %v513, %v676
        %v678 = vrot.slane %v677, 2
        %v679 = vadd.f32 %v677, %v678
        %v680 = vrot.slane %v679, 1
        %v681 = vadd.f32 %v679, %v680
        %v682 = vrot.slane %v514, 4
        %v683 = vadd.f32 %v514, %v682
        %v684 = vrot.slane %v683, 2
        %v685 = vadd.f32 %v683, %v684
        %v686 = vrot.slane %v685, 1
        %v687 = vadd.f32 %v685, %v686
        %v688 = vrot.slane %v515, 4
        %v689 = vadd.f32 %v515, %v688
        %v690 = vrot.slane %v689, 2
        %v691 = vadd.f32 %v689, %v690
        %v692 = vrot.slane %v691, 1
        %v693 = vadd.f32 %v691, %v692
        %v694 = vrot.slane %v516, 4
        %v695 = vadd.f32 %v516, %v694
        %v696 = vrot.slane %v695, 2
        %v697 = vadd.f32 %v695, %v696
        %v698 = vrot.slane %v697, 1
        %v699 = vadd.f32 %v697, %v698
        %v700 = vrot.slane %v517, 4
        %v701 = vadd.f32 %v517, %v700
        %v702 = vrot.slane %v701, 2
        %v703 = vadd.f32 %v701, %v702
        %v704 = vrot.slane %v703, 1
        %v705 = vadd.f32 %v703, %v704
        %v706 = vrot.slane %v518, 4
        %v707 = vadd.f32 %v518, %v706
        %v708 = vrot.slane %v707, 2
        %v709 = vadd.f32 %v707, %v708
        %v710 = vrot.slane %v709, 1
        %v711 = vadd.f32 %v709, %v710
        %v712 = vrot.slane %v519, 4
        %v713 = vadd.f32 %v519, %v712
        %v714 = vrot.slane %v713, 2
        %v715 = vadd.f32 %v713, %v714
        %v716 = vrot.slane %v715, 1
        %v717 = vadd.f32 %v715, %v716
        %v718 = vrot.slane %v520, 4
        %v719 = vadd.f32 %v520, %v718
        %v720 = vrot.slane %v719, 2
        %v721 = vadd.f32 %v719, %v720
        %v722 = vrot.slane %v721, 1
        %v723 = vadd.f32 %v721, %v722
        %v724 = vrot.slane %v521, 4
        %v725 = vadd.f32 %v521, %v724
        %v726 = vrot.slane %v725, 2
        %v727 = vadd.f32 %v725, %v726
        %v728 = vrot.slane %v727, 1
        %v729 = vadd.f32 %v727, %v728
        %v730 = vrot.slane %v522, 4
        %v731 = vadd.f32 %v522, %v730
        %v732 = vrot.slane %v731, 2
        %v733 = vadd.f32 %v731, %v732
        %v734 = vrot.slane %v733, 1
        %v735 = vadd.f32 %v733, %v734
        %v736 = vrot.slane %v523, 4
        %v737 = vadd.f32 %v523, %v736
        %v738 = vrot.slane %v737, 2
        %v739 = vadd.f32 %v737, %v738
        %v740 = vrot.slane %v739, 1
        %v741 = vadd.f32 %v739, %v740
        %v742 = vrot.slane %v524, 4
        %v743 = vadd.f32 %v524, %v742
        %v744 = vrot.slane %v743, 2
        %v745 = vadd.f32 %v743, %v744
        %v746 = vrot.slane %v745, 1
        %v747 = vadd.f32 %v745, %v746
        %v748 = vrot.slane %v525, 4
        %v749 = vadd.f32 %v525, %v748
        %v750 = vrot.slane %v749, 2
        %v751 = vadd.f32 %v749, %v750
        %v752 = vrot.slane %v751, 1
        %v753 = vadd.f32 %v751, %v752
        %v754 = vrot.slane %v526, 4
        %v755 = vadd.f32 %v526, %v754
        %v756 = vrot.slane %v755, 2
        %v757 = vadd.f32 %v755, %v756
        %v758 = vrot.slane %v757, 1
        %v759 = vadd.f32 %v757, %v758
        %v760 = vrot.slane %v527, 4
        %v761 = vadd.f32 %v527, %v760
        %v762 = vrot.slane %v761, 2
        %v763 = vadd.f32 %v761, %v762
        %v764 = vrot.slane %v763, 1
        %v765 = vadd.f32 %v763, %v764
        %v766 = vrot.slane %v528, 4
        %v767 = vadd.f32 %v528, %v766
        %v768 = vrot.slane %v767, 2
        %v769 = vadd.f32 %v767, %v768
        %v770 = vrot.slane %v769, 1
        %v771 = vadd.f32 %v769, %v770
        %v772 = vrot.slane %v529, 4
        %v773 = vadd.f32 %v529, %v772
        %v774 = vrot.slane %v773, 2
        %v775 = vadd.f32 %v773, %v774
        %v776 = vrot.slane %v775, 1
        %v777 = vadd.f32 %v775, %v776
        %v778 = vrot.slane %v530, 4
        %v779 = vadd.f32 %v530, %v778
        %v780 = vrot.slane %v779, 2
        %v781 = vadd.f32 %v779, %v780
        %v782 = vrot.slane %v781, 1
        %v783 = vadd.f32 %v781, %v782
        %v784 = vrot.slane %v531, 4
        %v785 = vadd.f32 %v531, %v784
        %v786 = vrot.slane %v785, 2
        %v787 = vadd.f32 %v785, %v786
        %v788 = vrot.slane %v787, 1
        %v789 = vadd.f32 %v787, %v788
        %v790 = vrot.slane %v532, 4
        %v791 = vadd.f32 %v532, %v790
        %v792 = vrot.slane %v791, 2
        %v793 = vadd.f32 %v791, %v792
        %v794 = vrot.slane %v793, 1
        %v795 = vadd.f32 %v793, %v794
        %v796 = vrot.slane %v533, 4
        %v797 = vadd.f32 %v533, %v796
        %v798 = vrot.slane %v797, 2
        %v799 = vadd.f32 %v797, %v798
        %v800 = vrot.slane %v799, 1
        %v801 = vadd.f32 %v799, %v800
        %v802 = vrot.slane %v534, 4
        %v803 = vadd.f32 %v534, %v802
        %v804 = vrot.slane %v803, 2
        %v805 = vadd.f32 %v803, %v804
        %v806 = vrot.slane %v805, 1
        %v807 = vadd.f32 %v805, %v806
        %v808 = vrot.slane %v535, 4
        %v809 = vadd.f32 %v535, %v808
        %v810 = vrot.slane %v809, 2
        %v811 = vadd.f32 %v809, %v810
        %v812 = vrot.slane %v811, 1
        %v813 = vadd.f32 %v811, %v812
        %v814 = vrot.slane %v536, 4
        %v815 = vadd.f32 %v536, %v814
        %v816 = vrot.slane %v815, 2
        %v817 = vadd.f32 %v815, %v816
        %v818 = vrot.slane %v817, 1
        %v819 = vadd.f32 %v817, %v818
        %v820 = vrot.slane %v537, 4
        %v821 = vadd.f32 %v537, %v820
        %v822 = vrot.slane %v821, 2
        %v823 = vadd.f32 %v821, %v822
        %v824 = vrot.slane %v823, 1
        %v825 = vadd.f32 %v823, %v824
        %v826 = vrcp.pop %v482
        %v827 = vmul.f32 %v543, %v826
        %v828 = vmul.f32 %v549, %v826
        %v829 = vmul.f32 %v555, %v826
        %v830 = vmul.f32 %v561, %v826
        %v831 = vmul.f32 %v567, %v826
        %v832 = vmul.f32 %v573, %v826
        %v833 = vrcp.pop %v483
        %v834 = vmul.f32 %v579, %v833
        %v835 = vmul.f32 %v585, %v833
        %v836 = vmul.f32 %v591, %v833
        %v837 = vmul.f32 %v597, %v833
        %v838 = vmul.f32 %v603, %v833
        %v839 = vmul.f32 %v609, %v833
        %v840 = vrcp.pop %v484
        %v841 = vmul.f32 %v615, %v840
        %v842 = vmul.f32 %v621, %v840
        %v843 = vmul.f32 %v627, %v840
        %v844 = vmul.f32 %v633, %v840
        %v845 = vmul.f32 %v639, %v840
        %v846 = vmul.f32 %v645, %v840
        %v847 = vrcp.pop %v485
        %v848 = vmul.f32 %v651, %v847
        %v849 = vmul.f32 %v657, %v847
        %v850 = vmul.f32 %v663, %v847
        %v851 = vmul.f32 %v669, %v847
        %v852 = vmul.f32 %v675, %v847
        %v853 = vmul.f32 %v681, %v847
        %v854 = vrcp.pop %v486
        %v855 = vmul.f32 %v687, %v854
        %v856 = vmul.f32 %v693, %v854
        %v857 = vmul.f32 %v699, %v854
        %v858 = vmul.f32 %v705, %v854
        %v859 = vmul.f32 %v711, %v854
        %v860 = vmul.f32 %v717, %v854
        %v861 = vrcp.pop %v487
        %v862 = vmul.f32 %v723, %v861
        %v863 = vmul.f32 %v729, %v861
        %v864 = vmul.f32 %v735, %v861
        %v865 = vmul.f32 %v741, %v861
        %v866 = vmul.f32 %v747, %v861
        %v867 = vmul.f32 %v753, %v861
        %v868 = vrcp.pop %v488
        %v869 = vmul.f32 %v759, %v868
        %v870 = vmul.f32 %v765, %v868
        %v871 = vmul.f32 %v771, %v868
        %v872 = vmul.f32 %v777, %v868
        %v873 = vmul.f32 %v783, %v868
        %v874 = vmul.f32 %v789, %v868
        %v875 = vrcp.pop %v489
        %v876 = vmul.f32 %v795, %v875
        %v877 = vmul.f32 %v801, %v875
        %v878 = vmul.f32 %v807, %v875
        %v879 = vmul.f32 %v813, %v875
        %v880 = vmul.f32 %v819, %v875
        %v881 = vmul.f32 %v825, %v875
        %v882 = vld [vmem:[#allocation8] ss:$8 sm:$0xf]
        %v883 = vld [vmem:[#allocation8] ss:$8 sm:$0x30]
        %v884 = vor.u32 %v882, %v883
        %s885 = scalar_lea.vmem [#allocation8], 1
        %v886 = vld [vmem:[%s885] ss:$8 sm:$0xf]
        %v887 = vld [vmem:[%s885] ss:$8 sm:$0x30]
        %v888 = vor.u32 %v886, %v887
        %s889 = scalar_lea.vmem [#allocation8], 2
        %v890 = vld [vmem:[%s889] ss:$8 sm:$0xf]
        %v891 = vld [vmem:[%s889] ss:$8 sm:$0x30]
        %v892 = vor.u32 %v890, %v891
        %v893 = vld [vmem:[#allocation8 + $0x3] ss:$0 sm:$0xff]
        %v894 = vld [vmem:[#allocation8 + $0x4] ss:$0 sm:$0xff]
        %v895 = vld [vmem:[#allocation8 + $0x5] ss:$0 sm:$0xff]
        %v896 = vpack.c.bf16 %v827, %v827
        %v897 = vpack.c.bf16 %v828, %v828
        %v898 = vpack.c.bf16 %v829, %v829
        %v899 = vpack.c.bf16 %v830, %v830
        %v900 = vpack.c.bf16 %v831, %v831
        %v901 = vpack.c.bf16 %v832, %v832
        %v902 = vpack.c.bf16 %v834, %v834
        %v903 = vpack.c.bf16 %v835, %v835
        %v904 = vpack.c.bf16 %v836, %v836
        %v905 = vpack.c.bf16 %v837, %v837
        %v906 = vpack.c.bf16 %v838, %v838
        %v907 = vpack.c.bf16 %v839, %v839
        %v908 = vpack.c.bf16 %v841, %v841
        %v909 = vpack.c.bf16 %v842, %v842
        %v910 = vpack.c.bf16 %v843, %v843
        %v911 = vpack.c.bf16 %v844, %v844
        %v912 = vpack.c.bf16 %v845, %v845
        %v913 = vpack.c.bf16 %v846, %v846
        %v914 = vpack.c.bf16 %v848, %v848
        %v915 = vpack.c.bf16 %v849, %v849
        %v916 = vpack.c.bf16 %v850, %v850
        %v917 = vpack.c.bf16 %v851, %v851
        %v918 = vpack.c.bf16 %v852, %v852
        %v919 = vpack.c.bf16 %v853, %v853
        %v920 = vpack.c.bf16 %v855, %v855
        %v921 = vpack.c.bf16 %v856, %v856
        %v922 = vpack.c.bf16 %v857, %v857
        %v923 = vpack.c.bf16 %v858, %v858
        %v924 = vpack.c.bf16 %v859, %v859
        %v925 = vpack.c.bf16 %v860, %v860
        %v926 = vpack.c.bf16 %v862, %v862
        %v927 = vpack.c.bf16 %v863, %v863
        %v928 = vpack.c.bf16 %v864, %v864
        %v929 = vpack.c.bf16 %v865, %v865
        %v930 = vpack.c.bf16 %v866, %v866
        %v931 = vpack.c.bf16 %v867, %v867
        %v932 = vpack.c.bf16 %v869, %v869
        %v933 = vpack.c.bf16 %v870, %v870
        %v934 = vpack.c.bf16 %v871, %v871
        %v935 = vpack.c.bf16 %v872, %v872
        %v936 = vpack.c.bf16 %v873, %v873
        %v937 = vpack.c.bf16 %v874, %v874
        %v938 = vpack.c.bf16 %v876, %v876
        %v939 = vpack.c.bf16 %v877, %v877
        %v940 = vpack.c.bf16 %v878, %v878
        %v941 = vpack.c.bf16 %v879, %v879
        %v942 = vpack.c.bf16 %v880, %v880
        %v943 = vpack.c.bf16 %v881, %v881
        %v944 = vld [vmem:[#allocation5] sm:$0xff]
        %v945 = vld [vmem:[#allocation5 + $0x8] sm:$0xff]
        %v946 = vld [vmem:[#allocation5 + $0x10] sm:$0xff]
        %v947 = vld [vmem:[#allocation5 + $0x18] sm:$0xff]
        %v948 = vld [vmem:[#allocation5 + $0x20] sm:$0xff]
        %v949 = vld [vmem:[#allocation5 + $0x28] sm:$0xff]
        %v950 = vld [vmem:[#allocation5 + $0x30] sm:$0xff]
        %v951 = vld [vmem:[#allocation5 + $0x38] sm:$0xff]
        %v952 = vld [vmem:[#allocation5 + $0x40] sm:$0xff]
        %v953 = vld [vmem:[#allocation5 + $0x48] sm:$0xff]
        %v954 = vld [vmem:[#allocation5 + $0x50] sm:$0xff]
        %v955 = vld [vmem:[#allocation5 + $0x58] sm:$0xff]
        %v956 = vld [vmem:[#allocation5 + $0x60] sm:$0xff]
        %v957 = vld [vmem:[#allocation5 + $0x68] sm:$0xff]
        %v958 = vld [vmem:[#allocation5 + $0x70] sm:$0xff]
        %v959 = vld [vmem:[#allocation5 + $0x78] sm:$0xff]
        %v960 = vld [vmem:[#allocation5 + $0x80] sm:$0xff]
        %v961 = vld [vmem:[#allocation5 + $0x88] sm:$0xff]
        %v962 = vld [vmem:[#allocation5 + $0x90] sm:$0xff]
        %v963 = vld [vmem:[#allocation5 + $0x98] sm:$0xff]
        %v964 = vld [vmem:[#allocation5 + $0xa0] sm:$0xff]
        %v965 = vld [vmem:[#allocation5 + $0xa8] sm:$0xff]
        %v966 = vld [vmem:[#allocation5 + $0xb0] sm:$0xff]
        %v967 = vld [vmem:[#allocation5 + $0xb8] sm:$0xff]
        %v968 = vld [vmem:[#allocation5 + $0xc0] sm:$0xff]
        %v969 = vld [vmem:[#allocation5 + $0xc8] sm:$0xff]
        %v970 = vld [vmem:[#allocation5 + $0xd0] sm:$0xff]
        %v971 = vld [vmem:[#allocation5 + $0xd8] sm:$0xff]
        %v972 = vld [vmem:[#allocation5 + $0xe0] sm:$0xff]
        %v973 = vld [vmem:[#allocation5 + $0xe8] sm:$0xff]
        %v974 = vld [vmem:[#allocation5 + $0xf0] sm:$0xff]
        %v975 = vld [vmem:[#allocation5 + $0xf8] sm:$0xff]
        %v976 = vld [vmem:[#allocation5 + $0x100] sm:$0xff]
        %v977 = vld [vmem:[#allocation5 + $0x108] sm:$0xff]
        %v978 = vld [vmem:[#allocation5 + $0x110] sm:$0xff]
        %v979 = vld [vmem:[#allocation5 + $0x118] sm:$0xff]
        %v980 = vld [vmem:[#allocation5 + $0x120] sm:$0xff]
        %v981 = vld [vmem:[#allocation5 + $0x128] sm:$0xff]
        %v982 = vld [vmem:[#allocation5 + $0x130] sm:$0xff]
        %v983 = vld [vmem:[#allocation5 + $0x138] sm:$0xff]
        %v984 = vld [vmem:[#allocation5 + $0x140] sm:$0xff]
        %v985 = vld [vmem:[#allocation5 + $0x148] sm:$0xff]
        %v986 = vld [vmem:[#allocation5 + $0x150] sm:$0xff]
        %v987 = vld [vmem:[#allocation5 + $0x158] sm:$0xff]
        %v988 = vld [vmem:[#allocation5 + $0x160] sm:$0xff]
        %v989 = vld [vmem:[#allocation5 + $0x168] sm:$0xff]
        %v990 = vld [vmem:[#allocation5 + $0x170] sm:$0xff]
        %v991 = vld [vmem:[#allocation5 + $0x178] sm:$0xff]
        %v992 = vld [vmem:[#allocation5 + $0x180] sm:$0xff]
        %v993 = vld [vmem:[#allocation5 + $0x188] sm:$0xff]
        %v994 = vld [vmem:[#allocation5 + $0x190] sm:$0xff]
        %v995 = vld [vmem:[#allocation5 + $0x198] sm:$0xff]
        %v996 = vld [vmem:[#allocation5 + $0x1a0] sm:$0xff]
        %v997 = vld [vmem:[#allocation5 + $0x1a8] sm:$0xff]
        %v998 = vld [vmem:[#allocation5 + $0x1b0] sm:$0xff]
        %v999 = vld [vmem:[#allocation5 + $0x1b8] sm:$0xff]
        %v1000 = vld [vmem:[#allocation5 + $0x1c0] sm:$0xff]
        %v1001 = vld [vmem:[#allocation5 + $0x1c8] sm:$0xff]
        %v1002 = vld [vmem:[#allocation5 + $0x1d0] sm:$0xff]
        %v1003 = vld [vmem:[#allocation5 + $0x1d8] sm:$0xff]
        %v1004 = vld [vmem:[#allocation5 + $0x1e0] sm:$0xff]
        %v1005 = vld [vmem:[#allocation5 + $0x1e8] sm:$0xff]
        %v1006 = vld [vmem:[#allocation5 + $0x1f0] sm:$0xff]
        %v1007 = vld [vmem:[#allocation5 + $0x1f8] sm:$0xff]
        %v1008 = vld [vmem:[#allocation5 + $0x200] sm:$0xff]
        %v1009 = vld [vmem:[#allocation5 + $0x208] sm:$0xff]
        %v1010 = vld [vmem:[#allocation5 + $0x210] sm:$0xff]
        %v1011 = vld [vmem:[#allocation5 + $0x218] sm:$0xff]
        %v1012 = vld [vmem:[#allocation5 + $0x220] sm:$0xff]
        %v1013 = vld [vmem:[#allocation5 + $0x228] sm:$0xff]
        %v1014 = vld [vmem:[#allocation5 + $0x230] sm:$0xff]
        %v1015 = vld [vmem:[#allocation5 + $0x238] sm:$0xff]
        %v1016 = vld [vmem:[#allocation5 + $0x240] sm:$0xff]
        %v1017 = vld [vmem:[#allocation5 + $0x248] sm:$0xff]
        %v1018 = vld [vmem:[#allocation5 + $0x250] sm:$0xff]
        %v1019 = vld [vmem:[#allocation5 + $0x258] sm:$0xff]
        %v1020 = vld [vmem:[#allocation5 + $0x260] sm:$0xff]
        %v1021 = vld [vmem:[#allocation5 + $0x268] sm:$0xff]
        %v1022 = vld [vmem:[#allocation5 + $0x270] sm:$0xff]
        %v1023 = vld [vmem:[#allocation5 + $0x278] sm:$0xff]
        %v1024 = vld [vmem:[#allocation5 + $0x280] sm:$0xff]
        %v1025 = vld [vmem:[#allocation5 + $0x288] sm:$0xff]
        %v1026 = vld [vmem:[#allocation5 + $0x290] sm:$0xff]
        %v1027 = vld [vmem:[#allocation5 + $0x298] sm:$0xff]
        %v1028 = vld [vmem:[#allocation5 + $0x2a0] sm:$0xff]
        %v1029 = vld [vmem:[#allocation5 + $0x2a8] sm:$0xff]
        %v1030 = vld [vmem:[#allocation5 + $0x2b0] sm:$0xff]
        %v1031 = vld [vmem:[#allocation5 + $0x2b8] sm:$0xff]
        %v1032 = vld [vmem:[#allocation5 + $0x2c0] sm:$0xff]
        %v1033 = vld [vmem:[#allocation5 + $0x2c8] sm:$0xff]
        %v1034 = vld [vmem:[#allocation5 + $0x2d0] sm:$0xff]
        %v1035 = vld [vmem:[#allocation5 + $0x2d8] sm:$0xff]
        %v1036 = vld [vmem:[#allocation5 + $0x2e0] sm:$0xff]
        %v1037 = vld [vmem:[#allocation5 + $0x2e8] sm:$0xff]
        %v1038 = vld [vmem:[#allocation5 + $0x2f0] sm:$0xff]
        %v1039 = vld [vmem:[#allocation5 + $0x2f8] sm:$0xff]
        %v1040 = vld [vmem:[#allocation5 + $0x300] sm:$0xff]
        %v1041 = vld [vmem:[#allocation5 + $0x308] sm:$0xff]
        %v1042 = vld [vmem:[#allocation5 + $0x310] sm:$0xff]
        %v1043 = vld [vmem:[#allocation5 + $0x318] sm:$0xff]
        %v1044 = vld [vmem:[#allocation5 + $0x320] sm:$0xff]
        %v1045 = vld [vmem:[#allocation5 + $0x328] sm:$0xff]
        %v1046 = vld [vmem:[#allocation5 + $0x330] sm:$0xff]
        %v1047 = vld [vmem:[#allocation5 + $0x338] sm:$0xff]
        %v1048 = vld [vmem:[#allocation5 + $0x340] sm:$0xff]
        %v1049 = vld [vmem:[#allocation5 + $0x348] sm:$0xff]
        %v1050 = vld [vmem:[#allocation5 + $0x350] sm:$0xff]
        %v1051 = vld [vmem:[#allocation5 + $0x358] sm:$0xff]
        %v1052 = vld [vmem:[#allocation5 + $0x360] sm:$0xff]
        %v1053 = vld [vmem:[#allocation5 + $0x368] sm:$0xff]
        %v1054 = vld [vmem:[#allocation5 + $0x370] sm:$0xff]
        %v1055 = vld [vmem:[#allocation5 + $0x378] sm:$0xff]
        %v1056 = vld [vmem:[#allocation5 + $0x380] sm:$0xff]
        %v1057 = vld [vmem:[#allocation5 + $0x388] sm:$0xff]
        %v1058 = vld [vmem:[#allocation5 + $0x390] sm:$0xff]
        %v1059 = vld [vmem:[#allocation5 + $0x398] sm:$0xff]
        %v1060 = vld [vmem:[#allocation5 + $0x3a0] sm:$0xff]
        %v1061 = vld [vmem:[#allocation5 + $0x3a8] sm:$0xff]
        %v1062 = vld [vmem:[#allocation5 + $0x3b0] sm:$0xff]
        %v1063 = vld [vmem:[#allocation5 + $0x3b8] sm:$0xff]
        %v1064 = vld [vmem:[#allocation5 + $0x3c0] sm:$0xff]
        %v1065 = vld [vmem:[#allocation5 + $0x3c8] sm:$0xff]
        %v1066 = vld [vmem:[#allocation5 + $0x3d0] sm:$0xff]
        %v1067 = vld [vmem:[#allocation5 + $0x3d8] sm:$0xff]
        %v1068 = vld [vmem:[#allocation5 + $0x3e0] sm:$0xff]
        %v1069 = vld [vmem:[#allocation5 + $0x3e8] sm:$0xff]
        %v1070 = vld [vmem:[#allocation5 + $0x3f0] sm:$0xff]
        %v1071 = vld [vmem:[#allocation5 + $0x3f8] sm:$0xff]
        %v1072 = vld [vmem:[#allocation5 + $0x400] sm:$0xff]
        %v1073 = vld [vmem:[#allocation5 + $0x408] sm:$0xff]
        %v1074 = vld [vmem:[#allocation5 + $0x410] sm:$0xff]
        %v1075 = vld [vmem:[#allocation5 + $0x418] sm:$0xff]
        %v1076 = vld [vmem:[#allocation5 + $0x420] sm:$0xff]
        %v1077 = vld [vmem:[#allocation5 + $0x428] sm:$0xff]
        %v1078 = vld [vmem:[#allocation5 + $0x430] sm:$0xff]
        %v1079 = vld [vmem:[#allocation5 + $0x438] sm:$0xff]
        %v1080 = vld [vmem:[#allocation5 + $0x440] sm:$0xff]
        %v1081 = vld [vmem:[#allocation5 + $0x448] sm:$0xff]
        %v1082 = vld [vmem:[#allocation5 + $0x450] sm:$0xff]
        %v1083 = vld [vmem:[#allocation5 + $0x458] sm:$0xff]
        %v1084 = vld [vmem:[#allocation5 + $0x460] sm:$0xff]
        %v1085 = vld [vmem:[#allocation5 + $0x468] sm:$0xff]
        %v1086 = vld [vmem:[#allocation5 + $0x470] sm:$0xff]
        %v1087 = vld [vmem:[#allocation5 + $0x478] sm:$0xff]
        %v1088 = vld [vmem:[#allocation5 + $0x480] sm:$0xff]
        %v1089 = vld [vmem:[#allocation5 + $0x488] sm:$0xff]
        %v1090 = vld [vmem:[#allocation5 + $0x490] sm:$0xff]
        %v1091 = vld [vmem:[#allocation5 + $0x498] sm:$0xff]
        %v1092 = vld [vmem:[#allocation5 + $0x4a0] sm:$0xff]
        %v1093 = vld [vmem:[#allocation5 + $0x4a8] sm:$0xff]
        %v1094 = vld [vmem:[#allocation5 + $0x4b0] sm:$0xff]
        %v1095 = vld [vmem:[#allocation5 + $0x4b8] sm:$0xff]
        %v1096 = vld [vmem:[#allocation5 + $0x4c0] sm:$0xff]
        %v1097 = vld [vmem:[#allocation5 + $0x4c8] sm:$0xff]
        %v1098 = vld [vmem:[#allocation5 + $0x4d0] sm:$0xff]
        %v1099 = vld [vmem:[#allocation5 + $0x4d8] sm:$0xff]
        %v1100 = vld [vmem:[#allocation5 + $0x4e0] sm:$0xff]
        %v1101 = vld [vmem:[#allocation5 + $0x4e8] sm:$0xff]
        %v1102 = vld [vmem:[#allocation5 + $0x4f0] sm:$0xff]
        %v1103 = vld [vmem:[#allocation5 + $0x4f8] sm:$0xff]
        %v1104 = vld [vmem:[#allocation5 + $0x500] sm:$0xff]
        %v1105 = vld [vmem:[#allocation5 + $0x508] sm:$0xff]
        %v1106 = vld [vmem:[#allocation5 + $0x510] sm:$0xff]
        %v1107 = vld [vmem:[#allocation5 + $0x518] sm:$0xff]
        %v1108 = vld [vmem:[#allocation5 + $0x520] sm:$0xff]
        %v1109 = vld [vmem:[#allocation5 + $0x528] sm:$0xff]
        %v1110 = vld [vmem:[#allocation5 + $0x530] sm:$0xff]
        %v1111 = vld [vmem:[#allocation5 + $0x538] sm:$0xff]
        %v1112 = vld [vmem:[#allocation5 + $0x540] sm:$0xff]
        %v1113 = vld [vmem:[#allocation5 + $0x548] sm:$0xff]
        %v1114 = vld [vmem:[#allocation5 + $0x550] sm:$0xff]
        %v1115 = vld [vmem:[#allocation5 + $0x558] sm:$0xff]
        %v1116 = vld [vmem:[#allocation5 + $0x560] sm:$0xff]
        %v1117 = vld [vmem:[#allocation5 + $0x568] sm:$0xff]
        %v1118 = vld [vmem:[#allocation5 + $0x570] sm:$0xff]
        %v1119 = vld [vmem:[#allocation5 + $0x578] sm:$0xff]
        %v1120 = vld [vmem:[#allocation5 + $0x580] sm:$0xff]
        %v1121 = vld [vmem:[#allocation5 + $0x588] sm:$0xff]
        %v1122 = vld [vmem:[#allocation5 + $0x590] sm:$0xff]
        %v1123 = vld [vmem:[#allocation5 + $0x598] sm:$0xff]
        %v1124 = vld [vmem:[#allocation5 + $0x5a0] sm:$0xff]
        %v1125 = vld [vmem:[#allocation5 + $0x5a8] sm:$0xff]
        %v1126 = vld [vmem:[#allocation5 + $0x5b0] sm:$0xff]
        %v1127 = vld [vmem:[#allocation5 + $0x5b8] sm:$0xff]
        %v1128 = vld [vmem:[#allocation5 + $0x5c0] sm:$0xff]
        %v1129 = vld [vmem:[#allocation5 + $0x5c8] sm:$0xff]
        %v1130 = vld [vmem:[#allocation5 + $0x5d0] sm:$0xff]
        %v1131 = vld [vmem:[#allocation5 + $0x5d8] sm:$0xff]
        %v1132 = vld [vmem:[#allocation5 + $0x5e0] sm:$0xff]
        %v1133 = vld [vmem:[#allocation5 + $0x5e8] sm:$0xff]
        %v1134 = vld [vmem:[#allocation5 + $0x5f0] sm:$0xff]
        %v1135 = vld [vmem:[#allocation5 + $0x5f8] sm:$0xff]
        %v1136 = vld [vmem:[#allocation5 + $0x600] sm:$0xff]
        %v1137 = vld [vmem:[#allocation5 + $0x608] sm:$0xff]
        %v1138 = vld [vmem:[#allocation5 + $0x610] sm:$0xff]
        %v1139 = vld [vmem:[#allocation5 + $0x618] sm:$0xff]
        %v1140 = vld [vmem:[#allocation5 + $0x620] sm:$0xff]
        %v1141 = vld [vmem:[#allocation5 + $0x628] sm:$0xff]
        %v1142 = vld [vmem:[#allocation5 + $0x630] sm:$0xff]
        %v1143 = vld [vmem:[#allocation5 + $0x638] sm:$0xff]
        %v1144 = vld [vmem:[#allocation5 + $0x640] sm:$0xff]
        %v1145 = vld [vmem:[#allocation5 + $0x648] sm:$0xff]
        %v1146 = vld [vmem:[#allocation5 + $0x650] sm:$0xff]
        %v1147 = vld [vmem:[#allocation5 + $0x658] sm:$0xff]
        %v1148 = vld [vmem:[#allocation5 + $0x660] sm:$0xff]
        %v1149 = vld [vmem:[#allocation5 + $0x668] sm:$0xff]
        %v1150 = vld [vmem:[#allocation5 + $0x670] sm:$0xff]
        %v1151 = vld [vmem:[#allocation5 + $0x678] sm:$0xff]
        %v1152 = vld [vmem:[#allocation5 + $0x680] sm:$0xff]
        %v1153 = vld [vmem:[#allocation5 + $0x688] sm:$0xff]
        %v1154 = vld [vmem:[#allocation5 + $0x690] sm:$0xff]
        %v1155 = vld [vmem:[#allocation5 + $0x698] sm:$0xff]
        %v1156 = vld [vmem:[#allocation5 + $0x6a0] sm:$0xff]
        %v1157 = vld [vmem:[#allocation5 + $0x6a8] sm:$0xff]
        %v1158 = vld [vmem:[#allocation5 + $0x6b0] sm:$0xff]
        %v1159 = vld [vmem:[#allocation5 + $0x6b8] sm:$0xff]
        %v1160 = vld [vmem:[#allocation5 + $0x6c0] sm:$0xff]
        %v1161 = vld [vmem:[#allocation5 + $0x6c8] sm:$0xff]
        %v1162 = vld [vmem:[#allocation5 + $0x6d0] sm:$0xff]
        %v1163 = vld [vmem:[#allocation5 + $0x6d8] sm:$0xff]
        %v1164 = vld [vmem:[#allocation5 + $0x6e0] sm:$0xff]
        %v1165 = vld [vmem:[#allocation5 + $0x6e8] sm:$0xff]
        %v1166 = vld [vmem:[#allocation5 + $0x6f0] sm:$0xff]
        %v1167 = vld [vmem:[#allocation5 + $0x6f8] sm:$0xff]
        %v1168 = vld [vmem:[#allocation5 + $0x700] sm:$0xff]
        %v1169 = vld [vmem:[#allocation5 + $0x708] sm:$0xff]
        %v1170 = vld [vmem:[#allocation5 + $0x710] sm:$0xff]
        %v1171 = vld [vmem:[#allocation5 + $0x718] sm:$0xff]
        %v1172 = vld [vmem:[#allocation5 + $0x720] sm:$0xff]
        %v1173 = vld [vmem:[#allocation5 + $0x728] sm:$0xff]
        %v1174 = vld [vmem:[#allocation5 + $0x730] sm:$0xff]
        %v1175 = vld [vmem:[#allocation5 + $0x738] sm:$0xff]
        %v1176 = vld [vmem:[#allocation5 + $0x740] sm:$0xff]
        %v1177 = vld [vmem:[#allocation5 + $0x748] sm:$0xff]
        %v1178 = vld [vmem:[#allocation5 + $0x750] sm:$0xff]
        %v1179 = vld [vmem:[#allocation5 + $0x758] sm:$0xff]
        %v1180 = vld [vmem:[#allocation5 + $0x760] sm:$0xff]
        %v1181 = vld [vmem:[#allocation5 + $0x768] sm:$0xff]
        %v1182 = vld [vmem:[#allocation5 + $0x770] sm:$0xff]
        %v1183 = vld [vmem:[#allocation5 + $0x778] sm:$0xff]
        %v1184 = vld [vmem:[#allocation5 + $0x780] sm:$0xff]
        %v1185 = vld [vmem:[#allocation5 + $0x788] sm:$0xff]
        %v1186 = vld [vmem:[#allocation5 + $0x790] sm:$0xff]
        %v1187 = vld [vmem:[#allocation5 + $0x798] sm:$0xff]
        %v1188 = vld [vmem:[#allocation5 + $0x7a0] sm:$0xff]
        %v1189 = vld [vmem:[#allocation5 + $0x7a8] sm:$0xff]
        %v1190 = vld [vmem:[#allocation5 + $0x7b0] sm:$0xff]
        %v1191 = vld [vmem:[#allocation5 + $0x7b8] sm:$0xff]
        %v1192 = vld [vmem:[#allocation5 + $0x7c0] sm:$0xff]
        %v1193 = vld [vmem:[#allocation5 + $0x7c8] sm:$0xff]
        %v1194 = vld [vmem:[#allocation5 + $0x7d0] sm:$0xff]
        %v1195 = vld [vmem:[#allocation5 + $0x7d8] sm:$0xff]
        %v1196 = vld [vmem:[#allocation5 + $0x7e0] sm:$0xff]
        %v1197 = vld [vmem:[#allocation5 + $0x7e8] sm:$0xff]
        %v1198 = vld [vmem:[#allocation5 + $0x7f0] sm:$0xff]
        %v1199 = vld [vmem:[#allocation5 + $0x7f8] sm:$0xff]
        %v1200 = vld [vmem:[#allocation5 + $0x800] sm:$0xff]
        %v1201 = vld [vmem:[#allocation5 + $0x808] sm:$0xff]
        %v1202 = vld [vmem:[#allocation5 + $0x810] sm:$0xff]
        %v1203 = vld [vmem:[#allocation5 + $0x818] sm:$0xff]
        %v1204 = vld [vmem:[#allocation5 + $0x820] sm:$0xff]
        %v1205 = vld [vmem:[#allocation5 + $0x828] sm:$0xff]
        %v1206 = vld [vmem:[#allocation5 + $0x830] sm:$0xff]
        %v1207 = vld [vmem:[#allocation5 + $0x838] sm:$0xff]
        %v1208 = vld [vmem:[#allocation5 + $0x840] sm:$0xff]
        %v1209 = vld [vmem:[#allocation5 + $0x848] sm:$0xff]
        %v1210 = vld [vmem:[#allocation5 + $0x850] sm:$0xff]
        %v1211 = vld [vmem:[#allocation5 + $0x858] sm:$0xff]
        %v1212 = vld [vmem:[#allocation5 + $0x860] sm:$0xff]
        %v1213 = vld [vmem:[#allocation5 + $0x868] sm:$0xff]
        %v1214 = vld [vmem:[#allocation5 + $0x870] sm:$0xff]
        %v1215 = vld [vmem:[#allocation5 + $0x878] sm:$0xff]
        %v1216 = vld [vmem:[#allocation5 + $0x880] sm:$0xff]
        %v1217 = vld [vmem:[#allocation5 + $0x888] sm:$0xff]
        %v1218 = vld [vmem:[#allocation5 + $0x890] sm:$0xff]
        %v1219 = vld [vmem:[#allocation5 + $0x898] sm:$0xff]
        %v1220 = vld [vmem:[#allocation5 + $0x8a0] sm:$0xff]
        %v1221 = vld [vmem:[#allocation5 + $0x8a8] sm:$0xff]
        %v1222 = vld [vmem:[#allocation5 + $0x8b0] sm:$0xff]
        %v1223 = vld [vmem:[#allocation5 + $0x8b8] sm:$0xff]
        %v1224 = vld [vmem:[#allocation5 + $0x8c0] sm:$0xff]
        %v1225 = vld [vmem:[#allocation5 + $0x8c8] sm:$0xff]
        %v1226 = vld [vmem:[#allocation5 + $0x8d0] sm:$0xff]
        %v1227 = vld [vmem:[#allocation5 + $0x8d8] sm:$0xff]
        %v1228 = vld [vmem:[#allocation5 + $0x8e0] sm:$0xff]
        %v1229 = vld [vmem:[#allocation5 + $0x8e8] sm:$0xff]
        %v1230 = vld [vmem:[#allocation5 + $0x8f0] sm:$0xff]
        %v1231 = vld [vmem:[#allocation5 + $0x8f8] sm:$0xff]
        %v1233 = vlaneseq
        %v1234 = vshrl.u32 %v1233, 7
        %v1235 = vsub.s32 0, %v1234
        %v1236 = vrot.slane %v884, %v1235
        %v1237 = vlaneseq
        %v1238 = vshrl.u32 %v1237, 7
        %v1239 = vsub.s32 1, %v1238
        %v1240 = vrot.slane %v884, %v1239
        %v1241 = vlaneseq
        %v1242 = vshrl.u32 %v1241, 7
        %v1243 = vsub.s32 2, %v1242
        %v1244 = vrot.slane %v884, %v1243
        %v1245 = vlaneseq
        %v1246 = vshrl.u32 %v1245, 7
        %v1247 = vsub.s32 3, %v1246
        %v1248 = vrot.slane %v884, %v1247
        %v1249 = vlaneseq
        %v1250 = vshrl.u32 %v1249, 7
        %v1251 = vsub.s32 4, %v1250
        %v1252 = vrot.slane %v884, %v1251
        %v1253 = vlaneseq
        %v1254 = vshrl.u32 %v1253, 7
        %v1255 = vsub.s32 5, %v1254
        %v1256 = vrot.slane %v884, %v1255
        %v1311 = vunpack.c.l.b16 %v896
        %v1312 = vunpack.c.l.b16 %v897
        %v1313 = vunpack.c.l.b16 %v898
        %v1314 = vunpack.c.l.b16 %v899
        %v1315 = vunpack.c.l.b16 %v900
        %v1316 = vunpack.c.l.b16 %v901
        %v1317 = vunpack.c.l.b16 %v902
        %v1318 = vunpack.c.l.b16 %v903
        %v1319 = vunpack.c.l.b16 %v904
        %v1320 = vunpack.c.l.b16 %v905
        %v1321 = vunpack.c.l.b16 %v906
        %v1322 = vunpack.c.l.b16 %v907
        %v1323 = vunpack.c.l.b16 %v908
        %v1324 = vunpack.c.l.b16 %v909
        %v1325 = vunpack.c.l.b16 %v910
        %v1326 = vunpack.c.l.b16 %v911
        %v1327 = vunpack.c.l.b16 %v912
        %v1328 = vunpack.c.l.b16 %v913
        %v1329 = vunpack.c.l.b16 %v914
        %v1330 = vunpack.c.l.b16 %v915
        %v1331 = vunpack.c.l.b16 %v916
        %v1332 = vunpack.c.l.b16 %v917
        %v1333 = vunpack.c.l.b16 %v918
        %v1334 = vunpack.c.l.b16 %v919
        %v1335 = vunpack.c.l.b16 %v920
        %v1336 = vunpack.c.l.b16 %v921
        %v1337 = vunpack.c.l.b16 %v922
        %v1338 = vunpack.c.l.b16 %v923
        %v1339 = vunpack.c.l.b16 %v924
        %v1340 = vunpack.c.l.b16 %v925
        %v1341 = vunpack.c.l.b16 %v926
        %v1342 = vunpack.c.l.b16 %v927
        %v1343 = vunpack.c.l.b16 %v928
        %v1344 = vunpack.c.l.b16 %v929
        %v1345 = vunpack.c.l.b16 %v930
        %v1346 = vunpack.c.l.b16 %v931
        %v1347 = vunpack.c.l.b16 %v932
        %v1348 = vunpack.c.l.b16 %v933
        %v1349 = vunpack.c.l.b16 %v934
        %v1350 = vunpack.c.l.b16 %v935
        %v1351 = vunpack.c.l.b16 %v936
        %v1352 = vunpack.c.l.b16 %v937
        %v1353 = vunpack.c.l.b16 %v938
        %v1354 = vunpack.c.l.b16 %v939
        %v1355 = vunpack.c.l.b16 %v940
        %v1356 = vunpack.c.l.b16 %v941
        %v1357 = vunpack.c.l.b16 %v942
        %v1358 = vunpack.c.l.b16 %v943
        %vm1359 = vcmask 1041409
        %v1360 = vsel %vm1359, %v1317, %v1311
        %vm1361 = vcmask 1042434
        %v1362 = vsel %vm1361, %v1323, %v1360
        %vm1363 = vcmask 1043459
        %v1364 = vsel %vm1363, %v1329, %v1362
        %vm1365 = vcmask 1044484
        %v1366 = vsel %vm1365, %v1335, %v1364
        %vm1367 = vcmask 1045509
        %v1368 = vsel %vm1367, %v1341, %v1366
        %vm1369 = vcmask 1046534
        %v1370 = vsel %vm1369, %v1347, %v1368
        %vm1371 = vcmask 1047559
        %v1372 = vsel %vm1371, %v1353, %v1370
        %v1373 = vsel %vm1359, %v1318, %v1312
        %v1374 = vsel %vm1361, %v1324, %v1373
        %v1375 = vsel %vm1363, %v1330, %v1374
        %v1376 = vsel %vm1365, %v1336, %v1375
        %v1377 = vsel %vm1367, %v1342, %v1376
        %v1378 = vsel %vm1369, %v1348, %v1377
        %v1379 = vsel %vm1371, %v1354, %v1378
        %v1380 = vsel %vm1359, %v1319, %v1313
        %v1381 = vsel %vm1361, %v1325, %v1380
        %v1382 = vsel %vm1363, %v1331, %v1381
        %v1383 = vsel %vm1365, %v1337, %v1382
        %v1384 = vsel %vm1367, %v1343, %v1383
        %v1385 = vsel %vm1369, %v1349, %v1384
        %v1386 = vsel %vm1371, %v1355, %v1385
        %v1387 = vsel %vm1359, %v1320, %v1314
        %v1388 = vsel %vm1361, %v1326, %v1387
        %v1389 = vsel %vm1363, %v1332, %v1388
        %v1390 = vsel %vm1365, %v1338, %v1389
        %v1391 = vsel %vm1367, %v1344, %v1390
        %v1392 = vsel %vm1369, %v1350, %v1391
        %v1393 = vsel %vm1371, %v1356, %v1392
        %v1394 = vsel %vm1359, %v1321, %v1315
        %v1395 = vsel %vm1361, %v1327, %v1394
        %v1396 = vsel %vm1363, %v1333, %v1395
        %v1397 = vsel %vm1365, %v1339, %v1396
        %v1398 = vsel %vm1367, %v1345, %v1397
        %v1399 = vsel %vm1369, %v1351, %v1398
        %v1400 = vsel %vm1371, %v1357, %v1399
        %v1401 = vsel %vm1359, %v1322, %v1316
        %v1402 = vsel %vm1361, %v1328, %v1401
        %v1403 = vsel %vm1363, %v1334, %v1402
        %v1404 = vsel %vm1365, %v1340, %v1403
        %v1405 = vsel %vm1367, %v1346, %v1404
        %v1406 = vsel %vm1369, %v1352, %v1405
        %v1407 = vsel %vm1371, %v1358, %v1406
        %v1408 = vpack.c.b16 %v1372, %v1372
        %v1409 = vpack.c.b16 %v1379, %v1379
        %v1410 = vpack.c.b16 %v1386, %v1386
        %v1411 = vpack.c.b16 %v1393, %v1393
        %v1412 = vpack.c.b16 %v1400, %v1400
        %v1413 = vpack.c.b16 %v1407, %v1407
        %v1708 = vunpack.c.l.b16 %v944
        %v1709 = vunpack.c.h.b16 %v944
        %v1710 = vunpack.c.l.b16 %v945
        %v1711 = vunpack.c.h.b16 %v945
        %v1712 = vunpack.c.l.b16 %v946
        %v1713 = vunpack.c.h.b16 %v946
        %v1714 = vunpack.c.l.b16 %v947
        %v1715 = vunpack.c.h.b16 %v947
        %v1716 = vunpack.c.l.b16 %v948
        %v1717 = vunpack.c.h.b16 %v948
        %v1718 = vunpack.c.l.b16 %v949
        %v1719 = vunpack.c.h.b16 %v949
        %v1720 = vunpack.c.l.b16 %v950
        %v1721 = vunpack.c.h.b16 %v950
        %v1722 = vunpack.c.l.b16 %v951
        %v1723 = vunpack.c.h.b16 %v951
        %v1724 = vunpack.c.l.b16 %v952
        %v1725 = vunpack.c.h.b16 %v952
        %v1726 = vunpack.c.l.b16 %v953
        %v1727 = vunpack.c.h.b16 %v953
        %v1728 = vunpack.c.l.b16 %v954
        %v1729 = vunpack.c.h.b16 %v954
        %v1730 = vunpack.c.l.b16 %v955
        %v1731 = vunpack.c.h.b16 %v955
        %v1732 = vunpack.c.l.b16 %v956
        %v1733 = vunpack.c.h.b16 %v956
        %v1734 = vunpack.c.l.b16 %v957
        %v1735 = vunpack.c.h.b16 %v957
        %v1736 = vunpack.c.l.b16 %v958
        %v1737 = vunpack.c.h.b16 %v958
        %v1738 = vunpack.c.l.b16 %v959
        %v1739 = vunpack.c.h.b16 %v959
        %v1740 = vunpack.c.l.b16 %v960
        %v1741 = vunpack.c.h.b16 %v960
        %v1742 = vunpack.c.l.b16 %v961
        %v1743 = vunpack.c.h.b16 %v961
        %v1744 = vunpack.c.l.b16 %v962
        %v1745 = vunpack.c.h.b16 %v962
        %v1746 = vunpack.c.l.b16 %v963
        %v1747 = vunpack.c.h.b16 %v963
        %v1748 = vunpack.c.l.b16 %v964
        %v1749 = vunpack.c.h.b16 %v964
        %v1750 = vunpack.c.l.b16 %v965
        %v1751 = vunpack.c.h.b16 %v965
        %v1752 = vunpack.c.l.b16 %v966
        %v1753 = vunpack.c.h.b16 %v966
        %v1754 = vunpack.c.l.b16 %v967
        %v1755 = vunpack.c.h.b16 %v967
        %v1756 = vunpack.c.l.b16 %v968
        %v1757 = vunpack.c.h.b16 %v968
        %v1758 = vunpack.c.l.b16 %v969
        %v1759 = vunpack.c.h.b16 %v969
        %v1760 = vunpack.c.l.b16 %v970
        %v1761 = vunpack.c.h.b16 %v970
        %v1762 = vunpack.c.l.b16 %v971
        %v1763 = vunpack.c.h.b16 %v971
        %v1764 = vunpack.c.l.b16 %v972
        %v1765 = vunpack.c.h.b16 %v972
        %v1766 = vunpack.c.l.b16 %v973
        %v1767 = vunpack.c.h.b16 %v973
        %v1768 = vunpack.c.l.b16 %v974
        %v1769 = vunpack.c.h.b16 %v974
        %v1770 = vunpack.c.l.b16 %v975
        %v1771 = vunpack.c.h.b16 %v975
        %v1772 = vunpack.c.l.b16 %v976
        %v1773 = vunpack.c.h.b16 %v976
        %v1774 = vunpack.c.l.b16 %v977
        %v1775 = vunpack.c.h.b16 %v977
        %v1776 = vunpack.c.l.b16 %v978
        %v1777 = vunpack.c.h.b16 %v978
        %v1778 = vunpack.c.l.b16 %v979
        %v1779 = vunpack.c.h.b16 %v979
        %v1780 = vunpack.c.l.b16 %v980
        %v1781 = vunpack.c.h.b16 %v980
        %v1782 = vunpack.c.l.b16 %v981
        %v1783 = vunpack.c.h.b16 %v981
        %v1784 = vunpack.c.l.b16 %v982
        %v1785 = vunpack.c.h.b16 %v982
        %v1786 = vunpack.c.l.b16 %v983
        %v1787 = vunpack.c.h.b16 %v983
        %v1788 = vunpack.c.l.b16 %v984
        %v1789 = vunpack.c.h.b16 %v984
        %v1790 = vunpack.c.l.b16 %v985
        %v1791 = vunpack.c.h.b16 %v985
        %v1792 = vunpack.c.l.b16 %v986
        %v1793 = vunpack.c.h.b16 %v986
        %v1794 = vunpack.c.l.b16 %v987
        %v1795 = vunpack.c.h.b16 %v987
        %v1796 = vunpack.c.l.b16 %v988
        %v1797 = vunpack.c.h.b16 %v988
        %v1798 = vunpack.c.l.b16 %v989
        %v1799 = vunpack.c.h.b16 %v989
        %v1800 = vunpack.c.l.b16 %v990
        %v1801 = vunpack.c.h.b16 %v990
        %v1802 = vunpack.c.l.b16 %v991
        %v1803 = vunpack.c.h.b16 %v991
        %v1804 = vunpack.c.l.b16 %v992
        %v1805 = vunpack.c.h.b16 %v992
        %v1806 = vunpack.c.l.b16 %v993
        %v1807 = vunpack.c.h.b16 %v993
        %v1808 = vunpack.c.l.b16 %v994
        %v1809 = vunpack.c.h.b16 %v994
        %v1810 = vunpack.c.l.b16 %v995
        %v1811 = vunpack.c.h.b16 %v995
        %v1812 = vunpack.c.l.b16 %v996
        %v1813 = vunpack.c.h.b16 %v996
        %v1814 = vunpack.c.l.b16 %v997
        %v1815 = vunpack.c.h.b16 %v997
        %v1816 = vunpack.c.l.b16 %v998
        %v1817 = vunpack.c.h.b16 %v998
        %v1818 = vunpack.c.l.b16 %v999
        %v1819 = vunpack.c.h.b16 %v999
        %v1820 = vunpack.c.l.b16 %v1000
        %v1821 = vunpack.c.h.b16 %v1000
        %v1822 = vunpack.c.l.b16 %v1001
        %v1823 = vunpack.c.h.b16 %v1001
        %v1824 = vunpack.c.l.b16 %v1002
        %v1825 = vunpack.c.h.b16 %v1002
        %v1826 = vunpack.c.l.b16 %v1003
        %v1827 = vunpack.c.h.b16 %v1003
        %v1828 = vunpack.c.l.b16 %v1004
        %v1829 = vunpack.c.h.b16 %v1004
        %v1830 = vunpack.c.l.b16 %v1005
        %v1831 = vunpack.c.h.b16 %v1005
        %v1832 = vunpack.c.l.b16 %v1006
        %v1833 = vunpack.c.h.b16 %v1006
        %v1834 = vunpack.c.l.b16 %v1007
        %v1835 = vunpack.c.h.b16 %v1007
        %v1836 = vunpack.c.l.b16 %v1008
        %v1837 = vunpack.c.h.b16 %v1008
        %v1838 = vunpack.c.l.b16 %v1009
        %v1839 = vunpack.c.h.b16 %v1009
        %v1840 = vunpack.c.l.b16 %v1010
        %v1841 = vunpack.c.h.b16 %v1010
        %v1842 = vunpack.c.l.b16 %v1011
        %v1843 = vunpack.c.h.b16 %v1011
        %v1844 = vunpack.c.l.b16 %v1012
        %v1845 = vunpack.c.h.b16 %v1012
        %v1846 = vunpack.c.l.b16 %v1013
        %v1847 = vunpack.c.h.b16 %v1013
        %v1848 = vunpack.c.l.b16 %v1014
        %v1849 = vunpack.c.h.b16 %v1014
        %v1850 = vunpack.c.l.b16 %v1015
        %v1851 = vunpack.c.h.b16 %v1015
        %v1852 = vunpack.c.l.b16 %v1016
        %v1853 = vunpack.c.h.b16 %v1016
        %v1854 = vunpack.c.l.b16 %v1017
        %v1855 = vunpack.c.h.b16 %v1017
        %v1856 = vunpack.c.l.b16 %v1018
        %v1857 = vunpack.c.h.b16 %v1018
        %v1858 = vunpack.c.l.b16 %v1019
        %v1859 = vunpack.c.h.b16 %v1019
        %v1860 = vunpack.c.l.b16 %v1020
        %v1861 = vunpack.c.h.b16 %v1020
        %v1862 = vunpack.c.l.b16 %v1021
        %v1863 = vunpack.c.h.b16 %v1021
        %v1864 = vunpack.c.l.b16 %v1022
        %v1865 = vunpack.c.h.b16 %v1022
        %v1866 = vunpack.c.l.b16 %v1023
        %v1867 = vunpack.c.h.b16 %v1023
        %v1868 = vunpack.c.l.b16 %v1024
        %v1869 = vunpack.c.h.b16 %v1024
        %v1870 = vunpack.c.l.b16 %v1025
        %v1871 = vunpack.c.h.b16 %v1025
        %v1872 = vunpack.c.l.b16 %v1026
        %v1873 = vunpack.c.h.b16 %v1026
        %v1874 = vunpack.c.l.b16 %v1027
        %v1875 = vunpack.c.h.b16 %v1027
        %v1876 = vunpack.c.l.b16 %v1028
        %v1877 = vunpack.c.h.b16 %v1028
        %v1878 = vunpack.c.l.b16 %v1029
        %v1879 = vunpack.c.h.b16 %v1029
        %v1880 = vunpack.c.l.b16 %v1030
        %v1881 = vunpack.c.h.b16 %v1030
        %v1882 = vunpack.c.l.b16 %v1031
        %v1883 = vunpack.c.h.b16 %v1031
        %v1884 = vunpack.c.l.b16 %v1032
        %v1885 = vunpack.c.h.b16 %v1032
        %v1886 = vunpack.c.l.b16 %v1033
        %v1887 = vunpack.c.h.b16 %v1033
        %v1888 = vunpack.c.l.b16 %v1034
        %v1889 = vunpack.c.h.b16 %v1034
        %v1890 = vunpack.c.l.b16 %v1035
        %v1891 = vunpack.c.h.b16 %v1035
        %v1892 = vunpack.c.l.b16 %v1036
        %v1893 = vunpack.c.h.b16 %v1036
        %v1894 = vunpack.c.l.b16 %v1037
        %v1895 = vunpack.c.h.b16 %v1037
        %v1896 = vunpack.c.l.b16 %v1038
        %v1897 = vunpack.c.h.b16 %v1038
        %v1898 = vunpack.c.l.b16 %v1039
        %v1899 = vunpack.c.h.b16 %v1039
        %v1900 = vunpack.c.l.b16 %v1040
        %v1901 = vunpack.c.h.b16 %v1040
        %v1902 = vunpack.c.l.b16 %v1041
        %v1903 = vunpack.c.h.b16 %v1041
        %v1904 = vunpack.c.l.b16 %v1042
        %v1905 = vunpack.c.h.b16 %v1042
        %v1906 = vunpack.c.l.b16 %v1043
        %v1907 = vunpack.c.h.b16 %v1043
        %v1908 = vunpack.c.l.b16 %v1044
        %v1909 = vunpack.c.h.b16 %v1044
        %v1910 = vunpack.c.l.b16 %v1045
        %v1911 = vunpack.c.h.b16 %v1045
        %v1912 = vunpack.c.l.b16 %v1046
        %v1913 = vunpack.c.h.b16 %v1046
        %v1914 = vunpack.c.l.b16 %v1047
        %v1915 = vunpack.c.h.b16 %v1047
        %v1916 = vunpack.c.l.b16 %v1048
        %v1917 = vunpack.c.h.b16 %v1048
        %v1918 = vunpack.c.l.b16 %v1049
        %v1919 = vunpack.c.h.b16 %v1049
        %v1920 = vunpack.c.l.b16 %v1050
        %v1921 = vunpack.c.h.b16 %v1050
        %v1922 = vunpack.c.l.b16 %v1051
        %v1923 = vunpack.c.h.b16 %v1051
        %v1924 = vunpack.c.l.b16 %v1052
        %v1925 = vunpack.c.h.b16 %v1052
        %v1926 = vunpack.c.l.b16 %v1053
        %v1927 = vunpack.c.h.b16 %v1053
        %v1928 = vunpack.c.l.b16 %v1054
        %v1929 = vunpack.c.h.b16 %v1054
        %v1930 = vunpack.c.l.b16 %v1055
        %v1931 = vunpack.c.h.b16 %v1055
        %v1932 = vunpack.c.l.b16 %v1056
        %v1933 = vunpack.c.h.b16 %v1056
        %v1934 = vunpack.c.l.b16 %v1057
        %v1935 = vunpack.c.h.b16 %v1057
        %v1936 = vunpack.c.l.b16 %v1058
        %v1937 = vunpack.c.h.b16 %v1058
        %v1938 = vunpack.c.l.b16 %v1059
        %v1939 = vunpack.c.h.b16 %v1059
        %v1940 = vunpack.c.l.b16 %v1060
        %v1941 = vunpack.c.h.b16 %v1060
        %v1942 = vunpack.c.l.b16 %v1061
        %v1943 = vunpack.c.h.b16 %v1061
        %v1944 = vunpack.c.l.b16 %v1062
        %v1945 = vunpack.c.h.b16 %v1062
        %v1946 = vunpack.c.l.b16 %v1063
        %v1947 = vunpack.c.h.b16 %v1063
        %v1948 = vunpack.c.l.b16 %v1064
        %v1949 = vunpack.c.h.b16 %v1064
        %v1950 = vunpack.c.l.b16 %v1065
        %v1951 = vunpack.c.h.b16 %v1065
        %v1952 = vunpack.c.l.b16 %v1066
        %v1953 = vunpack.c.h.b16 %v1066
        %v1954 = vunpack.c.l.b16 %v1067
        %v1955 = vunpack.c.h.b16 %v1067
        %v1956 = vunpack.c.l.b16 %v1068
        %v1957 = vunpack.c.h.b16 %v1068
        %v1958 = vunpack.c.l.b16 %v1069
        %v1959 = vunpack.c.h.b16 %v1069
        %v1960 = vunpack.c.l.b16 %v1070
        %v1961 = vunpack.c.h.b16 %v1070
        %v1962 = vunpack.c.l.b16 %v1071
        %v1963 = vunpack.c.h.b16 %v1071
        %v1964 = vunpack.c.l.b16 %v1072
        %v1965 = vunpack.c.h.b16 %v1072
        %v1966 = vunpack.c.l.b16 %v1073
        %v1967 = vunpack.c.h.b16 %v1073
        %v1968 = vunpack.c.l.b16 %v1074
        %v1969 = vunpack.c.h.b16 %v1074
        %v1970 = vunpack.c.l.b16 %v1075
        %v1971 = vunpack.c.h.b16 %v1075
        %v1972 = vunpack.c.l.b16 %v1076
        %v1973 = vunpack.c.h.b16 %v1076
        %v1974 = vunpack.c.l.b16 %v1077
        %v1975 = vunpack.c.h.b16 %v1077
        %v1976 = vunpack.c.l.b16 %v1078
        %v1977 = vunpack.c.h.b16 %v1078
        %v1978 = vunpack.c.l.b16 %v1079
        %v1979 = vunpack.c.h.b16 %v1079
        %v1980 = vunpack.c.l.b16 %v1080
        %v1981 = vunpack.c.h.b16 %v1080
        %v1982 = vunpack.c.l.b16 %v1081
        %v1983 = vunpack.c.h.b16 %v1081
        %v1984 = vunpack.c.l.b16 %v1082
        %v1985 = vunpack.c.h.b16 %v1082
        %v1986 = vunpack.c.l.b16 %v1083
        %v1987 = vunpack.c.h.b16 %v1083
        %v1988 = vunpack.c.l.b16 %v1084
        %v1989 = vunpack.c.h.b16 %v1084
        %v1990 = vunpack.c.l.b16 %v1085
        %v1991 = vunpack.c.h.b16 %v1085
        %v1992 = vunpack.c.l.b16 %v1086
        %v1993 = vunpack.c.h.b16 %v1086
        %v1994 = vunpack.c.l.b16 %v1087
        %v1995 = vunpack.c.h.b16 %v1087
        %v1996 = vunpack.c.l.b16 %v1088
        %v1997 = vunpack.c.h.b16 %v1088
        %v1998 = vunpack.c.l.b16 %v1089
        %v1999 = vunpack.c.h.b16 %v1089
        %v2000 = vunpack.c.l.b16 %v1090
        %v2001 = vunpack.c.h.b16 %v1090
        %v2002 = vunpack.c.l.b16 %v1091
        %v2003 = vunpack.c.h.b16 %v1091
        %v2004 = vunpack.c.l.b16 %v1092
        %v2005 = vunpack.c.h.b16 %v1092
        %v2006 = vunpack.c.l.b16 %v1093
        %v2007 = vunpack.c.h.b16 %v1093
        %v2008 = vunpack.c.l.b16 %v1094
        %v2009 = vunpack.c.h.b16 %v1094
        %v2010 = vunpack.c.l.b16 %v1095
        %v2011 = vunpack.c.h.b16 %v1095
        %v2012 = vunpack.c.l.b16 %v1096
        %v2013 = vunpack.c.h.b16 %v1096
        %v2014 = vunpack.c.l.b16 %v1097
        %v2015 = vunpack.c.h.b16 %v1097
        %v2016 = vunpack.c.l.b16 %v1098
        %v2017 = vunpack.c.h.b16 %v1098
        %v2018 = vunpack.c.l.b16 %v1099
        %v2019 = vunpack.c.h.b16 %v1099
        %v2020 = vunpack.c.l.b16 %v1100
        %v2021 = vunpack.c.h.b16 %v1100
        %v2022 = vunpack.c.l.b16 %v1101
        %v2023 = vunpack.c.h.b16 %v1101
        %v2024 = vunpack.c.l.b16 %v1102
        %v2025 = vunpack.c.h.b16 %v1102
        %v2026 = vunpack.c.l.b16 %v1103
        %v2027 = vunpack.c.h.b16 %v1103
        %v2028 = vunpack.c.l.b16 %v1104
        %v2029 = vunpack.c.h.b16 %v1104
        %v2030 = vunpack.c.l.b16 %v1105
        %v2031 = vunpack.c.h.b16 %v1105
        %v2032 = vunpack.c.l.b16 %v1106
        %v2033 = vunpack.c.h.b16 %v1106
        %v2034 = vunpack.c.l.b16 %v1107
        %v2035 = vunpack.c.h.b16 %v1107
        %v2036 = vunpack.c.l.b16 %v1108
        %v2037 = vunpack.c.h.b16 %v1108
        %v2038 = vunpack.c.l.b16 %v1109
        %v2039 = vunpack.c.h.b16 %v1109
        %v2040 = vunpack.c.l.b16 %v1110
        %v2041 = vunpack.c.h.b16 %v1110
        %v2042 = vunpack.c.l.b16 %v1111
        %v2043 = vunpack.c.h.b16 %v1111
        %v2044 = vunpack.c.l.b16 %v1112
        %v2045 = vunpack.c.h.b16 %v1112
        %v2046 = vunpack.c.l.b16 %v1113
        %v2047 = vunpack.c.h.b16 %v1113
        %v2048 = vunpack.c.l.b16 %v1114
        %v2049 = vunpack.c.h.b16 %v1114
        %v2050 = vunpack.c.l.b16 %v1115
        %v2051 = vunpack.c.h.b16 %v1115
        %v2052 = vunpack.c.l.b16 %v1116
        %v2053 = vunpack.c.h.b16 %v1116
        %v2054 = vunpack.c.l.b16 %v1117
        %v2055 = vunpack.c.h.b16 %v1117
        %v2056 = vunpack.c.l.b16 %v1118
        %v2057 = vunpack.c.h.b16 %v1118
        %v2058 = vunpack.c.l.b16 %v1119
        %v2059 = vunpack.c.h.b16 %v1119
        %v2060 = vunpack.c.l.b16 %v1120
        %v2061 = vunpack.c.h.b16 %v1120
        %v2062 = vunpack.c.l.b16 %v1121
        %v2063 = vunpack.c.h.b16 %v1121
        %v2064 = vunpack.c.l.b16 %v1122
        %v2065 = vunpack.c.h.b16 %v1122
        %v2066 = vunpack.c.l.b16 %v1123
        %v2067 = vunpack.c.h.b16 %v1123
        %v2068 = vunpack.c.l.b16 %v1124
        %v2069 = vunpack.c.h.b16 %v1124
        %v2070 = vunpack.c.l.b16 %v1125
        %v2071 = vunpack.c.h.b16 %v1125
        %v2072 = vunpack.c.l.b16 %v1126
        %v2073 = vunpack.c.h.b16 %v1126
        %v2074 = vunpack.c.l.b16 %v1127
        %v2075 = vunpack.c.h.b16 %v1127
        %v2076 = vunpack.c.l.b16 %v1128
        %v2077 = vunpack.c.h.b16 %v1128
        %v2078 = vunpack.c.l.b16 %v1129
        %v2079 = vunpack.c.h.b16 %v1129
        %v2080 = vunpack.c.l.b16 %v1130
        %v2081 = vunpack.c.h.b16 %v1130
        %v2082 = vunpack.c.l.b16 %v1131
        %v2083 = vunpack.c.h.b16 %v1131
        %v2084 = vunpack.c.l.b16 %v1132
        %v2085 = vunpack.c.h.b16 %v1132
        %v2086 = vunpack.c.l.b16 %v1133
        %v2087 = vunpack.c.h.b16 %v1133
        %v2088 = vunpack.c.l.b16 %v1134
        %v2089 = vunpack.c.h.b16 %v1134
        %v2090 = vunpack.c.l.b16 %v1135
        %v2091 = vunpack.c.h.b16 %v1135
        %v2092 = vunpack.c.l.b16 %v1136
        %v2093 = vunpack.c.h.b16 %v1136
        %v2094 = vunpack.c.l.b16 %v1137
        %v2095 = vunpack.c.h.b16 %v1137
        %v2096 = vunpack.c.l.b16 %v1138
        %v2097 = vunpack.c.h.b16 %v1138
        %v2098 = vunpack.c.l.b16 %v1139
        %v2099 = vunpack.c.h.b16 %v1139
        %v2100 = vunpack.c.l.b16 %v1140
        %v2101 = vunpack.c.h.b16 %v1140
        %v2102 = vunpack.c.l.b16 %v1141
        %v2103 = vunpack.c.h.b16 %v1141
        %v2104 = vunpack.c.l.b16 %v1142
        %v2105 = vunpack.c.h.b16 %v1142
        %v2106 = vunpack.c.l.b16 %v1143
        %v2107 = vunpack.c.h.b16 %v1143
        %v2108 = vunpack.c.l.b16 %v1144
        %v2109 = vunpack.c.h.b16 %v1144
        %v2110 = vunpack.c.l.b16 %v1145
        %v2111 = vunpack.c.h.b16 %v1145
        %v2112 = vunpack.c.l.b16 %v1146
        %v2113 = vunpack.c.h.b16 %v1146
        %v2114 = vunpack.c.l.b16 %v1147
        %v2115 = vunpack.c.h.b16 %v1147
        %v2116 = vunpack.c.l.b16 %v1148
        %v2117 = vunpack.c.h.b16 %v1148
        %v2118 = vunpack.c.l.b16 %v1149
        %v2119 = vunpack.c.h.b16 %v1149
        %v2120 = vunpack.c.l.b16 %v1150
        %v2121 = vunpack.c.h.b16 %v1150
        %v2122 = vunpack.c.l.b16 %v1151
        %v2123 = vunpack.c.h.b16 %v1151
        %v2124 = vunpack.c.l.b16 %v1152
        %v2125 = vunpack.c.h.b16 %v1152
        %v2126 = vunpack.c.l.b16 %v1153
        %v2127 = vunpack.c.h.b16 %v1153
        %v2128 = vunpack.c.l.b16 %v1154
        %v2129 = vunpack.c.h.b16 %v1154
        %v2130 = vunpack.c.l.b16 %v1155
        %v2131 = vunpack.c.h.b16 %v1155
        %v2132 = vunpack.c.l.b16 %v1156
        %v2133 = vunpack.c.h.b16 %v1156
        %v2134 = vunpack.c.l.b16 %v1157
        %v2135 = vunpack.c.h.b16 %v1157
        %v2136 = vunpack.c.l.b16 %v1158
        %v2137 = vunpack.c.h.b16 %v1158
        %v2138 = vunpack.c.l.b16 %v1159
        %v2139 = vunpack.c.h.b16 %v1159
        %v2140 = vunpack.c.l.b16 %v1160
        %v2141 = vunpack.c.h.b16 %v1160
        %v2142 = vunpack.c.l.b16 %v1161
        %v2143 = vunpack.c.h.b16 %v1161
        %v2144 = vunpack.c.l.b16 %v1162
        %v2145 = vunpack.c.h.b16 %v1162
        %v2146 = vunpack.c.l.b16 %v1163
        %v2147 = vunpack.c.h.b16 %v1163
        %v2148 = vunpack.c.l.b16 %v1164
        %v2149 = vunpack.c.h.b16 %v1164
        %v2150 = vunpack.c.l.b16 %v1165
        %v2151 = vunpack.c.h.b16 %v1165
        %v2152 = vunpack.c.l.b16 %v1166
        %v2153 = vunpack.c.h.b16 %v1166
        %v2154 = vunpack.c.l.b16 %v1167
        %v2155 = vunpack.c.h.b16 %v1167
        %v2156 = vunpack.c.l.b16 %v1168
        %v2157 = vunpack.c.h.b16 %v1168
        %v2158 = vunpack.c.l.b16 %v1169
        %v2159 = vunpack.c.h.b16 %v1169
        %v2160 = vunpack.c.l.b16 %v1170
        %v2161 = vunpack.c.h.b16 %v1170
        %v2162 = vunpack.c.l.b16 %v1171
        %v2163 = vunpack.c.h.b16 %v1171
        %v2164 = vunpack.c.l.b16 %v1172
        %v2165 = vunpack.c.h.b16 %v1172
        %v2166 = vunpack.c.l.b16 %v1173
        %v2167 = vunpack.c.h.b16 %v1173
        %v2168 = vunpack.c.l.b16 %v1174
        %v2169 = vunpack.c.h.b16 %v1174
        %v2170 = vunpack.c.l.b16 %v1175
        %v2171 = vunpack.c.h.b16 %v1175
        %v2172 = vunpack.c.l.b16 %v1176
        %v2173 = vunpack.c.h.b16 %v1176
        %v2174 = vunpack.c.l.b16 %v1177
        %v2175 = vunpack.c.h.b16 %v1177
        %v2176 = vunpack.c.l.b16 %v1178
        %v2177 = vunpack.c.h.b16 %v1178
        %v2178 = vunpack.c.l.b16 %v1179
        %v2179 = vunpack.c.h.b16 %v1179
        %v2180 = vunpack.c.l.b16 %v1180
        %v2181 = vunpack.c.h.b16 %v1180
        %v2182 = vunpack.c.l.b16 %v1181
        %v2183 = vunpack.c.h.b16 %v1181
        %v2184 = vunpack.c.l.b16 %v1182
        %v2185 = vunpack.c.h.b16 %v1182
        %v2186 = vunpack.c.l.b16 %v1183
        %v2187 = vunpack.c.h.b16 %v1183
        %v2188 = vunpack.c.l.b16 %v1184
        %v2189 = vunpack.c.h.b16 %v1184
        %v2190 = vunpack.c.l.b16 %v1185
        %v2191 = vunpack.c.h.b16 %v1185
        %v2192 = vunpack.c.l.b16 %v1186
        %v2193 = vunpack.c.h.b16 %v1186
        %v2194 = vunpack.c.l.b16 %v1187
        %v2195 = vunpack.c.h.b16 %v1187
        %v2196 = vunpack.c.l.b16 %v1188
        %v2197 = vunpack.c.h.b16 %v1188
        %v2198 = vunpack.c.l.b16 %v1189
        %v2199 = vunpack.c.h.b16 %v1189
        %v2200 = vunpack.c.l.b16 %v1190
        %v2201 = vunpack.c.h.b16 %v1190
        %v2202 = vunpack.c.l.b16 %v1191
        %v2203 = vunpack.c.h.b16 %v1191
        %v2204 = vunpack.c.l.b16 %v1192
        %v2205 = vunpack.c.h.b16 %v1192
        %v2206 = vunpack.c.l.b16 %v1193
        %v2207 = vunpack.c.h.b16 %v1193
        %v2208 = vunpack.c.l.b16 %v1194
        %v2209 = vunpack.c.h.b16 %v1194
        %v2210 = vunpack.c.l.b16 %v1195
        %v2211 = vunpack.c.h.b16 %v1195
        %v2212 = vunpack.c.l.b16 %v1196
        %v2213 = vunpack.c.h.b16 %v1196
        %v2214 = vunpack.c.l.b16 %v1197
        %v2215 = vunpack.c.h.b16 %v1197
        %v2216 = vunpack.c.l.b16 %v1198
        %v2217 = vunpack.c.h.b16 %v1198
        %v2218 = vunpack.c.l.b16 %v1199
        %v2219 = vunpack.c.h.b16 %v1199
        %v2220 = vunpack.c.l.b16 %v1200
        %v2221 = vunpack.c.h.b16 %v1200
        %v2222 = vunpack.c.l.b16 %v1201
        %v2223 = vunpack.c.h.b16 %v1201
        %v2224 = vunpack.c.l.b16 %v1202
        %v2225 = vunpack.c.h.b16 %v1202
        %v2226 = vunpack.c.l.b16 %v1203
        %v2227 = vunpack.c.h.b16 %v1203
        %v2228 = vunpack.c.l.b16 %v1204
        %v2229 = vunpack.c.h.b16 %v1204
        %v2230 = vunpack.c.l.b16 %v1205
        %v2231 = vunpack.c.h.b16 %v1205
        %v2232 = vunpack.c.l.b16 %v1206
        %v2233 = vunpack.c.h.b16 %v1206
        %v2234 = vunpack.c.l.b16 %v1207
        %v2235 = vunpack.c.h.b16 %v1207
        %v2236 = vunpack.c.l.b16 %v1208
        %v2237 = vunpack.c.h.b16 %v1208
        %v2238 = vunpack.c.l.b16 %v1209
        %v2239 = vunpack.c.h.b16 %v1209
        %v2240 = vunpack.c.l.b16 %v1210
        %v2241 = vunpack.c.h.b16 %v1210
        %v2242 = vunpack.c.l.b16 %v1211
        %v2243 = vunpack.c.h.b16 %v1211
        %v2244 = vunpack.c.l.b16 %v1212
        %v2245 = vunpack.c.h.b16 %v1212
        %v2246 = vunpack.c.l.b16 %v1213
        %v2247 = vunpack.c.h.b16 %v1213
        %v2248 = vunpack.c.l.b16 %v1214
        %v2249 = vunpack.c.h.b16 %v1214
        %v2250 = vunpack.c.l.b16 %v1215
        %v2251 = vunpack.c.h.b16 %v1215
        %v2252 = vunpack.c.l.b16 %v1216
        %v2253 = vunpack.c.h.b16 %v1216
        %v2254 = vunpack.c.l.b16 %v1217
        %v2255 = vunpack.c.h.b16 %v1217
        %v2256 = vunpack.c.l.b16 %v1218
        %v2257 = vunpack.c.h.b16 %v1218
        %v2258 = vunpack.c.l.b16 %v1219
        %v2259 = vunpack.c.h.b16 %v1219
        %v2260 = vunpack.c.l.b16 %v1220
        %v2261 = vunpack.c.h.b16 %v1220
        %v2262 = vunpack.c.l.b16 %v1221
        %v2263 = vunpack.c.h.b16 %v1221
        %v2264 = vunpack.c.l.b16 %v1222
        %v2265 = vunpack.c.h.b16 %v1222
        %v2266 = vunpack.c.l.b16 %v1223
        %v2267 = vunpack.c.h.b16 %v1223
        %v2268 = vunpack.c.l.b16 %v1224
        %v2269 = vunpack.c.h.b16 %v1224
        %v2270 = vunpack.c.l.b16 %v1225
        %v2271 = vunpack.c.h.b16 %v1225
        %v2272 = vunpack.c.l.b16 %v1226
        %v2273 = vunpack.c.h.b16 %v1226
        %v2274 = vunpack.c.l.b16 %v1227
        %v2275 = vunpack.c.h.b16 %v1227
        %v2276 = vunpack.c.l.b16 %v1228
        %v2277 = vunpack.c.h.b16 %v1228
        %v2278 = vunpack.c.l.b16 %v1229
        %v2279 = vunpack.c.h.b16 %v1229
        %v2280 = vunpack.c.l.b16 %v1230
        %v2281 = vunpack.c.h.b16 %v1230
        %v2282 = vunpack.c.l.b16 %v1231
        %v2283 = vunpack.c.h.b16 %v1231
        %v2284 = vpack.c.b16 %v1714, %v1708
        %v2285 = vpack.c.b16 %v1715, %v1709
        %v2286 = vpack.c.b16 %v1716, %v1710
        %v2287 = vpack.c.b16 %v1717, %v1711
        %v2288 = vpack.c.b16 %v1718, %v1712
        %v2289 = vpack.c.b16 %v1719, %v1713
        %v2290 = vpack.c.b16 %v1726, %v1720
        %v2291 = vpack.c.b16 %v1727, %v1721
        %v2292 = vpack.c.b16 %v1728, %v1722
        %v2293 = vpack.c.b16 %v1729, %v1723
        %v2294 = vpack.c.b16 %v1730, %v1724
        %v2295 = vpack.c.b16 %v1731, %v1725
        %v2296 = vpack.c.b16 %v1738, %v1732
        %v2297 = vpack.c.b16 %v1739, %v1733
        %v2298 = vpack.c.b16 %v1740, %v1734
        %v2299 = vpack.c.b16 %v1741, %v1735
        %v2300 = vpack.c.b16 %v1742, %v1736
        %v2301 = vpack.c.b16 %v1743, %v1737
        %v2302 = vpack.c.b16 %v1750, %v1744
        %v2303 = vpack.c.b16 %v1751, %v1745
        %v2304 = vpack.c.b16 %v1752, %v1746
        %v2305 = vpack.c.b16 %v1753, %v1747
        %v2306 = vpack.c.b16 %v1754, %v1748
        %v2307 = vpack.c.b16 %v1755, %v1749
        %v2308 = vpack.c.b16 %v1762, %v1756
        %v2309 = vpack.c.b16 %v1763, %v1757
        %v2310 = vpack.c.b16 %v1764, %v1758
        %v2311 = vpack.c.b16 %v1765, %v1759
        %v2312 = vpack.c.b16 %v1766, %v1760
        %v2313 = vpack.c.b16 %v1767, %v1761
        %v2314 = vpack.c.b16 %v1774, %v1768
        %v2315 = vpack.c.b16 %v1775, %v1769
        %v2316 = vpack.c.b16 %v1776, %v1770
        %v2317 = vpack.c.b16 %v1777, %v1771
        %v2318 = vpack.c.b16 %v1778, %v1772
        %v2319 = vpack.c.b16 %v1779, %v1773
        %v2320 = vpack.c.b16 %v1786, %v1780
        %v2321 = vpack.c.b16 %v1787, %v1781
        %v2322 = vpack.c.b16 %v1788, %v1782
        %v2323 = vpack.c.b16 %v1789, %v1783
        %v2324 = vpack.c.b16 %v1790, %v1784
        %v2325 = vpack.c.b16 %v1791, %v1785
        %v2326 = vpack.c.b16 %v1798, %v1792
        %v2327 = vpack.c.b16 %v1799, %v1793
        %v2328 = vpack.c.b16 %v1800, %v1794
        %v2329 = vpack.c.b16 %v1801, %v1795
        %v2330 = vpack.c.b16 %v1802, %v1796
        %v2331 = vpack.c.b16 %v1803, %v1797
        %v2332 = vpack.c.b16 %v1810, %v1804
        %v2333 = vpack.c.b16 %v1811, %v1805
        %v2334 = vpack.c.b16 %v1812, %v1806
        %v2335 = vpack.c.b16 %v1813, %v1807
        %v2336 = vpack.c.b16 %v1814, %v1808
        %v2337 = vpack.c.b16 %v1815, %v1809
        %v2338 = vpack.c.b16 %v1822, %v1816
        %v2339 = vpack.c.b16 %v1823, %v1817
        %v2340 = vpack.c.b16 %v1824, %v1818
        %v2341 = vpack.c.b16 %v1825, %v1819
        %v2342 = vpack.c.b16 %v1826, %v1820
        %v2343 = vpack.c.b16 %v1827, %v1821
        %v2344 = vpack.c.b16 %v1834, %v1828
        %v2345 = vpack.c.b16 %v1835, %v1829
        %v2346 = vpack.c.b16 %v1836, %v1830
        %v2347 = vpack.c.b16 %v1837, %v1831
        %v2348 = vpack.c.b16 %v1838, %v1832
        %v2349 = vpack.c.b16 %v1839, %v1833
        %v2350 = vpack.c.b16 %v1846, %v1840
        %v2351 = vpack.c.b16 %v1847, %v1841
        %v2352 = vpack.c.b16 %v1848, %v1842
        %v2353 = vpack.c.b16 %v1849, %v1843
        %v2354 = vpack.c.b16 %v1850, %v1844
        %v2355 = vpack.c.b16 %v1851, %v1845
        %v2356 = vpack.c.b16 %v1858, %v1852
        %v2357 = vpack.c.b16 %v1859, %v1853
        %v2358 = vpack.c.b16 %v1860, %v1854
        %v2359 = vpack.c.b16 %v1861, %v1855
        %v2360 = vpack.c.b16 %v1862, %v1856
        %v2361 = vpack.c.b16 %v1863, %v1857
        %v2362 = vpack.c.b16 %v1870, %v1864
        %v2363 = vpack.c.b16 %v1871, %v1865
        %v2364 = vpack.c.b16 %v1872, %v1866
        %v2365 = vpack.c.b16 %v1873, %v1867
        %v2366 = vpack.c.b16 %v1874, %v1868
        %v2367 = vpack.c.b16 %v1875, %v1869
        %v2368 = vpack.c.b16 %v1882, %v1876
        %v2369 = vpack.c.b16 %v1883, %v1877
        %v2370 = vpack.c.b16 %v1884, %v1878
        %v2371 = vpack.c.b16 %v1885, %v1879
        %v2372 = vpack.c.b16 %v1886, %v1880
        %v2373 = vpack.c.b16 %v1887, %v1881
        %v2374 = vpack.c.b16 %v1894, %v1888
        %v2375 = vpack.c.b16 %v1895, %v1889
        %v2376 = vpack.c.b16 %v1896, %v1890
        %v2377 = vpack.c.b16 %v1897, %v1891
        %v2378 = vpack.c.b16 %v1898, %v1892
        %v2379 = vpack.c.b16 %v1899, %v1893
        %v2380 = vpack.c.b16 %v1906, %v1900
        %v2381 = vpack.c.b16 %v1907, %v1901
        %v2382 = vpack.c.b16 %v1908, %v1902
        %v2383 = vpack.c.b16 %v1909, %v1903
        %v2384 = vpack.c.b16 %v1910, %v1904
        %v2385 = vpack.c.b16 %v1911, %v1905
        %v2386 = vpack.c.b16 %v1918, %v1912
        %v2387 = vpack.c.b16 %v1919, %v1913
        %v2388 = vpack.c.b16 %v1920, %v1914
        %v2389 = vpack.c.b16 %v1921, %v1915
        %v2390 = vpack.c.b16 %v1922, %v1916
        %v2391 = vpack.c.b16 %v1923, %v1917
        %v2392 = vpack.c.b16 %v1930, %v1924
        %v2393 = vpack.c.b16 %v1931, %v1925
        %v2394 = vpack.c.b16 %v1932, %v1926
        %v2395 = vpack.c.b16 %v1933, %v1927
        %v2396 = vpack.c.b16 %v1934, %v1928
        %v2397 = vpack.c.b16 %v1935, %v1929
        %v2398 = vpack.c.b16 %v1942, %v1936
        %v2399 = vpack.c.b16 %v1943, %v1937
        %v2400 = vpack.c.b16 %v1944, %v1938
        %v2401 = vpack.c.b16 %v1945, %v1939
        %v2402 = vpack.c.b16 %v1946, %v1940
        %v2403 = vpack.c.b16 %v1947, %v1941
        %v2404 = vpack.c.b16 %v1954, %v1948
        %v2405 = vpack.c.b16 %v1955, %v1949
        %v2406 = vpack.c.b16 %v1956, %v1950
        %v2407 = vpack.c.b16 %v1957, %v1951
        %v2408 = vpack.c.b16 %v1958, %v1952
        %v2409 = vpack.c.b16 %v1959, %v1953
        %v2410 = vpack.c.b16 %v1966, %v1960
        %v2411 = vpack.c.b16 %v1967, %v1961
        %v2412 = vpack.c.b16 %v1968, %v1962
        %v2413 = vpack.c.b16 %v1969, %v1963
        %v2414 = vpack.c.b16 %v1970, %v1964
        %v2415 = vpack.c.b16 %v1971, %v1965
        %v2416 = vpack.c.b16 %v1978, %v1972
        %v2417 = vpack.c.b16 %v1979, %v1973
        %v2418 = vpack.c.b16 %v1980, %v1974
        %v2419 = vpack.c.b16 %v1981, %v1975
        %v2420 = vpack.c.b16 %v1982, %v1976
        %v2421 = vpack.c.b16 %v1983, %v1977
        %v2422 = vpack.c.b16 %v1990, %v1984
        %v2423 = vpack.c.b16 %v1991, %v1985
        %v2424 = vpack.c.b16 %v1992, %v1986
        %v2425 = vpack.c.b16 %v1993, %v1987
        %v2426 = vpack.c.b16 %v1994, %v1988
        %v2427 = vpack.c.b16 %v1995, %v1989
        %v2428 = vpack.c.b16 %v2002, %v1996
        %v2429 = vpack.c.b16 %v2003, %v1997
        %v2430 = vpack.c.b16 %v2004, %v1998
        %v2431 = vpack.c.b16 %v2005, %v1999
        %v2432 = vpack.c.b16 %v2006, %v2000
        %v2433 = vpack.c.b16 %v2007, %v2001
        %v2434 = vpack.c.b16 %v2014, %v2008
        %v2435 = vpack.c.b16 %v2015, %v2009
        %v2436 = vpack.c.b16 %v2016, %v2010
        %v2437 = vpack.c.b16 %v2017, %v2011
        %v2438 = vpack.c.b16 %v2018, %v2012
        %v2439 = vpack.c.b16 %v2019, %v2013
        %v2440 = vpack.c.b16 %v2026, %v2020
        %v2441 = vpack.c.b16 %v2027, %v2021
        %v2442 = vpack.c.b16 %v2028, %v2022
        %v2443 = vpack.c.b16 %v2029, %v2023
        %v2444 = vpack.c.b16 %v2030, %v2024
        %v2445 = vpack.c.b16 %v2031, %v2025
        %v2446 = vpack.c.b16 %v2038, %v2032
        %v2447 = vpack.c.b16 %v2039, %v2033
        %v2448 = vpack.c.b16 %v2040, %v2034
        %v2449 = vpack.c.b16 %v2041, %v2035
        %v2450 = vpack.c.b16 %v2042, %v2036
        %v2451 = vpack.c.b16 %v2043, %v2037
        %v2452 = vpack.c.b16 %v2050, %v2044
        %v2453 = vpack.c.b16 %v2051, %v2045
        %v2454 = vpack.c.b16 %v2052, %v2046
        %v2455 = vpack.c.b16 %v2053, %v2047
        %v2456 = vpack.c.b16 %v2054, %v2048
        %v2457 = vpack.c.b16 %v2055, %v2049
        %v2458 = vpack.c.b16 %v2062, %v2056
        %v2459 = vpack.c.b16 %v2063, %v2057
        %v2460 = vpack.c.b16 %v2064, %v2058
        %v2461 = vpack.c.b16 %v2065, %v2059
        %v2462 = vpack.c.b16 %v2066, %v2060
        %v2463 = vpack.c.b16 %v2067, %v2061
        %v2464 = vpack.c.b16 %v2074, %v2068
        %v2465 = vpack.c.b16 %v2075, %v2069
        %v2466 = vpack.c.b16 %v2076, %v2070
        %v2467 = vpack.c.b16 %v2077, %v2071
        %v2468 = vpack.c.b16 %v2078, %v2072
        %v2469 = vpack.c.b16 %v2079, %v2073
        %v2470 = vpack.c.b16 %v2086, %v2080
        %v2471 = vpack.c.b16 %v2087, %v2081
        %v2472 = vpack.c.b16 %v2088, %v2082
        %v2473 = vpack.c.b16 %v2089, %v2083
        %v2474 = vpack.c.b16 %v2090, %v2084
        %v2475 = vpack.c.b16 %v2091, %v2085
        %v2476 = vpack.c.b16 %v2098, %v2092
        %v2477 = vpack.c.b16 %v2099, %v2093
        %v2478 = vpack.c.b16 %v2100, %v2094
        %v2479 = vpack.c.b16 %v2101, %v2095
        %v2480 = vpack.c.b16 %v2102, %v2096
        %v2481 = vpack.c.b16 %v2103, %v2097
        %v2482 = vpack.c.b16 %v2110, %v2104
        %v2483 = vpack.c.b16 %v2111, %v2105
        %v2484 = vpack.c.b16 %v2112, %v2106
        %v2485 = vpack.c.b16 %v2113, %v2107
        %v2486 = vpack.c.b16 %v2114, %v2108
        %v2487 = vpack.c.b16 %v2115, %v2109
        %v2488 = vpack.c.b16 %v2122, %v2116
        %v2489 = vpack.c.b16 %v2123, %v2117
        %v2490 = vpack.c.b16 %v2124, %v2118
        %v2491 = vpack.c.b16 %v2125, %v2119
        %v2492 = vpack.c.b16 %v2126, %v2120
        %v2493 = vpack.c.b16 %v2127, %v2121
        %v2494 = vpack.c.b16 %v2134, %v2128
        %v2495 = vpack.c.b16 %v2135, %v2129
        %v2496 = vpack.c.b16 %v2136, %v2130
        %v2497 = vpack.c.b16 %v2137, %v2131
        %v2498 = vpack.c.b16 %v2138, %v2132
        %v2499 = vpack.c.b16 %v2139, %v2133
        %v2500 = vpack.c.b16 %v2146, %v2140
        %v2501 = vpack.c.b16 %v2147, %v2141
        %v2502 = vpack.c.b16 %v2148, %v2142
        %v2503 = vpack.c.b16 %v2149, %v2143
        %v2504 = vpack.c.b16 %v2150, %v2144
        %v2505 = vpack.c.b16 %v2151, %v2145
        %v2506 = vpack.c.b16 %v2158, %v2152
        %v2507 = vpack.c.b16 %v2159, %v2153
        %v2508 = vpack.c.b16 %v2160, %v2154
        %v2509 = vpack.c.b16 %v2161, %v2155
        %v2510 = vpack.c.b16 %v2162, %v2156
        %v2511 = vpack.c.b16 %v2163, %v2157
        %v2512 = vpack.c.b16 %v2170, %v2164
        %v2513 = vpack.c.b16 %v2171, %v2165
        %v2514 = vpack.c.b16 %v2172, %v2166
        %v2515 = vpack.c.b16 %v2173, %v2167
        %v2516 = vpack.c.b16 %v2174, %v2168
        %v2517 = vpack.c.b16 %v2175, %v2169
        %v2518 = vpack.c.b16 %v2182, %v2176
        %v2519 = vpack.c.b16 %v2183, %v2177
        %v2520 = vpack.c.b16 %v2184, %v2178
        %v2521 = vpack.c.b16 %v2185, %v2179
        %v2522 = vpack.c.b16 %v2186, %v2180
        %v2523 = vpack.c.b16 %v2187, %v2181
        %v2524 = vpack.c.b16 %v2194, %v2188
        %v2525 = vpack.c.b16 %v2195, %v2189
        %v2526 = vpack.c.b16 %v2196, %v2190
        %v2527 = vpack.c.b16 %v2197, %v2191
        %v2528 = vpack.c.b16 %v2198, %v2192
        %v2529 = vpack.c.b16 %v2199, %v2193
        %v2530 = vpack.c.b16 %v2206, %v2200
        %v2531 = vpack.c.b16 %v2207, %v2201
        %v2532 = vpack.c.b16 %v2208, %v2202
        %v2533 = vpack.c.b16 %v2209, %v2203
        %v2534 = vpack.c.b16 %v2210, %v2204
        %v2535 = vpack.c.b16 %v2211, %v2205
        %v2536 = vpack.c.b16 %v2218, %v2212
        %v2537 = vpack.c.b16 %v2219, %v2213
        %v2538 = vpack.c.b16 %v2220, %v2214
        %v2539 = vpack.c.b16 %v2221, %v2215
        %v2540 = vpack.c.b16 %v2222, %v2216
        %v2541 = vpack.c.b16 %v2223, %v2217
        %v2542 = vpack.c.b16 %v2230, %v2224
        %v2543 = vpack.c.b16 %v2231, %v2225
        %v2544 = vpack.c.b16 %v2232, %v2226
        %v2545 = vpack.c.b16 %v2233, %v2227
        %v2546 = vpack.c.b16 %v2234, %v2228
        %v2547 = vpack.c.b16 %v2235, %v2229
        %v2548 = vpack.c.b16 %v2242, %v2236
        %v2549 = vpack.c.b16 %v2243, %v2237
        %v2550 = vpack.c.b16 %v2244, %v2238
        %v2551 = vpack.c.b16 %v2245, %v2239
        %v2552 = vpack.c.b16 %v2246, %v2240
        %v2553 = vpack.c.b16 %v2247, %v2241
        %v2554 = vpack.c.b16 %v2254, %v2248
        %v2555 = vpack.c.b16 %v2255, %v2249
        %v2556 = vpack.c.b16 %v2256, %v2250
        %v2557 = vpack.c.b16 %v2257, %v2251
        %v2558 = vpack.c.b16 %v2258, %v2252
        %v2559 = vpack.c.b16 %v2259, %v2253
        %v2560 = vpack.c.b16 %v2266, %v2260
        %v2561 = vpack.c.b16 %v2267, %v2261
        %v2562 = vpack.c.b16 %v2268, %v2262
        %v2563 = vpack.c.b16 %v2269, %v2263
        %v2564 = vpack.c.b16 %v2270, %v2264
        %v2565 = vpack.c.b16 %v2271, %v2265
        %v2566 = vpack.c.b16 %v2278, %v2272
        %v2567 = vpack.c.b16 %v2279, %v2273
        %v2568 = vpack.c.b16 %v2280, %v2274
        %v2569 = vpack.c.b16 %v2281, %v2275
        %v2570 = vpack.c.b16 %v2282, %v2276
        %v2571 = vpack.c.b16 %v2283, %v2277
        %2860 = vmatprep.subr.bf16.mxu0 %v2285
        %2861 = vmatpush1.bf16.msra.mxu0 %v2284
        %2862 = vmatprep.subr.bf16.mxu0 %v2291
        %2863 = vmatpush1.bf16.msra.mxu0 %v2290
        %2864 = vmatprep.subr.bf16.mxu0 %v2297
        %2865 = vmatpush1.bf16.msra.mxu0 %v2296
        %2866 = vmatprep.subr.bf16.mxu0 %v2303
        %2867 = vmatpush1.bf16.msra.mxu0 %v2302
        %2868 = vmatprep.subr.bf16.mxu0 %v2309
        %2869 = vmatpush1.bf16.msra.mxu0 %v2308
        %2870 = vmatprep.subr.bf16.mxu0 %v2315
        %2871 = vmatpush1.bf16.msra.mxu0 %v2314
        %2872 = vmatprep.subr.bf16.mxu0 %v2321
        %2873 = vmatpush1.bf16.msra.mxu0 %v2320
        %2874 = vmatprep.subr.bf16.mxu0 %v2327
        %2875 = vmatpush1.bf16.msra.mxu0 %v2326
        %2876 = vmatprep.subr.bf16.mxu0 %v2333
        %2877 = vmatpush1.bf16.msra.mxu0 %v2332
        %2878 = vmatprep.subr.bf16.mxu0 %v2339
        %2879 = vmatpush1.bf16.msra.mxu0 %v2338
        %2880 = vmatprep.subr.bf16.mxu0 %v2345
        %2881 = vmatpush1.bf16.msra.mxu0 %v2344
        %2882 = vmatprep.subr.bf16.mxu0 %v2351
        %2883 = vmatpush1.bf16.msra.mxu0 %v2350
        %2884 = vmatprep.subr.bf16.mxu0 %v2357
        %2885 = vmatpush1.bf16.msra.mxu0 %v2356
        %2886 = vmatprep.subr.bf16.mxu0 %v2363
        %2887 = vmatpush1.bf16.msra.mxu0 %v2362
        %2888 = vmatprep.subr.bf16.mxu0 %v2369
        %2889 = vmatpush1.bf16.msra.mxu0 %v2368
        %2890 = vmatprep.subr.bf16.mxu0 %v2375
        %2891 = vmatpush1.bf16.msra.mxu0 %v2374
        %2892 = vmatprep.mubr.bf16.mxu0 %v1409
        %2893 = vmatmul.mubr.bf16.gmra.mrb[0].mxu0 %v1408
        %v2894 = vpop.f32.mrb[0].mxu0
        %v2895 = vadd.f32 %v1236, %v2894
        %v2896 = vpop.f32.mrb[0].mxu0
        %v2897 = vadd.f32 %v1240, %v2896
        %v2898 = vpop.f32.mrb[0].mxu0
        %v2899 = vpop.f32.mrb[0].mxu0
        %2900 = vdwg.mxu0
        %2901 = vmatprep.subr.bf16.mxu0 %v2381
        %2902 = vmatpush1.bf16.msra.mxu0 %v2380
        %2903 = vmatprep.subr.bf16.mxu0 %v2387
        %2904 = vmatpush1.bf16.msra.mxu0 %v2386
        %2905 = vmatprep.subr.bf16.mxu0 %v2393
        %2906 = vmatpush1.bf16.msra.mxu0 %v2392
        %2907 = vmatprep.subr.bf16.mxu0 %v2399
        %2908 = vmatpush1.bf16.msra.mxu0 %v2398
        %2909 = vmatprep.subr.bf16.mxu0 %v2405
        %2910 = vmatpush1.bf16.msra.mxu0 %v2404
        %2911 = vmatprep.subr.bf16.mxu0 %v2411
        %2912 = vmatpush1.bf16.msra.mxu0 %v2410
        %2913 = vmatprep.subr.bf16.mxu0 %v2417
        %2914 = vmatpush1.bf16.msra.mxu0 %v2416
        %2915 = vmatprep.subr.bf16.mxu0 %v2423
        %2916 = vmatpush1.bf16.msra.mxu0 %v2422
        %2917 = vmatprep.subr.bf16.mxu0 %v2429
        %2918 = vmatpush1.bf16.msra.mxu0 %v2428
        %2919 = vmatprep.subr.bf16.mxu0 %v2435
        %2920 = vmatpush1.bf16.msra.mxu0 %v2434
        %2921 = vmatprep.subr.bf16.mxu0 %v2441
        %2922 = vmatpush1.bf16.msra.mxu0 %v2440
        %2923 = vmatprep.subr.bf16.mxu0 %v2447
        %2924 = vmatpush1.bf16.msra.mxu0 %v2446
        %2925 = vmatprep.subr.bf16.mxu0 %v2453
        %2926 = vmatpush1.bf16.msra.mxu0 %v2452
        %2927 = vmatprep.subr.bf16.mxu0 %v2459
        %2928 = vmatpush1.bf16.msra.mxu0 %v2458
        %2929 = vmatprep.subr.bf16.mxu0 %v2465
        %2930 = vmatpush1.bf16.msra.mxu0 %v2464
        %2931 = vmatprep.subr.bf16.mxu0 %v2471
        %2932 = vmatpush1.bf16.msra.mxu0 %v2470
        %2933 = vmatprep.mubr.bf16.mxu0 %v1411
        %2934 = vmatmul.mubr.bf16.gmra.mrb[0].mxu0 %v1410
        %v2935 = vpop.f32.mrb[0].mxu0
        %v2936 = vadd.f32 %v2895, %v2935
        %v2937 = vpop.f32.mrb[0].mxu0
        %v2938 = vadd.f32 %v2897, %v2937
        %v2939 = vpop.f32.mrb[0].mxu0
        %v2940 = vpop.f32.mrb[0].mxu0
        %2941 = vdwg.mxu0
        %2942 = vmatprep.subr.bf16.mxu0 %v2477
        %2943 = vmatpush1.bf16.msra.mxu0 %v2476
        %2944 = vmatprep.subr.bf16.mxu0 %v2483
        %2945 = vmatpush1.bf16.msra.mxu0 %v2482
        %2946 = vmatprep.subr.bf16.mxu0 %v2489
        %2947 = vmatpush1.bf16.msra.mxu0 %v2488
        %2948 = vmatprep.subr.bf16.mxu0 %v2495
        %2949 = vmatpush1.bf16.msra.mxu0 %v2494
        %2950 = vmatprep.subr.bf16.mxu0 %v2501
        %2951 = vmatpush1.bf16.msra.mxu0 %v2500
        %2952 = vmatprep.subr.bf16.mxu0 %v2507
        %2953 = vmatpush1.bf16.msra.mxu0 %v2506
        %2954 = vmatprep.subr.bf16.mxu0 %v2513
        %2955 = vmatpush1.bf16.msra.mxu0 %v2512
        %2956 = vmatprep.subr.bf16.mxu0 %v2519
        %2957 = vmatpush1.bf16.msra.mxu0 %v2518
        %2958 = vmatprep.subr.bf16.mxu0 %v2525
        %2959 = vmatpush1.bf16.msra.mxu0 %v2524
        %2960 = vmatprep.subr.bf16.mxu0 %v2531
        %2961 = vmatpush1.bf16.msra.mxu0 %v2530
        %2962 = vmatprep.subr.bf16.mxu0 %v2537
        %2963 = vmatpush1.bf16.msra.mxu0 %v2536
        %2964 = vmatprep.subr.bf16.mxu0 %v2543
        %2965 = vmatpush1.bf16.msra.mxu0 %v2542
        %2966 = vmatprep.subr.bf16.mxu0 %v2549
        %2967 = vmatpush1.bf16.msra.mxu0 %v2548
        %2968 = vmatprep.subr.bf16.mxu0 %v2555
        %2969 = vmatpush1.bf16.msra.mxu0 %v2554
        %2970 = vmatprep.subr.bf16.mxu0 %v2561
        %2971 = vmatpush1.bf16.msra.mxu0 %v2560
        %2972 = vmatprep.subr.bf16.mxu0 %v2567
        %2973 = vmatpush1.bf16.msra.mxu0 %v2566
        %2974 = vmatprep.mubr.bf16.mxu0 %v1413
        %2975 = vmatmul.mubr.bf16.gmra.mrb[0].mxu0 %v1412
        %v2976 = vpop.f32.mrb[0].mxu0
        %v2977 = vadd.f32 %v2936, %v2976
        %v2978 = vpop.f32.mrb[0].mxu0
        %v2979 = vadd.f32 %v2938, %v2978
        %v2980 = vpop.f32.mrb[0].mxu0
        %v2981 = vpop.f32.mrb[0].mxu0
        %2982 = vdwg.mxu0
        %2983 = vmatprep.subr.bf16.mxu0 %v2287
        %2984 = vmatpush1.bf16.msra.mxu0 %v2286
        %2985 = vmatprep.subr.bf16.mxu0 %v2293
        %2986 = vmatpush1.bf16.msra.mxu0 %v2292
        %2987 = vmatprep.subr.bf16.mxu0 %v2299
        %2988 = vmatpush1.bf16.msra.mxu0 %v2298
        %2989 = vmatprep.subr.bf16.mxu0 %v2305
        %2990 = vmatpush1.bf16.msra.mxu0 %v2304
        %2991 = vmatprep.subr.bf16.mxu0 %v2311
        %2992 = vmatpush1.bf16.msra.mxu0 %v2310
        %2993 = vmatprep.subr.bf16.mxu0 %v2317
        %2994 = vmatpush1.bf16.msra.mxu0 %v2316
        %2995 = vmatprep.subr.bf16.mxu0 %v2323
        %2996 = vmatpush1.bf16.msra.mxu0 %v2322
        %2997 = vmatprep.subr.bf16.mxu0 %v2329
        %2998 = vmatpush1.bf16.msra.mxu0 %v2328
        %2999 = vmatprep.subr.bf16.mxu0 %v2335
        %3000 = vmatpush1.bf16.msra.mxu0 %v2334
        %3001 = vmatprep.subr.bf16.mxu0 %v2341
        %3002 = vmatpush1.bf16.msra.mxu0 %v2340
        %3003 = vmatprep.subr.bf16.mxu0 %v2347
        %3004 = vmatpush1.bf16.msra.mxu0 %v2346
        %3005 = vmatprep.subr.bf16.mxu0 %v2353
        %3006 = vmatpush1.bf16.msra.mxu0 %v2352
        %3007 = vmatprep.subr.bf16.mxu0 %v2359
        %3008 = vmatpush1.bf16.msra.mxu0 %v2358
        %3009 = vmatprep.subr.bf16.mxu0 %v2365
        %3010 = vmatpush1.bf16.msra.mxu0 %v2364
        %3011 = vmatprep.subr.bf16.mxu0 %v2371
        %3012 = vmatpush1.bf16.msra.mxu0 %v2370
        %3013 = vmatprep.subr.bf16.mxu0 %v2377
        %3014 = vmatpush1.bf16.msra.mxu0 %v2376
        %3015 = vmatprep.mubr.bf16.mxu0 %v1409
        %3016 = vmatmul.mubr.bf16.gmra.mrb[0].mxu0 %v1408
        %v3017 = vpop.f32.mrb[0].mxu0
        %v3018 = vadd.f32 %v1244, %v3017
        %v3019 = vpop.f32.mrb[0].mxu0
        %v3020 = vadd.f32 %v1248, %v3019
        %v3021 = vpop.f32.mrb[0].mxu0
        %v3022 = vpop.f32.mrb[0].mxu0
        %3023 = vdwg.mxu0
        %3024 = vmatprep.subr.bf16.mxu0 %v2383
        %3025 = vmatpush1.bf16.msra.mxu0 %v2382
        %3026 = vmatprep.subr.bf16.mxu0 %v2389
        %3027 = vmatpush1.bf16.msra.mxu0 %v2388
        %3028 = vmatprep.subr.bf16.mxu0 %v2395
        %3029 = vmatpush1.bf16.msra.mxu0 %v2394
        %3030 = vmatprep.subr.bf16.mxu0 %v2401
        %3031 = vmatpush1.bf16.msra.mxu0 %v2400
        %3032 = vmatprep.subr.bf16.mxu0 %v2407
        %3033 = vmatpush1.bf16.msra.mxu0 %v2406
        %3034 = vmatprep.subr.bf16.mxu0 %v2413
        %3035 = vmatpush1.bf16.msra.mxu0 %v2412
        %3036 = vmatprep.subr.bf16.mxu0 %v2419
        %3037 = vmatpush1.bf16.msra.mxu0 %v2418
        %3038 = vmatprep.subr.bf16.mxu0 %v2425
        %3039 = vmatpush1.bf16.msra.mxu0 %v2424
        %3040 = vmatprep.subr.bf16.mxu0 %v2431
        %3041 = vmatpush1.bf16.msra.mxu0 %v2430
        %3042 = vmatprep.subr.bf16.mxu0 %v2437
        %3043 = vmatpush1.bf16.msra.mxu0 %v2436
        %3044 = vmatprep.subr.bf16.mxu0 %v2443
        %3045 = vmatpush1.bf16.msra.mxu0 %v2442
        %3046 = vmatprep.subr.bf16.mxu0 %v2449
        %3047 = vmatpush1.bf16.msra.mxu0 %v2448
        %3048 = vmatprep.subr.bf16.mxu0 %v2455
        %3049 = vmatpush1.bf16.msra.mxu0 %v2454
        %3050 = vmatprep.subr.bf16.mxu0 %v2461
        %3051 = vmatpush1.bf16.msra.mxu0 %v2460
        %3052 = vmatprep.subr.bf16.mxu0 %v2467
        %3053 = vmatpush1.bf16.msra.mxu0 %v2466
        %3054 = vmatprep.subr.bf16.mxu0 %v2473
        %3055 = vmatpush1.bf16.msra.mxu0 %v2472
        %3056 = vmatprep.mubr.bf16.mxu0 %v1411
        %3057 = vmatmul.mubr.bf16.gmra.mrb[0].mxu0 %v1410
        %v3058 = vpop.f32.mrb[0].mxu0
        %v3059 = vadd.f32 %v3018, %v3058
        %v3060 = vpop.f32.mrb[0].mxu0
        %v3061 = vadd.f32 %v3020, %v3060
        %v3062 = vpop.f32.mrb[0].mxu0
        %v3063 = vpop.f32.mrb[0].mxu0
        %3064 = vdwg.mxu0
        %3065 = vmatprep.subr.bf16.mxu0 %v2479
        %3066 = vmatpush1.bf16.msra.mxu0 %v2478
        %3067 = vmatprep.subr.bf16.mxu0 %v2485
        %3068 = vmatpush1.bf16.msra.mxu0 %v2484
        %3069 = vmatprep.subr.bf16.mxu0 %v2491
        %3070 = vmatpush1.bf16.msra.mxu0 %v2490
        %3071 = vmatprep.subr.bf16.mxu0 %v2497
        %3072 = vmatpush1.bf16.msra.mxu0 %v2496
        %3073 = vmatprep.subr.bf16.mxu0 %v2503
        %3074 = vmatpush1.bf16.msra.mxu0 %v2502
        %3075 = vmatprep.subr.bf16.mxu0 %v2509
        %3076 = vmatpush1.bf16.msra.mxu0 %v2508
        %3077 = vmatprep.subr.bf16.mxu0 %v2515
        %3078 = vmatpush1.bf16.msra.mxu0 %v2514
        %3079 = vmatprep.subr.bf16.mxu0 %v2521
        %3080 = vmatpush1.bf16.msra.mxu0 %v2520
        %3081 = vmatprep.subr.bf16.mxu0 %v2527
        %3082 = vmatpush1.bf16.msra.mxu0 %v2526
        %3083 = vmatprep.subr.bf16.mxu0 %v2533
        %3084 = vmatpush1.bf16.msra.mxu0 %v2532
        %3085 = vmatprep.subr.bf16.mxu0 %v2539
        %3086 = vmatpush1.bf16.msra.mxu0 %v2538
        %3087 = vmatprep.subr.bf16.mxu0 %v2545
        %3088 = vmatpush1.bf16.msra.mxu0 %v2544
        %3089 = vmatprep.subr.bf16.mxu0 %v2551
        %3090 = vmatpush1.bf16.msra.mxu0 %v2550
        %3091 = vmatprep.subr.bf16.mxu0 %v2557
        %3092 = vmatpush1.bf16.msra.mxu0 %v2556
        %3093 = vmatprep.subr.bf16.mxu0 %v2563
        %3094 = vmatpush1.bf16.msra.mxu0 %v2562
        %3095 = vmatprep.subr.bf16.mxu0 %v2569
        %3096 = vmatpush1.bf16.msra.mxu0 %v2568
        %3097 = vmatprep.mubr.bf16.mxu0 %v1413
        %3098 = vmatmul.mubr.bf16.gmra.mrb[0].mxu0 %v1412
        %v3099 = vpop.f32.mrb[0].mxu0
        %v3100 = vadd.f32 %v3059, %v3099
        %v3101 = vpop.f32.mrb[0].mxu0
        %v3102 = vadd.f32 %v3061, %v3101
        %v3103 = vpop.f32.mrb[0].mxu0
        %v3104 = vpop.f32.mrb[0].mxu0
        %3105 = vdwg.mxu0
        %3106 = vmatprep.subr.bf16.mxu0 %v2289
        %3107 = vmatpush1.bf16.msra.mxu0 %v2288
        %3108 = vmatprep.subr.bf16.mxu0 %v2295
        %3109 = vmatpush1.bf16.msra.mxu0 %v2294
        %3110 = vmatprep.subr.bf16.mxu0 %v2301
        %3111 = vmatpush1.bf16.msra.mxu0 %v2300
        %3112 = vmatprep.subr.bf16.mxu0 %v2307
        %3113 = vmatpush1.bf16.msra.mxu0 %v2306
        %3114 = vmatprep.subr.bf16.mxu0 %v2313
        %3115 = vmatpush1.bf16.msra.mxu0 %v2312
        %3116 = vmatprep.subr.bf16.mxu0 %v2319
        %3117 = vmatpush1.bf16.msra.mxu0 %v2318
        %3118 = vmatprep.subr.bf16.mxu0 %v2325
        %3119 = vmatpush1.bf16.msra.mxu0 %v2324
        %3120 = vmatprep.subr.bf16.mxu0 %v2331
        %3121 = vmatpush1.bf16.msra.mxu0 %v2330
        %3122 = vmatprep.subr.bf16.mxu0 %v2337
        %3123 = vmatpush1.bf16.msra.mxu0 %v2336
        %3124 = vmatprep.subr.bf16.mxu0 %v2343
        %3125 = vmatpush1.bf16.msra.mxu0 %v2342
        %3126 = vmatprep.subr.bf16.mxu0 %v2349
        %3127 = vmatpush1.bf16.msra.mxu0 %v2348
        %3128 = vmatprep.subr.bf16.mxu0 %v2355
        %3129 = vmatpush1.bf16.msra.mxu0 %v2354
        %3130 = vmatprep.subr.bf16.mxu0 %v2361
        %3131 = vmatpush1.bf16.msra.mxu0 %v2360
        %3132 = vmatprep.subr.bf16.mxu0 %v2367
        %3133 = vmatpush1.bf16.msra.mxu0 %v2366
        %3134 = vmatprep.subr.bf16.mxu0 %v2373
        %3135 = vmatpush1.bf16.msra.mxu0 %v2372
        %3136 = vmatprep.subr.bf16.mxu0 %v2379
        %3137 = vmatpush1.bf16.msra.mxu0 %v2378
        %3138 = vmatprep.mubr.bf16.mxu0 %v1409
        %3139 = vmatmul.mubr.bf16.gmra.mrb[0].mxu0 %v1408
        %v3140 = vpop.f32.mrb[0].mxu0
        %v3141 = vadd.f32 %v1252, %v3140
        %v3142 = vpop.f32.mrb[0].mxu0
        %v3143 = vadd.f32 %v1256, %v3142
        %v3144 = vpop.f32.mrb[0].mxu0
        %v3145 = vpop.f32.mrb[0].mxu0
        %3146 = vdwg.mxu0
        %3147 = vmatprep.subr.bf16.mxu0 %v2385
        %3148 = vmatpush1.bf16.msra.mxu0 %v2384
        %3149 = vmatprep.subr.bf16.mxu0 %v2391
        %3150 = vmatpush1.bf16.msra.mxu0 %v2390
        %3151 = vmatprep.subr.bf16.mxu0 %v2397
        %3152 = vmatpush1.bf16.msra.mxu0 %v2396
        %3153 = vmatprep.subr.bf16.mxu0 %v2403
        %3154 = vmatpush1.bf16.msra.mxu0 %v2402
        %3155 = vmatprep.subr.bf16.mxu0 %v2409
        %3156 = vmatpush1.bf16.msra.mxu0 %v2408
        %3157 = vmatprep.subr.bf16.mxu0 %v2415
        %3158 = vmatpush1.bf16.msra.mxu0 %v2414
        %3159 = vmatprep.subr.bf16.mxu0 %v2421
        %3160 = vmatpush1.bf16.msra.mxu0 %v2420
        %3161 = vmatprep.subr.bf16.mxu0 %v2427
        %3162 = vmatpush1.bf16.msra.mxu0 %v2426
        %3163 = vmatprep.subr.bf16.mxu0 %v2433
        %3164 = vmatpush1.bf16.msra.mxu0 %v2432
        %3165 = vmatprep.subr.bf16.mxu0 %v2439
        %3166 = vmatpush1.bf16.msra.mxu0 %v2438
        %3167 = vmatprep.subr.bf16.mxu0 %v2445
        %3168 = vmatpush1.bf16.msra.mxu0 %v2444
        %3169 = vmatprep.subr.bf16.mxu0 %v2451
        %3170 = vmatpush1.bf16.msra.mxu0 %v2450
        %3171 = vmatprep.subr.bf16.mxu0 %v2457
        %3172 = vmatpush1.bf16.msra.mxu0 %v2456
        %3173 = vmatprep.subr.bf16.mxu0 %v2463
        %3174 = vmatpush1.bf16.msra.mxu0 %v2462
        %3175 = vmatprep.subr.bf16.mxu0 %v2469
        %3176 = vmatpush1.bf16.msra.mxu0 %v2468
        %3177 = vmatprep.subr.bf16.mxu0 %v2475
        %3178 = vmatpush1.bf16.msra.mxu0 %v2474
        %3179 = vmatprep.mubr.bf16.mxu0 %v1411
        %3180 = vmatmul.mubr.bf16.gmra.mrb[0].mxu0 %v1410
        %v3181 = vpop.f32.mrb[0].mxu0
        %v3182 = vadd.f32 %v3141, %v3181
        %v3183 = vpop.f32.mrb[0].mxu0
        %v3184 = vadd.f32 %v3143, %v3183
        %v3185 = vpop.f32.mrb[0].mxu0
        %v3186 = vpop.f32.mrb[0].mxu0
        %3187 = vdwg.mxu0
        %3188 = vmatprep.subr.bf16.mxu0 %v2481
        %3189 = vmatpush1.bf16.msra.mxu0 %v2480
        %3190 = vmatprep.subr.bf16.mxu0 %v2487
        %3191 = vmatpush1.bf16.msra.mxu0 %v2486
        %3192 = vmatprep.subr.bf16.mxu0 %v2493
        %3193 = vmatpush1.bf16.msra.mxu0 %v2492
        %3194 = vmatprep.subr.bf16.mxu0 %v2499
        %3195 = vmatpush1.bf16.msra.mxu0 %v2498
        %3196 = vmatprep.subr.bf16.mxu0 %v2505
        %3197 = vmatpush1.bf16.msra.mxu0 %v2504
        %3198 = vmatprep.subr.bf16.mxu0 %v2511
        %3199 = vmatpush1.bf16.msra.mxu0 %v2510
        %3200 = vmatprep.subr.bf16.mxu0 %v2517
        %3201 = vmatpush1.bf16.msra.mxu0 %v2516
        %3202 = vmatprep.subr.bf16.mxu0 %v2523
        %3203 = vmatpush1.bf16.msra.mxu0 %v2522
        %3204 = vmatprep.subr.bf16.mxu0 %v2529
        %3205 = vmatpush1.bf16.msra.mxu0 %v2528
        %3206 = vmatprep.subr.bf16.mxu0 %v2535
        %3207 = vmatpush1.bf16.msra.mxu0 %v2534
        %3208 = vmatprep.subr.bf16.mxu0 %v2541
        %3209 = vmatpush1.bf16.msra.mxu0 %v2540
        %3210 = vmatprep.subr.bf16.mxu0 %v2547
        %3211 = vmatpush1.bf16.msra.mxu0 %v2546
        %3212 = vmatprep.subr.bf16.mxu0 %v2553
        %3213 = vmatpush1.bf16.msra.mxu0 %v2552
        %3214 = vmatprep.subr.bf16.mxu0 %v2559
        %3215 = vmatpush1.bf16.msra.mxu0 %v2558
        %3216 = vmatprep.subr.bf16.mxu0 %v2565
        %3217 = vmatpush1.bf16.msra.mxu0 %v2564
        %3218 = vmatprep.subr.bf16.mxu0 %v2571
        %3219 = vmatpush1.bf16.msra.mxu0 %v2570
        %3220 = vmatprep.mubr.bf16.mxu0 %v1413
        %3221 = vmatmul.mubr.bf16.gmra.mrb[0].mxu0 %v1412
        %v3222 = vpop.f32.mrb[0].mxu0
        %v3223 = vadd.f32 %v3182, %v3222
        %v3224 = vpop.f32.mrb[0].mxu0
        %v3225 = vadd.f32 %v3184, %v3224
        %v3226 = vpop.f32.mrb[0].mxu0
        %v3227 = vpop.f32.mrb[0].mxu0
        %3228 = vdwg.mxu0
        %v3229 = vtanh.pop %v2977
        %v3230 = vtanh.pop %v2979
        %v3231 = vtanh.pop %v3100
        %v3232 = vtanh.pop %v3102
        %v3233 = vtanh.pop %v3223
        %v3234 = vtanh.pop %v3225
        %v3235 = vadd.f32 %v3229, %v3230
        %v3236 = vadd.f32 %v3235, %v3231
        %v3237 = vadd.f32 %v3236, %v3232
        %v3238 = vadd.f32 %v3237, %v3233
        %v3239 = vadd.f32 %v3238, %v3234
        %3240 = vadd.xlane.f32.xlu0 %v3239
        %v3241 = vpop.xlane.xlu0 %3240
        %v3242 = vrcp.pop 768.0
        %v3243 = vmul.f32 %v3241, %v3242
        %v3244 = vsub.f32 %v3229, %v3243
        %v3245 = vsub.f32 %v3230, %v3243
        %v3246 = vsub.f32 %v3231, %v3243
        %v3247 = vsub.f32 %v3232, %v3243
        %v3248 = vsub.f32 %v3233, %v3243
        %v3249 = vsub.f32 %v3234, %v3243
        %v3250 = vmul.f32 %v3244, %v3244
        %v3251 = vmul.f32 %v3245, %v3245
        %v3252 = vmul.f32 %v3246, %v3246
        %v3253 = vmul.f32 %v3247, %v3247
        %v3254 = vmul.f32 %v3248, %v3248
        %v3255 = vmul.f32 %v3249, %v3249
        %v3256 = vadd.f32 %v3250, %v3251
        %v3257 = vadd.f32 %v3256, %v3252
        %v3258 = vadd.f32 %v3257, %v3253
        %v3259 = vadd.f32 %v3258, %v3254
        %v3260 = vadd.f32 %v3259, %v3255
        %3261 = vadd.xlane.f32.xlu0 %v3260
        %v3262 = vpop.xlane.xlu0 %3261
        %v3263 = vmul.f32 %v3262, %v3242
        %v3264 = vadd.f32 %v3263, 1e-05
        %v3265 = vrsqrt.pop %v3264
        %v3266 = vmul.f32 %v3244, %v3265
        %v3267 = vmul.f32 %v3245, %v3265
        %v3268 = vmul.f32 %v3246, %v3265
        %v3269 = vmul.f32 %v3247, %v3265
        %v3270 = vmul.f32 %v3248, %v3265
        %v3271 = vmul.f32 %v3249, %v3265
        %v3273 = vlaneseq
        %v3274 = vshrl.u32 %v3273, 7
        %v3275 = vsub.s32 0, %v3274
        %v3276 = vrot.slane %v888, %v3275
        %v3277 = vlaneseq
        %v3278 = vshrl.u32 %v3277, 7
        %v3279 = vsub.s32 1, %v3278
        %v3280 = vrot.slane %v888, %v3279
        %v3281 = vlaneseq
        %v3282 = vshrl.u32 %v3281, 7
        %v3283 = vsub.s32 2, %v3282
        %v3284 = vrot.slane %v888, %v3283
        %v3285 = vlaneseq
        %v3286 = vshrl.u32 %v3285, 7
        %v3287 = vsub.s32 3, %v3286
        %v3288 = vrot.slane %v888, %v3287
        %v3289 = vlaneseq
        %v3290 = vshrl.u32 %v3289, 7
        %v3291 = vsub.s32 4, %v3290
        %v3292 = vrot.slane %v888, %v3291
        %v3293 = vlaneseq
        %v3294 = vshrl.u32 %v3293, 7
        %v3295 = vsub.s32 5, %v3294
        %v3296 = vrot.slane %v888, %v3295
        %v3303 = vmul.f32 %v3266, %v3276
        %v3304 = vmul.f32 %v3267, %v3280
        %v3305 = vmul.f32 %v3268, %v3284
        %v3306 = vmul.f32 %v3269, %v3288
        %v3307 = vmul.f32 %v3270, %v3292
        %v3308 = vmul.f32 %v3271, %v3296
        %v3310 = vlaneseq
        %v3311 = vshrl.u32 %v3310, 7
        %v3312 = vsub.s32 0, %v3311
        %v3313 = vrot.slane %v892, %v3312
        %v3314 = vlaneseq
        %v3315 = vshrl.u32 %v3314, 7
        %v3316 = vsub.s32 1, %v3315
        %v3317 = vrot.slane %v892, %v3316
        %v3318 = vlaneseq
        %v3319 = vshrl.u32 %v3318, 7
        %v3320 = vsub.s32 2, %v3319
        %v3321 = vrot.slane %v892, %v3320
        %v3322 = vlaneseq
        %v3323 = vshrl.u32 %v3322, 7
        %v3324 = vsub.s32 3, %v3323
        %v3325 = vrot.slane %v892, %v3324
        %v3326 = vlaneseq
        %v3327 = vshrl.u32 %v3326, 7
        %v3328 = vsub.s32 4, %v3327
        %v3329 = vrot.slane %v892, %v3328
        %v3330 = vlaneseq
        %v3331 = vshrl.u32 %v3330, 7
        %v3332 = vsub.s32 5, %v3331
        %v3333 = vrot.slane %v892, %v3332
        %v3340 = vadd.f32 %v3303, %v3313
        %v3341 = vadd.f32 %v3304, %v3317
        %v3342 = vadd.f32 %v3305, %v3321
        %v3343 = vadd.f32 %v3306, %v3325
        %v3344 = vadd.f32 %v3307, %v3329
        %v3345 = vadd.f32 %v3308, %v3333
        %v3346 = vpack.c.bf16 %v3340, %v3340
        %v3347 = vpack.c.bf16 %v3341, %v3341
        %v3348 = vpack.c.bf16 %v3342, %v3342
        %v3349 = vpack.c.bf16 %v3343, %v3343
        %v3350 = vpack.c.bf16 %v3344, %v3344
        %v3351 = vpack.c.bf16 %v3345, %v3345
        %v3352 = vld [vmem:[#allocation7] sm:$0xf]
        %v3353 = vld [vmem:[#allocation7 + $0x4] sm:$0xf]
        %v3354 = vld [vmem:[#allocation7 + $0x8] sm:$0xf]
        %v3355 = vld [vmem:[#allocation7 + $0xc] sm:$0xf]
        %v3356 = vld [vmem:[#allocation7 + $0x10] sm:$0xf]
        %v3357 = vld [vmem:[#allocation7 + $0x14] sm:$0xf]
        %v3358 = vld [vmem:[#allocation7 + $0x18] sm:$0xf]
        %v3359 = vld [vmem:[#allocation7 + $0x1c] sm:$0xf]
        %v3360 = vld [vmem:[#allocation7 + $0x20] sm:$0xf]
        %v3361 = vld [vmem:[#allocation7 + $0x24] sm:$0xf]
        %v3362 = vld [vmem:[#allocation7 + $0x28] sm:$0xf]
        %v3363 = vld [vmem:[#allocation7 + $0x2c] sm:$0xf]
        %v3364 = vld [vmem:[#allocation7 + $0x30] sm:$0xf]
        %v3365 = vld [vmem:[#allocation7 + $0x34] sm:$0xf]
        %v3366 = vld [vmem:[#allocation7 + $0x38] sm:$0xf]
        %v3367 = vld [vmem:[#allocation7 + $0x3c] sm:$0xf]
        %v3368 = vld [vmem:[#allocation7 + $0x40] sm:$0xf]
        %v3369 = vld [vmem:[#allocation7 + $0x44] sm:$0xf]
        %v3370 = vld [vmem:[#allocation7 + $0x48] sm:$0xf]
        %v3371 = vld [vmem:[#allocation7 + $0x4c] sm:$0xf]
        %v3372 = vld [vmem:[#allocation7 + $0x50] sm:$0xf]
        %v3373 = vld [vmem:[#allocation7 + $0x54] sm:$0xf]
        %v3374 = vld [vmem:[#allocation7 + $0x58] sm:$0xf]
        %v3375 = vld [vmem:[#allocation7 + $0x5c] sm:$0xf]
        %v3376 = vld [vmem:[#allocation7 + $0x60] sm:$0xf]
        %v3377 = vld [vmem:[#allocation7 + $0x64] sm:$0xf]
        %v3378 = vld [vmem:[#allocation7 + $0x68] sm:$0xf]
        %v3379 = vld [vmem:[#allocation7 + $0x6c] sm:$0xf]
        %v3380 = vld [vmem:[#allocation7 + $0x70] sm:$0xf]
        %v3381 = vld [vmem:[#allocation7 + $0x74] sm:$0xf]
        %v3382 = vld [vmem:[#allocation7 + $0x78] sm:$0xf]
        %v3383 = vld [vmem:[#allocation7 + $0x7c] sm:$0xf]
        %v3384 = vld [vmem:[#allocation7 + $0x80] sm:$0xf]
        %v3385 = vld [vmem:[#allocation7 + $0x84] sm:$0xf]
        %v3386 = vld [vmem:[#allocation7 + $0x88] sm:$0xf]
        %v3387 = vld [vmem:[#allocation7 + $0x8c] sm:$0xf]
        %v3388 = vld [vmem:[#allocation7 + $0x90] sm:$0xf]
        %v3389 = vld [vmem:[#allocation7 + $0x94] sm:$0xf]
        %v3390 = vld [vmem:[#allocation7 + $0x98] sm:$0xf]
        %v3391 = vld [vmem:[#allocation7 + $0x9c] sm:$0xf]
        %v3392 = vld [vmem:[#allocation7 + $0xa0] sm:$0xf]
        %v3393 = vld [vmem:[#allocation7 + $0xa4] sm:$0xf]
        %v3394 = vld [vmem:[#allocation7 + $0xa8] sm:$0xf]
        %v3395 = vld [vmem:[#allocation7 + $0xac] sm:$0xf]
        %v3396 = vld [vmem:[#allocation7 + $0xb0] sm:$0xf]
        %v3397 = vld [vmem:[#allocation7 + $0xb4] sm:$0xf]
        %v3398 = vld [vmem:[#allocation7 + $0xb8] sm:$0xf]
        %v3399 = vld [vmem:[#allocation7 + $0xbc] sm:$0xf]
        %v3400 = vld [vmem:[#allocation7 + $0xc0] sm:$0xf]
        %v3401 = vld [vmem:[#allocation7 + $0xc4] sm:$0xf]
        %v3402 = vld [vmem:[#allocation7 + $0xc8] sm:$0xf]
        %v3403 = vld [vmem:[#allocation7 + $0xcc] sm:$0xf]
        %v3404 = vld [vmem:[#allocation7 + $0xd0] sm:$0xf]
        %v3405 = vld [vmem:[#allocation7 + $0xd4] sm:$0xf]
        %v3406 = vld [vmem:[#allocation7 + $0xd8] sm:$0xf]
        %v3407 = vld [vmem:[#allocation7 + $0xdc] sm:$0xf]
        %v3408 = vld [vmem:[#allocation7 + $0xe0] sm:$0xf]
        %v3409 = vld [vmem:[#allocation7 + $0xe4] sm:$0xf]
        %v3410 = vld [vmem:[#allocation7 + $0xe8] sm:$0xf]
        %v3411 = vld [vmem:[#allocation7 + $0xec] sm:$0xf]
        %v3412 = vld [vmem:[#allocation7 + $0xf0] sm:$0xf]
        %v3413 = vld [vmem:[#allocation7 + $0xf4] sm:$0xf]
        %v3414 = vld [vmem:[#allocation7 + $0xf8] sm:$0xf]
        %v3415 = vld [vmem:[#allocation7 + $0xfc] sm:$0xf]
        %v3416 = vld [vmem:[#allocation7 + $0x100] sm:$0xf]
        %v3417 = vld [vmem:[#allocation7 + $0x104] sm:$0xf]
        %v3418 = vld [vmem:[#allocation7 + $0x108] sm:$0xf]
        %v3419 = vld [vmem:[#allocation7 + $0x10c] sm:$0xf]
        %v3420 = vld [vmem:[#allocation7 + $0x110] sm:$0xf]
        %v3421 = vld [vmem:[#allocation7 + $0x114] sm:$0xf]
        %v3422 = vld [vmem:[#allocation7 + $0x118] sm:$0xf]
        %v3423 = vld [vmem:[#allocation7 + $0x11c] sm:$0xf]
        %v3424 = vld [vmem:[#allocation7 + $0x120] sm:$0xf]
        %v3425 = vld [vmem:[#allocation7 + $0x124] sm:$0xf]
        %v3426 = vld [vmem:[#allocation7 + $0x128] sm:$0xf]
        %v3427 = vld [vmem:[#allocation7 + $0x12c] sm:$0xf]
        %v3428 = vld [vmem:[#allocation7 + $0x130] sm:$0xf]
        %v3429 = vld [vmem:[#allocation7 + $0x134] sm:$0xf]
        %v3430 = vld [vmem:[#allocation7 + $0x138] sm:$0xf]
        %v3431 = vld [vmem:[#allocation7 + $0x13c] sm:$0xf]
        %v3432 = vld [vmem:[#allocation7 + $0x140] sm:$0xf]
        %v3433 = vld [vmem:[#allocation7 + $0x144] sm:$0xf]
        %v3434 = vld [vmem:[#allocation7 + $0x148] sm:$0xf]
        %v3435 = vld [vmem:[#allocation7 + $0x14c] sm:$0xf]
        %v3436 = vld [vmem:[#allocation7 + $0x150] sm:$0xf]
        %v3437 = vld [vmem:[#allocation7 + $0x154] sm:$0xf]
        %v3438 = vld [vmem:[#allocation7 + $0x158] sm:$0xf]
        %v3439 = vld [vmem:[#allocation7 + $0x15c] sm:$0xf]
        %v3440 = vld [vmem:[#allocation7 + $0x160] sm:$0xf]
        %v3441 = vld [vmem:[#allocation7 + $0x164] sm:$0xf]
        %v3442 = vld [vmem:[#allocation7 + $0x168] sm:$0xf]
        %v3443 = vld [vmem:[#allocation7 + $0x16c] sm:$0xf]
        %v3444 = vld [vmem:[#allocation7 + $0x170] sm:$0xf]
        %v3445 = vld [vmem:[#allocation7 + $0x174] sm:$0xf]
        %v3446 = vld [vmem:[#allocation7 + $0x178] sm:$0xf]
        %v3447 = vld [vmem:[#allocation7 + $0x17c] sm:$0xf]
        %v3544 = vunpack.c.l.b16 %v3352
        %v3545 = vunpack.c.l.b16 %v3353
        %v3546 = vunpack.c.l.b16 %v3354
        %v3547 = vunpack.c.l.b16 %v3355
        %v3548 = vunpack.c.l.b16 %v3356
        %v3549 = vunpack.c.l.b16 %v3357
        %v3550 = vunpack.c.l.b16 %v3358
        %v3551 = vunpack.c.l.b16 %v3359
        %v3552 = vunpack.c.l.b16 %v3360
        %v3553 = vunpack.c.l.b16 %v3361
        %v3554 = vunpack.c.l.b16 %v3362
        %v3555 = vunpack.c.l.b16 %v3363
        %v3556 = vunpack.c.l.b16 %v3364
        %v3557 = vunpack.c.l.b16 %v3365
        %v3558 = vunpack.c.l.b16 %v3366
        %v3559 = vunpack.c.l.b16 %v3367
        %v3560 = vunpack.c.l.b16 %v3368
        %v3561 = vunpack.c.l.b16 %v3369
        %v3562 = vunpack.c.l.b16 %v3370
        %v3563 = vunpack.c.l.b16 %v3371
        %v3564 = vunpack.c.l.b16 %v3372
        %v3565 = vunpack.c.l.b16 %v3373
        %v3566 = vunpack.c.l.b16 %v3374
        %v3567 = vunpack.c.l.b16 %v3375
        %v3568 = vunpack.c.l.b16 %v3376
        %v3569 = vunpack.c.l.b16 %v3377
        %v3570 = vunpack.c.l.b16 %v3378
        %v3571 = vunpack.c.l.b16 %v3379
        %v3572 = vunpack.c.l.b16 %v3380
        %v3573 = vunpack.c.l.b16 %v3381
        %v3574 = vunpack.c.l.b16 %v3382
        %v3575 = vunpack.c.l.b16 %v3383
        %v3576 = vunpack.c.l.b16 %v3384
        %v3577 = vunpack.c.l.b16 %v3385
        %v3578 = vunpack.c.l.b16 %v3386
        %v3579 = vunpack.c.l.b16 %v3387
        %v3580 = vunpack.c.l.b16 %v3388
        %v3581 = vunpack.c.l.b16 %v3389
        %v3582 = vunpack.c.l.b16 %v3390
        %v3583 = vunpack.c.l.b16 %v3391
        %v3584 = vunpack.c.l.b16 %v3392
        %v3585 = vunpack.c.l.b16 %v3393
        %v3586 = vunpack.c.l.b16 %v3394
        %v3587 = vunpack.c.l.b16 %v3395
        %v3588 = vunpack.c.l.b16 %v3396
        %v3589 = vunpack.c.l.b16 %v3397
        %v3590 = vunpack.c.l.b16 %v3398
        %v3591 = vunpack.c.l.b16 %v3399
        %v3592 = vunpack.c.l.b16 %v3400
        %v3593 = vunpack.c.l.b16 %v3401
        %v3594 = vunpack.c.l.b16 %v3402
        %v3595 = vunpack.c.l.b16 %v3403
        %v3596 = vunpack.c.l.b16 %v3404
        %v3597 = vunpack.c.l.b16 %v3405
        %v3598 = vunpack.c.l.b16 %v3406
        %v3599 = vunpack.c.l.b16 %v3407
        %v3600 = vunpack.c.l.b16 %v3408
        %v3601 = vunpack.c.l.b16 %v3409
        %v3602 = vunpack.c.l.b16 %v3410
        %v3603 = vunpack.c.l.b16 %v3411
        %v3604 = vunpack.c.l.b16 %v3412
        %v3605 = vunpack.c.l.b16 %v3413
        %v3606 = vunpack.c.l.b16 %v3414
        %v3607 = vunpack.c.l.b16 %v3415
        %v3608 = vunpack.c.l.b16 %v3416
        %v3609 = vunpack.c.l.b16 %v3417
        %v3610 = vunpack.c.l.b16 %v3418
        %v3611 = vunpack.c.l.b16 %v3419
        %v3612 = vunpack.c.l.b16 %v3420
        %v3613 = vunpack.c.l.b16 %v3421
        %v3614 = vunpack.c.l.b16 %v3422
        %v3615 = vunpack.c.l.b16 %v3423
        %v3616 = vunpack.c.l.b16 %v3424
        %v3617 = vunpack.c.l.b16 %v3425
        %v3618 = vunpack.c.l.b16 %v3426
        %v3619 = vunpack.c.l.b16 %v3427
        %v3620 = vunpack.c.l.b16 %v3428
        %v3621 = vunpack.c.l.b16 %v3429
        %v3622 = vunpack.c.l.b16 %v3430
        %v3623 = vunpack.c.l.b16 %v3431
        %v3624 = vunpack.c.l.b16 %v3432
        %v3625 = vunpack.c.l.b16 %v3433
        %v3626 = vunpack.c.l.b16 %v3434
        %v3627 = vunpack.c.l.b16 %v3435
        %v3628 = vunpack.c.l.b16 %v3436
        %v3629 = vunpack.c.l.b16 %v3437
        %v3630 = vunpack.c.l.b16 %v3438
        %v3631 = vunpack.c.l.b16 %v3439
        %v3632 = vunpack.c.l.b16 %v3440
        %v3633 = vunpack.c.l.b16 %v3441
        %v3634 = vunpack.c.l.b16 %v3442
        %v3635 = vunpack.c.l.b16 %v3443
        %v3636 = vunpack.c.l.b16 %v3444
        %v3637 = vunpack.c.l.b16 %v3445
        %v3638 = vunpack.c.l.b16 %v3446
        %v3639 = vunpack.c.l.b16 %v3447
        %v3640 = vpack.c.b16 %v3545, %v3544
        %v3641 = vpack.c.b16 %v3547, %v3546
        %v3642 = vpack.c.b16 %v3549, %v3548
        %v3643 = vpack.c.b16 %v3551, %v3550
        %v3644 = vpack.c.b16 %v3553, %v3552
        %v3645 = vpack.c.b16 %v3555, %v3554
        %v3646 = vpack.c.b16 %v3557, %v3556
        %v3647 = vpack.c.b16 %v3559, %v3558
        %v3648 = vpack.c.b16 %v3561, %v3560
        %v3649 = vpack.c.b16 %v3563, %v3562
        %v3650 = vpack.c.b16 %v3565, %v3564
        %v3651 = vpack.c.b16 %v3567, %v3566
        %v3652 = vpack.c.b16 %v3569, %v3568
        %v3653 = vpack.c.b16 %v3571, %v3570
        %v3654 = vpack.c.b16 %v3573, %v3572
        %v3655 = vpack.c.b16 %v3575, %v3574
        %v3656 = vpack.c.b16 %v3577, %v3576
        %v3657 = vpack.c.b16 %v3579, %v3578
        %v3658 = vpack.c.b16 %v3581, %v3580
        %v3659 = vpack.c.b16 %v3583, %v3582
        %v3660 = vpack.c.b16 %v3585, %v3584
        %v3661 = vpack.c.b16 %v3587, %v3586
        %v3662 = vpack.c.b16 %v3589, %v3588
        %v3663 = vpack.c.b16 %v3591, %v3590
        %v3664 = vpack.c.b16 %v3593, %v3592
        %v3665 = vpack.c.b16 %v3595, %v3594
        %v3666 = vpack.c.b16 %v3597, %v3596
        %v3667 = vpack.c.b16 %v3599, %v3598
        %v3668 = vpack.c.b16 %v3601, %v3600
        %v3669 = vpack.c.b16 %v3603, %v3602
        %v3670 = vpack.c.b16 %v3605, %v3604
        %v3671 = vpack.c.b16 %v3607, %v3606
        %v3672 = vpack.c.b16 %v3609, %v3608
        %v3673 = vpack.c.b16 %v3611, %v3610
        %v3674 = vpack.c.b16 %v3613, %v3612
        %v3675 = vpack.c.b16 %v3615, %v3614
        %v3676 = vpack.c.b16 %v3617, %v3616
        %v3677 = vpack.c.b16 %v3619, %v3618
        %v3678 = vpack.c.b16 %v3621, %v3620
        %v3679 = vpack.c.b16 %v3623, %v3622
        %v3680 = vpack.c.b16 %v3625, %v3624
        %v3681 = vpack.c.b16 %v3627, %v3626
        %v3682 = vpack.c.b16 %v3629, %v3628
        %v3683 = vpack.c.b16 %v3631, %v3630
        %v3684 = vpack.c.b16 %v3633, %v3632
        %v3685 = vpack.c.b16 %v3635, %v3634
        %v3686 = vpack.c.b16 %v3637, %v3636
        %v3687 = vpack.c.b16 %v3639, %v3638
        %3736 = vmatprep.subr.bf16.mxu0 0
        %3737 = vmatpush1.bf16.msra.mxu0 %v3640
        %3738 = vmatprep.subr.bf16.mxu0 0
        %3739 = vmatpush1.bf16.msra.mxu0 %v3641
        %3740 = vmatprep.subr.bf16.mxu0 0
        %3741 = vmatpush1.bf16.msra.mxu0 %v3642
        %3742 = vmatprep.subr.bf16.mxu0 0
        %3743 = vmatpush1.bf16.msra.mxu0 %v3643
        %3744 = vmatprep.subr.bf16.mxu0 0
        %3745 = vmatpush1.bf16.msra.mxu0 %v3644
        %3746 = vmatprep.subr.bf16.mxu0 0
        %3747 = vmatpush1.bf16.msra.mxu0 %v3645
        %3748 = vmatprep.subr.bf16.mxu0 0
        %3749 = vmatpush1.bf16.msra.mxu0 %v3646
        %3750 = vmatprep.subr.bf16.mxu0 0
        %3751 = vmatpush1.bf16.msra.mxu0 %v3647
        %3752 = vmatprep.subr.bf16.mxu0 0
        %3753 = vmatpush1.bf16.msra.mxu0 %v3648
        %3754 = vmatprep.subr.bf16.mxu0 0
        %3755 = vmatpush1.bf16.msra.mxu0 %v3649
        %3756 = vmatprep.subr.bf16.mxu0 0
        %3757 = vmatpush1.bf16.msra.mxu0 %v3650
        %3758 = vmatprep.subr.bf16.mxu0 0
        %3759 = vmatpush1.bf16.msra.mxu0 %v3651
        %3760 = vmatprep.subr.bf16.mxu0 0
        %3761 = vmatpush1.bf16.msra.mxu0 %v3652
        %3762 = vmatprep.subr.bf16.mxu0 0
        %3763 = vmatpush1.bf16.msra.mxu0 %v3653
        %3764 = vmatprep.subr.bf16.mxu0 0
        %3765 = vmatpush1.bf16.msra.mxu0 %v3654
        %3766 = vmatprep.subr.bf16.mxu0 0
        %3767 = vmatpush1.bf16.msra.mxu0 %v3655
        %3768 = vmatprep.mubr.bf16.mxu0 %v3347
        %3769 = vmatmul.mubr.bf16.gmra.mrb[0].mxu0 %v3346
        %v3770 = vpop.f32.mrb[0].mxu0
        %v3771 = vadd.f32 %v893, %v3770
        %v3772 = vpop.f32.mrb[0].mxu0
        %v3773 = vpop.f32.mrb[0].mxu0
        %v3774 = vpop.f32.mrb[0].mxu0
        %3775 = vdwg.mxu0
        %3776 = vmatprep.subr.bf16.mxu0 0
        %3777 = vmatpush1.bf16.msra.mxu0 %v3656
        %3778 = vmatprep.subr.bf16.mxu0 0
        %3779 = vmatpush1.bf16.msra.mxu0 %v3657
        %3780 = vmatprep.subr.bf16.mxu0 0
        %3781 = vmatpush1.bf16.msra.mxu0 %v3658
        %3782 = vmatprep.subr.bf16.mxu0 0
        %3783 = vmatpush1.bf16.msra.mxu0 %v3659
        %3784 = vmatprep.subr.bf16.mxu0 0
        %3785 = vmatpush1.bf16.msra.mxu0 %v3660
        %3786 = vmatprep.subr.bf16.mxu0 0
        %3787 = vmatpush1.bf16.msra.mxu0 %v3661
        %3788 = vmatprep.subr.bf16.mxu0 0
        %3789 = vmatpush1.bf16.msra.mxu0 %v3662
        %3790 = vmatprep.subr.bf16.mxu0 0
        %3791 = vmatpush1.bf16.msra.mxu0 %v3663
        %3792 = vmatprep.subr.bf16.mxu0 0
        %3793 = vmatpush1.bf16.msra.mxu0 %v3664
        %3794 = vmatprep.subr.bf16.mxu0 0
        %3795 = vmatpush1.bf16.msra.mxu0 %v3665
        %3796 = vmatprep.subr.bf16.mxu0 0
        %3797 = vmatpush1.bf16.msra.mxu0 %v3666
        %3798 = vmatprep.subr.bf16.mxu0 0
        %3799 = vmatpush1.bf16.msra.mxu0 %v3667
        %3800 = vmatprep.subr.bf16.mxu0 0
        %3801 = vmatpush1.bf16.msra.mxu0 %v3668
        %3802 = vmatprep.subr.bf16.mxu0 0
        %3803 = vmatpush1.bf16.msra.mxu0 %v3669
        %3804 = vmatprep.subr.bf16.mxu0 0
        %3805 = vmatpush1.bf16.msra.mxu0 %v3670
        %3806 = vmatprep.subr.bf16.mxu0 0
        %3807 = vmatpush1.bf16.msra.mxu0 %v3671
        %3808 = vmatprep.mubr.bf16.mxu0 %v3349
        %3809 = vmatmul.mubr.bf16.gmra.mrb[0].mxu0 %v3348
        %v3810 = vpop.f32.mrb[0].mxu0
        %v3811 = vadd.f32 %v3771, %v3810
        %v3812 = vpop.f32.mrb[0].mxu0
        %v3813 = vpop.f32.mrb[0].mxu0
        %v3814 = vpop.f32.mrb[0].mxu0
        %3815 = vdwg.mxu0
        %3816 = vmatprep.subr.bf16.mxu0 0
        %3817 = vmatpush1.bf16.msra.mxu0 %v3672
        %3818 = vmatprep.subr.bf16.mxu0 0
        %3819 = vmatpush1.bf16.msra.mxu0 %v3673
        %3820 = vmatprep.subr.bf16.mxu0 0
        %3821 = vmatpush1.bf16.msra.mxu0 %v3674
        %3822 = vmatprep.subr.bf16.mxu0 0
        %3823 = vmatpush1.bf16.msra.mxu0 %v3675
        %3824 = vmatprep.subr.bf16.mxu0 0
        %3825 = vmatpush1.bf16.msra.mxu0 %v3676
        %3826 = vmatprep.subr.bf16.mxu0 0
        %3827 = vmatpush1.bf16.msra.mxu0 %v3677
        %3828 = vmatprep.subr.bf16.mxu0 0
        %3829 = vmatpush1.bf16.msra.mxu0 %v3678
        %3830 = vmatprep.subr.bf16.mxu0 0
        %3831 = vmatpush1.bf16.msra.mxu0 %v3679
        %3832 = vmatprep.subr.bf16.mxu0 0
        %3833 = vmatpush1.bf16.msra.mxu0 %v3680
        %3834 = vmatprep.subr.bf16.mxu0 0
        %3835 = vmatpush1.bf16.msra.mxu0 %v3681
        %3836 = vmatprep.subr.bf16.mxu0 0
        %3837 = vmatpush1.bf16.msra.mxu0 %v3682
        %3838 = vmatprep.subr.bf16.mxu0 0
        %3839 = vmatpush1.bf16.msra.mxu0 %v3683
        %3840 = vmatprep.subr.bf16.mxu0 0
        %3841 = vmatpush1.bf16.msra.mxu0 %v3684
        %3842 = vmatprep.subr.bf16.mxu0 0
        %3843 = vmatpush1.bf16.msra.mxu0 %v3685
        %3844 = vmatprep.subr.bf16.mxu0 0
        %3845 = vmatpush1.bf16.msra.mxu0 %v3686
        %3846 = vmatprep.subr.bf16.mxu0 0
        %3847 = vmatpush1.bf16.msra.mxu0 %v3687
        %3848 = vmatprep.mubr.bf16.mxu0 %v3351
        %3849 = vmatmul.mubr.bf16.gmra.mrb[0].mxu0 %v3350
        %v3850 = vpop.f32.mrb[0].mxu0
        %v3851 = vadd.f32 %v3811, %v3850
        %v3852 = vpop.f32.mrb[0].mxu0
        %v3853 = vpop.f32.mrb[0].mxu0
        %v3854 = vpop.f32.mrb[0].mxu0
        %3855 = vdwg.mxu0
        %v3856 = vxor.u32 %v3851, 2147483648
        %v3857 = vmul.f32 %v3856, 1.442695
        %v3858 = vpow.pop %v3857
        %v3859 = vadd.f32 %v3858, 1.0
        %v3860 = vrcp.pop %v3859
        %v3861 = vmul.f32 1.0, %v3860
        %v3862 = vmul.f32 %v3851, %v3861
        %v3863 = vmul.f32 %v3862, %v894
        %3864 = vadd.xlane.f32.xlu0 %v3863
        %v3865 = vpop.xlane.xlu0 %3864
        %v3866 = vadd.f32 %v3865, %v895
        %3867 = vst [vmem:[%s298] sm:$0xff] %v3866
        %s3868 = sand.u32 %s147, 1
        %s3869 = scalar_lea.sflag [#allocation4], %s3868
        %s3870 = sand.u32 %s147, 1
        %s3871 = smul.addr %s3870, 8
        %s3872 = scalar_lea.vmem [#allocation10], %s3871
        // Predicated region
        $region57: #{tpu_custom_call.1} parent=39 // pred_check
          %p3873 = pneg %p157
        $region58: #{tpu_custom_call.1} parent=39 // pred_check_branch
          %3875 = sbr.rel (%p3873) target = $region60
        $region59: #{tpu_custom_call.1} parent=39 // pred_region
          %s3877 = ssub.s32 128, 128
          %3878 = vsyncadd %s3869, %s3877
          %s3879 = smul.addr %s24, 128
          %s3880 = scalar_lea.hbm %s5, %s3879
          %s3882 = sshll.u32 %s3872, 4
          %s3883 = int_to_ptr.vmem [resolvable:$true] %s3882
          %3885 = dma.vmem_to_hbm [thread:$0]  %s3883, 128, %s3880, %s3869
        $region60: #{tpu_custom_call.1} parent=39 // pred_fallthru
          _
      $region40: #{tpu_custom_call.1} parent=5 // pred_fallthru
        _
      %p3886 = scmp.le.s32.totalorder 2, %s19
      // Predicated region
      $region61: #{tpu_custom_call.1} parent=5 // pred_check
        %p3887 = pneg %p3886
      $region62: #{tpu_custom_call.1} parent=5 // pred_check_branch
        %3889 = sbr.rel (%p3887) target = $region64
      $region63: #{tpu_custom_call.1} parent=5 // pred_region
        %s3890 = ssub.s32 %s19, 2
        // Predicated region
        $region65: #{tpu_custom_call.1} parent=63 // pred_check
          %p3891 = pneg %p163
        $region66: #{tpu_custom_call.1} parent=63 // pred_check_branch
          %3893 = sbr.rel (%p3891) target = $region68
        $region67: #{tpu_custom_call.1} parent=63 // pred_region
          %s3894 = sand.u32 %s148, 1
          %s3895 = scalar_lea.sflag [#allocation4], %s3894
          %s3896 = sand.u32 %s148, 1
          %s3897 = smul.addr %s3896, 8
          %s3898 = scalar_lea.vmem [#allocation10], %s3897
          %3899 = dma.done %s3895, 128
        $region68: #{tpu_custom_call.1} parent=63 // pred_fallthru
          _
      $region64: #{tpu_custom_call.1} parent=5 // pred_fallthru
        _
    $region6: #{tpu_custom_call.1} parent=1 // loop_footer
      %s23 = sadd.s32 1, %s19
    $region7: #{tpu_custom_call.1} parent=1 // loop_footer_branch
      %18 = sbr.rel target = $region3
    $region8: #{tpu_custom_call.1} parent=1 // loop_exit
      _
    %3900 = vsyncpa [#allocation3], 1
    %s3901 = scalar_lea.sflag [#allocation3], 1
    %3902 = vsyncpa %s3901, 1
    %3903 = vsyncpa [#allocation6], 1
    %3904 = vsyncpa [#allocation9], 1
    %3905 = vsyncpa [#allocation4], 1
    %s3906 = scalar_lea.sflag [#allocation4], 1
    %3907 = vsyncpa %s3906, 1

</llo_original>
